<compile_context>
chip_gen: v7x
topology: tpu7x:2x2x1
jax: 0.10.0
libtpu: 0.0.40
codegen_flags: <defaults>
</compile_context>

<pallas_src>
import numpy as np
import jax
import jax.numpy as jnp
from jax.experimental import pallas as pl
from jax.experimental.pallas import tpu as pltpu

NEG_SLOPE = 0.01  # nn.LeakyReLU default


def _lrelu(y):
    return jnp.where(y >= 0, y, NEG_SLOPE * y)


# ----------------------------------------------------------------------------
# align_corners=True bilinear interpolation tables (all static / trace-time)
# ----------------------------------------------------------------------------
def _interp_matrix_1d(n_in, n_out):
    """align_corners=True bilinear interpolation matrix [n_out, n_in] (numpy)."""
    A = np.zeros((n_out, n_in), dtype=np.float32)
    if n_in == 1 or n_out == 1:          # degenerate cases (guarded per review)
        A[:, 0] = 1.0
        return A
    scale = (n_in - 1) / (n_out - 1)
    for o in range(n_out):
        src = o * scale
        i0 = int(np.floor(src))
        i1 = min(i0 + 1, n_in - 1)
        frac = src - i0
        A[o, i0] += 1.0 - frac
        A[o, i1] += frac
    return A


def _interp_taps_1d(n_in, n_out):
    """Static 2-tap (i0, i1, frac) list for align_corners=True interpolation."""
    if n_in == 1 or n_out == 1:
        return [(0, 0, 0.0)] * n_out
    scale = (n_in - 1) / (n_out - 1)
    taps = []
    for o in range(n_out):
        src = o * scale
        i0 = int(np.floor(src))
        i1 = min(i0 + 1, n_in - 1)
        f = float(src - i0)
        if i1 == i0:
            f = 0.0
        taps.append((i0, i1, f))
    return taps


# ----------------------------------------------------------------------------
# Single fused kernel: one grid step == one image; everything stays in VMEM.
# ----------------------------------------------------------------------------
def make_fused_kernel(H3, W3, H4, W4, h_taps):
    f32 = jnp.float32
    bf16 = jnp.bfloat16

    def kernel(p3_ref, p4_ref, wb3_ref, bb3_ref, wb4_ref, bb4_ref,
               w2_ref, winc_ref, binc_ref, w1_ref, bias_ref, aw_ref, o_ref):
        # ---- c4 branch @ stride 32: stand-in projection + LReLU, then the (BN-folded)
        #      c4-half of the 1x1 head conv applied BEFORE upsampling (they commute).
        c4 = jnp.dot(p4_ref[0], wb4_ref[...], preferred_element_type=f32)
        c4 = _lrelu(c4 + bb4_ref[...]).astype(bf16)
        c4 = jnp.dot(c4, w2_ref[...], preferred_element_type=f32)        # [S4, 256] f32

        # ---- width-direction align_corners bilinear (2x): one tiny VMEM-resident matmul
        #      per stride-32 row; no HBM traffic, no dense [S3,S4] operator.
        aw = aw_ref[...]                                                  # [W3, W4] f32
        ww = [jnp.dot(aw, c4[h4 * W4:(h4 + 1) * W4, :],
                      preferred_element_type=f32) for h4 in range(H4)]    # H4 x [W3,256]

        # ---- c3 branch @ stride 16: stand-in projection + LReLU, Inception stand-in,
        #      then the (BN-folded) c3-half of the 1x1 head conv.
        c3 = jnp.dot(p3_ref[0], wb3_ref[...], preferred_element_type=f32)
        c3 = _lrelu(c3 + bb3_ref[...]).astype(bf16)                       # [S3, 256]
        inc = jnp.dot(c3, winc_ref[...], preferred_element_type=f32)
        inc = _lrelu(inc + binc_ref[...]).astype(bf16)                    # [S3, 1024]
        y = jnp.dot(inc, w1_ref[...], preferred_element_type=f32)         # [S3, 256]
        y = y + bias_ref[...]                                             # folded conv+BN bias

        # ---- height-direction bilinear blend (static 2-tap on the VPU) fused with the
        #      final add + LeakyReLU + store, one [W3, 256] row block per output height row.
        for h3, (i0, i1, frac) in enumerate(h_taps):
            if frac == 0.0 or i0 == i1:
                up_blk = ww[i0]
            else:
                up_blk = (1.0 - frac) * ww[i0] + frac * ww[i1]
            r0 = h3 * W3
            o_ref[0, r0:r0 + W3, :] = _lrelu(
                y[r0:r0 + W3, :] + up_blk).astype(o_ref.dtype)

    return kernel


# ----------------------------------------------------------------------------
# Layout plumbing / parameters
# ----------------------------------------------------------------------------
def space_to_depth(x_nhwc, stride):
    """[N,H,W,C] -> ([N, (H/s)*(W/s), s*s*C], H/s, W/s)."""
    N, H, W, C = x_nhwc.shape
    Ho, Wo = H // stride, W // stride
    x = x_nhwc.reshape(N, Ho, stride, Wo, stride, C)
    x = jnp.transpose(x, (0, 1, 3, 2, 4, 5))
    return x.reshape(N, Ho * Wo, stride * stride * C), Ho, Wo


def init_params(key, in_ch=3):
    ks = jax.random.split(key, 10)
    p = {}
    # synthetic backbone stand-ins (stride-16 / stride-32 patch projections -> 256 ch)
    p["wb3"] = 0.05 * jax.random.normal(ks[0], (16 * 16 * in_ch, 256), jnp.float32)
    p["bb3"] = 0.05 * jax.random.normal(ks[1], (1, 256), jnp.float32)
    p["wb4"] = 0.03 * jax.random.normal(ks[2], (32 * 32 * in_ch, 256), jnp.float32)
    p["bb4"] = 0.05 * jax.random.normal(ks[3], (1, 256), jnp.float32)
    # Inception stand-in: 256 -> 1024 channels
    p["winc"] = 0.05 * jax.random.normal(ks[4], (256, 1024), jnp.float32)
    p["binc"] = 0.05 * jax.random.normal(ks[5], (1, 1024), jnp.float32)
    # conv: Conv2d(1280, 256, 1) weights (stored as [Cin, Cout]) + bias
    wc = 0.05 * jax.random.normal(ks[6], (1280, 256), jnp.float32)
    bc = 0.05 * jax.random.normal(ks[7], (256,), jnp.float32)
    # BatchNorm2d(256), eval-mode running stats
    gamma = 1.0 + 0.1 * jax.random.normal(ks[8], (256,), jnp.float32)
    beta = 0.1 * jax.random.normal(ks[9], (256,), jnp.float32)
    mean = jnp.zeros((256,), jnp.float32)
    var = jnp.ones((256,), jnp.float32)
    eps = 1e-5
    s = gamma / jnp.sqrt(var + eps)
    # raw split (used by the pure-JAX reference, mirrors conv -> BN ordering)
    p["w1"] = wc[:1024, :]                       # c3/inception half of the concat
    p["w2"] = wc[1024:, :]                       # upsampled-c4 half of the concat
    p["scale"] = s.reshape(1, 256)
    p["bias"] = ((bc - mean) * s + beta).reshape(1, 256)
    # BN scale folded offline into the weight halves (exact): BN(a+b+bc) = a@w*s + b@w*s + bias
    p["w1f"] = p["w1"] * p["scale"]
    p["w2f"] = p["w2"] * p["scale"]
    return p


def feature_extractor_forward(params, x_nchw):
    """Mirrors FeatureExtractor.forward.  Input/output are NCHW like PyTorch."""
    bf16 = jnp.bfloat16
    x = jnp.transpose(x_nchw, (0, 2, 3, 1)).astype(jnp.float32)      # NCHW -> NHWC
    N = x.shape[0]

    # backbone stand-in inputs: features['0'] @ stride 16, features['1'] @ stride 32
    p3, H3, W3 = space_to_depth(x, 16)
    p4, H4, W4 = space_to_depth(x, 32)
    S3, S4 = H3 * W3, H4 * W4
    C3in, C4in = p3.shape[-1], p4.shape[-1]
    Cout = 256

    aw = jnp.asarray(_interp_matrix_1d(W4, W3))      # [W3, W4] width operator (f32)
    h_taps = _interp_taps_1d(H4, H3)                 # static height 2-tap table

    kernel = make_fused_kernel(H3, W3, H4, W4, h_taps)

    out = pl.pallas_call(
        kernel,
        out_shape=jax.ShapeDtypeStruct((N, S3, Cout), jnp.float32),
        grid_spec=pltpu.PrefetchScalarGridSpec(
            num_scalar_prefetch=0,
            grid=(N,),                                # >=2 steps in the test -> megacore-able
            in_specs=[
                pl.BlockSpec((1, S3, C3in), lambda n: (n, 0, 0)),   # p3 (per image)
                pl.BlockSpec((1, S4, C4in), lambda n: (n, 0, 0)),   # p4 (per image)
                pl.BlockSpec((C3in, Cout), lambda n: (0, 0)),       # wb3 (resident)
                pl.BlockSpec((1, Cout), lambda n: (0, 0)),          # bb3
                pl.BlockSpec((C4in, Cout), lambda n: (0, 0)),       # wb4
                pl.BlockSpec((1, Cout), lambda n: (0, 0)),          # bb4
                pl.BlockSpec((Cout, Cout), lambda n: (0, 0)),       # w2 (BN-folded)
                pl.BlockSpec((Cout, 1024), lambda n: (0, 0)),       # winc
                pl.BlockSpec((1, 1024), lambda n: (0, 0)),          # binc
                pl.BlockSpec((1024, Cout), lambda n: (0, 0)),       # w1 (BN-folded)
                pl.BlockSpec((1, Cout), lambda n: (0, 0)),          # folded conv+BN bias
                pl.BlockSpec((W3, W4), lambda n: (0, 0)),           # Aw (width interp)
            ],
            out_specs=pl.BlockSpec((1, S3, Cout), lambda n: (n, 0, 0)),
        ),
        compiler_params=pltpu.CompilerParams(
            dimension_semantics=("parallel",),
            vmem_limit_bytes=48 * 1024 * 1024,
        ),
    )(p3.astype(bf16), p4.astype(bf16),
      params["wb3"].astype(bf16), params["bb3"],
      params["wb4"].astype(bf16), params["bb4"],
      params["w2f"].astype(bf16),
      params["winc"].astype(bf16), params["binc"],
      params["w1f"].astype(bf16),
      params["bias"],
      aw)

    out = out.reshape(N, H3, W3, Cout)
    return jnp.transpose(out, (0, 3, 1, 2))                          # NHWC -> NCHW


# ----------------------------------------------------------------------------
# Pure-JAX reference (module-faithful ordering: conv halves, then BN scale/bias)
# ----------------------------------------------------------------------------
def reference_forward(params, x_nchw):
    bf, f32 = jnp.bfloat16, jnp.float32
    x = jnp.transpose(x_nchw, (0, 2, 3, 1)).astype(f32)
    N = x.shape[0]
    p3, H3, W3 = space_to_depth(x, 16)
    p4, H4, W4 = space_to_depth(x, 32)

    c3 = _lrelu(jnp.einsum("nsc,cd->nsd", p3.astype(bf), params["wb3"].astype(bf),
                           preferred_element_type=f32) + params["bb3"]).astype(bf)
    c4 = _lrelu(jnp.einsum("nsc,cd->nsd", p4.astype(bf), params["wb4"].astype(bf),
                           preferred_element_type=f32) + params["bb4"]).astype(bf)
    c4w2 = jnp.einsum("nsc,cd->nsd", c4, params["w2"].astype(bf),
                      preferred_element_type=f32)                     # [N,S4,256]

    Ah = jnp.asarray(_interp_matrix_1d(H4, H3))
    Aw = jnp.asarray(_interp_matrix_1d(W4, W3))
    up = jnp.einsum("ih,jw,nhwc->nijc", Ah, Aw,
                    c4w2.reshape(N, H4, W4, 256))                     # [N,H3,W3,256]

    inc = _lrelu(jnp.einsum("nsc,cd->nsd", c3, params["winc"].astype(bf),
                            preferred_element_type=f32) + params["binc"]).astype(bf)
    y = jnp.einsum("nsc,cd->nsd", inc, params["w1"].astype(bf),
                   preferred_element_type=f32)
    y = y + up.reshape(N, H3 * W3, 256)
    y = _lrelu(y * params["scale"] + params["bias"])
    return jnp.transpose(y.reshape(N, H3, W3, 256), (0, 3, 1, 2))


if __name__ == "__main__":
    key = jax.random.PRNGKey(0)
    k_x, k_p = jax.random.split(key)

    # Small input consistent with the module: NCHW, 3 channels, 64x64 spatial
    # (stride-16 -> 4x4 c3, stride-32 -> 2x2 c4 upsampled back to 4x4).
    x = jax.random.normal(k_x, (2, 3, 64, 64), dtype=jnp.float32)
    params = init_params(k_p)

    fwd = jax.jit(feature_extractor_forward)
    out = jax.block_until_ready(fwd(params, x))

    assert out.shape == (2, 256, 4, 4), out.shape
    assert bool(jnp.all(jnp.isfinite(out)))

    ref = jax.block_until_ready(reference_forward(params, x))
    assert np.allclose(np.asarray(out), np.asarray(ref), rtol=1e-2, atol=1e-2)

    print("KERNEL_OK")
</pallas_src>

<mosaic_0001>
module attributes {stable_mosaic.version = 11 : i64} {
  func.func @kernel(%arg0: i32, %arg1: memref<1x16x768xbf16, #tpu.memory_space<vmem>>, %arg2: memref<1x4x3072xbf16, #tpu.memory_space<vmem>>, %arg3: memref<768x256xbf16, #tpu.memory_space<vmem>>, %arg4: memref<1x256xf32, #tpu.memory_space<vmem>>, %arg5: memref<3072x256xbf16, #tpu.memory_space<vmem>>, %arg6: memref<1x256xf32, #tpu.memory_space<vmem>>, %arg7: memref<256x256xbf16, #tpu.memory_space<vmem>>, %arg8: memref<256x1024xbf16, #tpu.memory_space<vmem>>, %arg9: memref<1x1024xf32, #tpu.memory_space<vmem>>, %arg10: memref<1024x256xbf16, #tpu.memory_space<vmem>>, %arg11: memref<1x256xf32, #tpu.memory_space<vmem>>, %arg12: memref<4x2xf32, #tpu.memory_space<vmem>>, %arg13: memref<1x16x256xf32, #tpu.memory_space<vmem>>) attributes {dimension_semantics = [#tpu.dimension_semantics<parallel>], iteration_bounds = array<i64: 2>, scalar_prefetch = 0 : i64, scratch_operands = 0 : i64, tpu.core_type = #tpu.core_type<tc>, window_params = [{transform_indices = @transform_0, window_bounds = array<i64: 1, 16, 768>}, {transform_indices = @transform_1, window_bounds = array<i64: 1, 4, 3072>}, {pipeline_mode = #tpu.pipeline_mode<synchronous>, transform_indices = @transform_2, window_bounds = array<i64: 768, 256>}, {pipeline_mode = #tpu.pipeline_mode<synchronous>, transform_indices = @transform_3, window_bounds = array<i64: 1, 256>}, {pipeline_mode = #tpu.pipeline_mode<synchronous>, transform_indices = @transform_4, window_bounds = array<i64: 3072, 256>}, {pipeline_mode = #tpu.pipeline_mode<synchronous>, transform_indices = @transform_5, window_bounds = array<i64: 1, 256>}, {pipeline_mode = #tpu.pipeline_mode<synchronous>, transform_indices = @transform_6, window_bounds = array<i64: 256, 256>}, {pipeline_mode = #tpu.pipeline_mode<synchronous>, transform_indices = @transform_7, window_bounds = array<i64: 256, 1024>}, {pipeline_mode = #tpu.pipeline_mode<synchronous>, transform_indices = @transform_8, window_bounds = array<i64: 1, 1024>}, {pipeline_mode = #tpu.pipeline_mode<synchronous>, transform_indices = @transform_9, window_bounds = array<i64: 1024, 256>}, {pipeline_mode = #tpu.pipeline_mode<synchronous>, transform_indices = @transform_10, window_bounds = array<i64: 1, 256>}, {pipeline_mode = #tpu.pipeline_mode<synchronous>, transform_indices = @transform_11, window_bounds = array<i64: 4, 2>}, {transform_indices = @transform_12, window_bounds = array<i64: 1, 16, 256>}]} {
    %c0 = arith.constant 0 : index
    %c0_0 = arith.constant 0 : index
    %c0_1 = arith.constant 0 : index
    %0 = vector.load %arg2[%c0, %c0_0, %c0_1] : memref<1x4x3072xbf16, #tpu.memory_space<vmem>>, vector<1x4x3072xbf16>
    %1 = vector.shape_cast %0 : vector<1x4x3072xbf16> to vector<4x3072xbf16>
    %c0_2 = arith.constant 0 : index
    %c0_3 = arith.constant 0 : index
    %2 = vector.load %arg5[%c0_2, %c0_3] : memref<3072x256xbf16, #tpu.memory_space<vmem>>, vector<3072x256xbf16>
    %cst = arith.constant dense<0.000000e+00> : vector<4x256xf32>
    %3 = tpu.matmul %1, %2, %cst {dimension_numbers = #tpu.dot_dimension_numbers<[1], [0], [0], [1], [0, 0, 1, 1], [], []>} : vector<4x3072xbf16>, vector<3072x256xbf16>, vector<4x256xf32> -> vector<4x256xf32>
    %c0_4 = arith.constant 0 : index
    %c0_5 = arith.constant 0 : index
    %4 = vector.load %arg6[%c0_4, %c0_5] : memref<1x256xf32, #tpu.memory_space<vmem>>, vector<1x256xf32>
    %5 = vector.broadcast %4 : vector<1x256xf32> to vector<4x256xf32>
    %6 = arith.addf %3, %5 : vector<4x256xf32>
    %cst_6 = arith.constant 0.000000e+00 : f32
    %7 = vector.broadcast %cst_6 : f32 to vector<4x256xf32>
    %8 = arith.cmpf oge, %6, %7 : vector<4x256xf32>
    %cst_7 = arith.constant 0.00999999977 : f32
    %9 = vector.broadcast %cst_7 : f32 to vector<4x256xf32>
    %10 = arith.mulf %9, %6 : vector<4x256xf32>
    %11 = arith.select %8, %6, %10 : vector<4x256xi1>, vector<4x256xf32>
    %12 = arith.truncf %11 : vector<4x256xf32> to vector<4x256xbf16>
    %c0_8 = arith.constant 0 : index
    %c0_9 = arith.constant 0 : index
    %13 = vector.load %arg7[%c0_8, %c0_9] : memref<256x256xbf16, #tpu.memory_space<vmem>>, vector<256x256xbf16>
    %cst_10 = arith.constant dense<0.000000e+00> : vector<4x256xf32>
    %14 = tpu.matmul %12, %13, %cst_10 {dimension_numbers = #tpu.dot_dimension_numbers<[1], [0], [0], [1], [0, 0, 1, 1], [], []>} : vector<4x256xbf16>, vector<256x256xbf16>, vector<4x256xf32> -> vector<4x256xf32>
    %c0_11 = arith.constant 0 : index
    %c0_12 = arith.constant 0 : index
    %15 = vector.load %arg12[%c0_11, %c0_12] : memref<4x2xf32, #tpu.memory_space<vmem>>, vector<4x2xf32>
    %16 = vector.extract_strided_slice %14 {offsets = [0, 0], sizes = [2, 256], strides = [1, 1]} : vector<4x256xf32> to vector<2x256xf32>
    %cst_13 = arith.constant dense<0.000000e+00> : vector<4x256xf32>
    %17 = tpu.matmul %15, %16, %cst_13 {dimension_numbers = #tpu.dot_dimension_numbers<[1], [0], [0], [1], [0, 0, 1, 1], [], []>} : vector<4x2xf32>, vector<2x256xf32>, vector<4x256xf32> -> vector<4x256xf32>
    %18 = vector.extract_strided_slice %14 {offsets = [2, 0], sizes = [2, 256], strides = [1, 1]} : vector<4x256xf32> to vector<2x256xf32>
    %cst_14 = arith.constant dense<0.000000e+00> : vector<4x256xf32>
    %19 = tpu.matmul %15, %18, %cst_14 {dimension_numbers = #tpu.dot_dimension_numbers<[1], [0], [0], [1], [0, 0, 1, 1], [], []>} : vector<4x2xf32>, vector<2x256xf32>, vector<4x256xf32> -> vector<4x256xf32>
    %c0_15 = arith.constant 0 : index
    %c0_16 = arith.constant 0 : index
    %c0_17 = arith.constant 0 : index
    %20 = vector.load %arg1[%c0_15, %c0_16, %c0_17] : memref<1x16x768xbf16, #tpu.memory_space<vmem>>, vector<1x16x768xbf16>
    %21 = vector.shape_cast %20 : vector<1x16x768xbf16> to vector<16x768xbf16>
    %c0_18 = arith.constant 0 : index
    %c0_19 = arith.constant 0 : index
    %22 = vector.load %arg3[%c0_18, %c0_19] : memref<768x256xbf16, #tpu.memory_space<vmem>>, vector<768x256xbf16>
    %cst_20 = arith.constant dense<0.000000e+00> : vector<16x256xf32>
    %23 = tpu.matmul %21, %22, %cst_20 {dimension_numbers = #tpu.dot_dimension_numbers<[1], [0], [0], [1], [0, 0, 1, 1], [], []>} : vector<16x768xbf16>, vector<768x256xbf16>, vector<16x256xf32> -> vector<16x256xf32>
    %c0_21 = arith.constant 0 : index
    %c0_22 = arith.constant 0 : index
    %24 = vector.load %arg4[%c0_21, %c0_22] : memref<1x256xf32, #tpu.memory_space<vmem>>, vector<1x256xf32>
    %25 = vector.broadcast %24 : vector<1x256xf32> to vector<16x256xf32>
    %26 = arith.addf %23, %25 : vector<16x256xf32>
    %cst_23 = arith.constant 0.000000e+00 : f32
    %27 = vector.broadcast %cst_23 : f32 to vector<16x256xf32>
    %28 = arith.cmpf oge, %26, %27 : vector<16x256xf32>
    %cst_24 = arith.constant 0.00999999977 : f32
    %29 = vector.broadcast %cst_24 : f32 to vector<16x256xf32>
    %30 = arith.mulf %29, %26 : vector<16x256xf32>
    %31 = arith.select %28, %26, %30 : vector<16x256xi1>, vector<16x256xf32>
    %32 = arith.truncf %31 : vector<16x256xf32> to vector<16x256xbf16>
    %c0_25 = arith.constant 0 : index
    %c0_26 = arith.constant 0 : index
    %33 = vector.load %arg8[%c0_25, %c0_26] : memref<256x1024xbf16, #tpu.memory_space<vmem>>, vector<256x1024xbf16>
    %cst_27 = arith.constant dense<0.000000e+00> : vector<16x1024xf32>
    %34 = tpu.matmul %32, %33, %cst_27 {dimension_numbers = #tpu.dot_dimension_numbers<[1], [0], [0], [1], [0, 0, 1, 1], [], []>} : vector<16x256xbf16>, vector<256x1024xbf16>, vector<16x1024xf32> -> vector<16x1024xf32>
    %c0_28 = arith.constant 0 : index
    %c0_29 = arith.constant 0 : index
    %35 = vector.load %arg9[%c0_28, %c0_29] : memref<1x1024xf32, #tpu.memory_space<vmem>>, vector<1x1024xf32>
    %36 = vector.broadcast %35 : vector<1x1024xf32> to vector<16x1024xf32>
    %37 = arith.addf %34, %36 : vector<16x1024xf32>
    %cst_30 = arith.constant 0.000000e+00 : f32
    %38 = vector.broadcast %cst_30 : f32 to vector<16x1024xf32>
    %39 = arith.cmpf oge, %37, %38 : vector<16x1024xf32>
    %cst_31 = arith.constant 0.00999999977 : f32
    %40 = vector.broadcast %cst_31 : f32 to vector<16x1024xf32>
    %41 = arith.mulf %40, %37 : vector<16x1024xf32>
    %42 = arith.select %39, %37, %41 : vector<16x1024xi1>, vector<16x1024xf32>
    %43 = arith.truncf %42 : vector<16x1024xf32> to vector<16x1024xbf16>
    %c0_32 = arith.constant 0 : index
    %c0_33 = arith.constant 0 : index
    %44 = vector.load %arg10[%c0_32, %c0_33] : memref<1024x256xbf16, #tpu.memory_space<vmem>>, vector<1024x256xbf16>
    %cst_34 = arith.constant dense<0.000000e+00> : vector<16x256xf32>
    %45 = tpu.matmul %43, %44, %cst_34 {dimension_numbers = #tpu.dot_dimension_numbers<[1], [0], [0], [1], [0, 0, 1, 1], [], []>} : vector<16x1024xbf16>, vector<1024x256xbf16>, vector<16x256xf32> -> vector<16x256xf32>
    %c0_35 = arith.constant 0 : index
    %c0_36 = arith.constant 0 : index
    %46 = vector.load %arg11[%c0_35, %c0_36] : memref<1x256xf32, #tpu.memory_space<vmem>>, vector<1x256xf32>
    %47 = vector.broadcast %46 : vector<1x256xf32> to vector<16x256xf32>
    %48 = arith.addf %45, %47 : vector<16x256xf32>
    %49 = vector.extract_strided_slice %48 {offsets = [0, 0], sizes = [4, 256], strides = [1, 1]} : vector<16x256xf32> to vector<4x256xf32>
    %50 = arith.addf %49, %17 : vector<4x256xf32>
    %cst_37 = arith.constant 0.000000e+00 : f32
    %51 = vector.broadcast %cst_37 : f32 to vector<4x256xf32>
    %52 = arith.cmpf oge, %50, %51 : vector<4x256xf32>
    %cst_38 = arith.constant 0.00999999977 : f32
    %53 = vector.broadcast %cst_38 : f32 to vector<4x256xf32>
    %54 = arith.mulf %53, %50 : vector<4x256xf32>
    %55 = arith.select %52, %50, %54 : vector<4x256xi1>, vector<4x256xf32>
    %c0_39 = arith.constant 0 : index
    %c0_40 = arith.constant 0 : index
    %c0_41 = arith.constant 0 : index
    %56 = vector.load %arg13[%c0_39, %c0_40, %c0_41] : memref<1x16x256xf32, #tpu.memory_space<vmem>>, vector<1x4x256xf32>
    %57 = vector.shape_cast %56 : vector<1x4x256xf32> to vector<4x256xf32>
    %58 = vector.shape_cast %55 : vector<4x256xf32> to vector<1x4x256xf32>
    tpu.vector_store %arg13[%c0_39, %c0_40, %c0_41], %58 {strides = array<i32>} : memref<1x16x256xf32, #tpu.memory_space<vmem>>, vector<1x4x256xf32>,
    %cst_42 = arith.constant 0.666666686 : f32
    %59 = vector.broadcast %cst_42 : f32 to vector<4x256xf32>
    %60 = arith.mulf %59, %17 : vector<4x256xf32>
    %cst_43 = arith.constant 0.333333343 : f32
    %61 = vector.broadcast %cst_43 : f32 to vector<4x256xf32>
    %62 = arith.mulf %61, %19 : vector<4x256xf32>
    %63 = arith.addf %60, %62 : vector<4x256xf32>
    %64 = vector.extract_strided_slice %48 {offsets = [4, 0], sizes = [4, 256], strides = [1, 1]} : vector<16x256xf32> to vector<4x256xf32>
    %65 = arith.addf %64, %63 : vector<4x256xf32>
    %cst_44 = arith.constant 0.000000e+00 : f32
    %66 = vector.broadcast %cst_44 : f32 to vector<4x256xf32>
    %67 = arith.cmpf oge, %65, %66 : vector<4x256xf32>
    %cst_45 = arith.constant 0.00999999977 : f32
    %68 = vector.broadcast %cst_45 : f32 to vector<4x256xf32>
    %69 = arith.mulf %68, %65 : vector<4x256xf32>
    %70 = arith.select %67, %65, %69 : vector<4x256xi1>, vector<4x256xf32>
    %c0_46 = arith.constant 0 : index
    %c4 = arith.constant 4 : index
    %c0_47 = arith.constant 0 : index
    %71 = vector.load %arg13[%c0_46, %c4, %c0_47] : memref<1x16x256xf32, #tpu.memory_space<vmem>>, vector<1x4x256xf32>
    %72 = vector.shape_cast %71 : vector<1x4x256xf32> to vector<4x256xf32>
    %73 = vector.shape_cast %70 : vector<4x256xf32> to vector<1x4x256xf32>
    tpu.vector_store %arg13[%c0_46, %c4, %c0_47], %73 {strides = array<i32>} : memref<1x16x256xf32, #tpu.memory_space<vmem>>, vector<1x4x256xf32>,
    %cst_48 = arith.constant 0.333333343 : f32
    %74 = vector.broadcast %cst_48 : f32 to vector<4x256xf32>
    %75 = arith.mulf %74, %17 : vector<4x256xf32>
    %cst_49 = arith.constant 0.666666686 : f32
    %76 = vector.broadcast %cst_49 : f32 to vector<4x256xf32>
    %77 = arith.mulf %76, %19 : vector<4x256xf32>
    %78 = arith.addf %75, %77 : vector<4x256xf32>
    %79 = vector.extract_strided_slice %48 {offsets = [8, 0], sizes = [4, 256], strides = [1, 1]} : vector<16x256xf32> to vector<4x256xf32>
    %80 = arith.addf %79, %78 : vector<4x256xf32>
    %cst_50 = arith.constant 0.000000e+00 : f32
    %81 = vector.broadcast %cst_50 : f32 to vector<4x256xf32>
    %82 = arith.cmpf oge, %80, %81 : vector<4x256xf32>
    %cst_51 = arith.constant 0.00999999977 : f32
    %83 = vector.broadcast %cst_51 : f32 to vector<4x256xf32>
    %84 = arith.mulf %83, %80 : vector<4x256xf32>
    %85 = arith.select %82, %80, %84 : vector<4x256xi1>, vector<4x256xf32>
    %c0_52 = arith.constant 0 : index
    %c8 = arith.constant 8 : index
    %c0_53 = arith.constant 0 : index
    %86 = vector.load %arg13[%c0_52, %c8, %c0_53] : memref<1x16x256xf32, #tpu.memory_space<vmem>>, vector<1x4x256xf32>
    %87 = vector.shape_cast %86 : vector<1x4x256xf32> to vector<4x256xf32>
    %88 = vector.shape_cast %85 : vector<4x256xf32> to vector<1x4x256xf32>
    tpu.vector_store %arg13[%c0_52, %c8, %c0_53], %88 {strides = array<i32>} : memref<1x16x256xf32, #tpu.memory_space<vmem>>, vector<1x4x256xf32>,
    %89 = vector.extract_strided_slice %48 {offsets = [12, 0], sizes = [4, 256], strides = [1, 1]} : vector<16x256xf32> to vector<4x256xf32>
    %90 = arith.addf %89, %19 : vector<4x256xf32>
    %cst_54 = arith.constant 0.000000e+00 : f32
    %91 = vector.broadcast %cst_54 : f32 to vector<4x256xf32>
    %92 = arith.cmpf oge, %90, %91 : vector<4x256xf32>
    %cst_55 = arith.constant 0.00999999977 : f32
    %93 = vector.broadcast %cst_55 : f32 to vector<4x256xf32>
    %94 = arith.mulf %93, %90 : vector<4x256xf32>
    %95 = arith.select %92, %90, %94 : vector<4x256xi1>, vector<4x256xf32>
    %c0_56 = arith.constant 0 : index
    %c12 = arith.constant 12 : index
    %c0_57 = arith.constant 0 : index
    %96 = vector.load %arg13[%c0_56, %c12, %c0_57] : memref<1x16x256xf32, #tpu.memory_space<vmem>>, vector<1x4x256xf32>
    %97 = vector.shape_cast %96 : vector<1x4x256xf32> to vector<4x256xf32>
    %98 = vector.shape_cast %95 : vector<4x256xf32> to vector<1x4x256xf32>
    tpu.vector_store %arg13[%c0_56, %c12, %c0_57], %98 {strides = array<i32>} : memref<1x16x256xf32, #tpu.memory_space<vmem>>, vector<1x4x256xf32>,
    return
  }
  func.func @transform_0(%arg0: i32) -> (i32, i32, i32) {
    %c0_i32 = arith.constant 0 : i32
    %c0_i32_0 = arith.constant 0 : i32
    %c0_i32_1 = arith.constant 0 : i32
    return %arg0, %c0_i32, %c0_i32_0 : i32, i32, i32
  }
  func.func @transform_1(%arg0: i32) -> (i32, i32, i32) {
    %c0_i32 = arith.constant 0 : i32
    %c0_i32_0 = arith.constant 0 : i32
    %c0_i32_1 = arith.constant 0 : i32
    return %arg0, %c0_i32, %c0_i32_0 : i32, i32, i32
  }
  func.func @transform_2(%arg0: i32) -> (i32, i32) {
    %c0_i32 = arith.constant 0 : i32
    %c0_i32_0 = arith.constant 0 : i32
    %c0_i32_1 = arith.constant 0 : i32
    return %c0_i32, %c0_i32_0 : i32, i32
  }
  func.func @transform_3(%arg0: i32) -> (i32, i32) {
    %c0_i32 = arith.constant 0 : i32
    %c0_i32_0 = arith.constant 0 : i32
    %c0_i32_1 = arith.constant 0 : i32
    return %c0_i32, %c0_i32_0 : i32, i32
  }
  func.func @transform_4(%arg0: i32) -> (i32, i32) {
    %c0_i32 = arith.constant 0 : i32
    %c0_i32_0 = arith.constant 0 : i32
    %c0_i32_1 = arith.constant 0 : i32
    return %c0_i32, %c0_i32_0 : i32, i32
  }
  func.func @transform_5(%arg0: i32) -> (i32, i32) {
    %c0_i32 = arith.constant 0 : i32
    %c0_i32_0 = arith.constant 0 : i32
    %c0_i32_1 = arith.constant 0 : i32
    return %c0_i32, %c0_i32_0 : i32, i32
  }
  func.func @transform_6(%arg0: i32) -> (i32, i32) {
    %c0_i32 = arith.constant 0 : i32
    %c0_i32_0 = arith.constant 0 : i32
    %c0_i32_1 = arith.constant 0 : i32
    return %c0_i32, %c0_i32_0 : i32, i32
  }
  func.func @transform_7(%arg0: i32) -> (i32, i32) {
    %c0_i32 = arith.constant 0 : i32
    %c0_i32_0 = arith.constant 0 : i32
    %c0_i32_1 = arith.constant 0 : i32
    return %c0_i32, %c0_i32_0 : i32, i32
  }
  func.func @transform_8(%arg0: i32) -> (i32, i32) {
    %c0_i32 = arith.constant 0 : i32
    %c0_i32_0 = arith.constant 0 : i32
    %c0_i32_1 = arith.constant 0 : i32
    return %c0_i32, %c0_i32_0 : i32, i32
  }
  func.func @transform_9(%arg0: i32) -> (i32, i32) {
    %c0_i32 = arith.constant 0 : i32
    %c0_i32_0 = arith.constant 0 : i32
    %c0_i32_1 = arith.constant 0 : i32
    return %c0_i32, %c0_i32_0 : i32, i32
  }
  func.func @transform_10(%arg0: i32) -> (i32, i32) {
    %c0_i32 = arith.constant 0 : i32
    %c0_i32_0 = arith.constant 0 : i32
    %c0_i32_1 = arith.constant 0 : i32
    return %c0_i32, %c0_i32_0 : i32, i32
  }
  func.func @transform_11(%arg0: i32) -> (i32, i32) {
    %c0_i32 = arith.constant 0 : i32
    %c0_i32_0 = arith.constant 0 : i32
    %c0_i32_1 = arith.constant 0 : i32
    return %c0_i32, %c0_i32_0 : i32, i32
  }
  func.func @transform_12(%arg0: i32) -> (i32, i32, i32) {
    %c0_i32 = arith.constant 0 : i32
    %c0_i32_0 = arith.constant 0 : i32
    %c0_i32_1 = arith.constant 0 : i32
    return %arg0, %c0_i32, %c0_i32_0 : i32, i32, i32
  }
}

</mosaic_0001>

<llo_original>
// kernel: feature_extractor_forward.1
$region0: #{feature_extractor_forward.1}
  #allocation0 [shape = 'u32[]', space=smem, size = 0x4, offset = 0x4, fixed_abs, tag = 'smem constant byte address 0x4 - core index']
  #allocation1 [shape = 'u32[144,128]{1,0:T(1,128)}', space=vmem, size = 0x12000, scoped, tag = 'internal scratch']
  %s0 = inlined_call_operand.vmem [shape: bf16[2,16,768], index: 0, kind: input, shape index: {}]
  %s1 = inlined_call_operand.vmem [shape: bf16[2,4,3072], index: 1, kind: input, shape index: {}]
  %s2 = inlined_call_operand.vmem [shape: bf16[768,256], index: 2, kind: input, shape index: {}]
  %s3 = inlined_call_operand.vmem [shape: f32[1,256], index: 3, kind: input, shape index: {}]
  %s4 = inlined_call_operand.vmem [shape: bf16[3072,256], index: 4, kind: input, shape index: {}]
  %s5 = inlined_call_operand.vmem [shape: f32[1,256], index: 5, kind: input, shape index: {}]
  %s6 = inlined_call_operand.vmem [shape: bf16[256,256], index: 6, kind: input, shape index: {}]
  %s7 = inlined_call_operand.vmem [shape: bf16[256,1024], index: 7, kind: input, shape index: {}]
  %s8 = inlined_call_operand.vmem [shape: f32[1,1024], index: 8, kind: input, shape index: {}]
  %s9 = inlined_call_operand.vmem [shape: bf16[1024,256], index: 9, kind: input, shape index: {}]
  %s10 = inlined_call_operand.vmem [shape: f32[1,256], index: 10, kind: input, shape index: {}]
  %s11 = inlined_call_operand.vmem [shape: f32[4,2], index: 11, kind: input, shape index: {}]
  %s12 = inlined_call_operand.vmem [shape: f32[2,16,256], index: 12, kind: output, shape index: {}]
  %s13 = sld [smem:[#allocation0]]
  $region81: #{feature_extractor_forward.1} parent=0
    _
  %s15 = ssub.s32 1, %s13
  %s16 = scalar_select 0, %s15, %s13
  loop: start=0, step=1, limit=4
  $region2: #{feature_extractor_forward.1} parent=0 // loop_pre_header
    _
  $region3: #{feature_extractor_forward.1} parent=0 // loop_header
    %s18 = sphi 0, %s22
    %p19 = scmp.ge.s32.totalorder %s18, 4
    %s28 = sphi 0, %s30
    %s31 = sphi 0, %s28
    %s32 = sphi 0, %s31
    %s48 = sphi 0, %s32
    %s54 = sphi 0, %s56
    %s57 = sphi 0, %s54
    %s58 = sphi 0, %s57
    %s74 = sphi 0, %s58
    %s78 = sphi 0, %s78
    %s80 = sphi 0, %s78
    %s81 = sphi 0, %s80
    %s95 = sphi 0, %s81
    %s99 = sphi 0, %s99
    %s101 = sphi 0, %s99
    %s102 = sphi 0, %s101
    %s116 = sphi 0, %s102
    %s120 = sphi 0, %s120
    %s122 = sphi 0, %s120
    %s123 = sphi 0, %s122
    %s137 = sphi 0, %s123
    %s141 = sphi 0, %s141
    %s143 = sphi 0, %s141
    %s144 = sphi 0, %s143
    %s158 = sphi 0, %s144
    %s162 = sphi 0, %s162
    %s164 = sphi 0, %s162
    %s165 = sphi 0, %s164
    %s179 = sphi 0, %s165
    %s183 = sphi 0, %s183
    %s185 = sphi 0, %s183
    %s186 = sphi 0, %s185
    %s200 = sphi 0, %s186
    %s204 = sphi 0, %s204
    %s206 = sphi 0, %s204
    %s207 = sphi 0, %s206
    %s221 = sphi 0, %s207
    %s225 = sphi 0, %s225
    %s227 = sphi 0, %s225
    %s228 = sphi 0, %s227
    %s242 = sphi 0, %s228
    %s246 = sphi 0, %s246
    %s248 = sphi 0, %s246
    %s249 = sphi 0, %s248
    %s263 = sphi 0, %s249
    %s267 = sphi 0, %s267
    %s269 = sphi 0, %s267
    %s270 = sphi 0, %s269
    %s284 = sphi 0, %s270
    %s290 = sphi 0, %s292
    %s293 = sphi 0, %s290
    %s294 = sphi 0, %s293
    %s310 = sphi 0, %s294
  $region4: #{feature_extractor_forward.1} parent=0 // loop_header_branch
    %21 = sbr.rel (%p19) target = $region8
  $region5: #{feature_extractor_forward.1} parent=0 // loop_body
    %s23 = ssub.s32 %s18, 1
    %s24 = ssub.s32 %s18, 2
    %s25 = sadd.s32 %s18, 1
    %s26 = ssub.s32 %s18, %s25
    %p27 = scmp.eq.s32.totalorder %s26, 0
    %s29 = sadd.s32 %s28, 1
    %s30 = scalar_select %p27, %s28, %s29
    %p33 = pneg %p27
    %p34 = scmp.eq.s32.totalorder %s18, 1
    %p35 = por %p33, %p34
    %p36 = scmp.ne.s32.totalorder %s28, %s31
    %p37 = scmp.eq.s32.totalorder %s18, 0
    %p38 = por %p36, %p37
    %p39 = scmp.ne.s32.totalorder %s28, %s31
    %p40 = scmp.eq.s32.totalorder %s23, 1
    %p41 = por %p39, %p40
    %p42 = scmp.ne.s32.totalorder %s31, %s32
    %p43 = scmp.eq.s32.totalorder %s23, 0
    %p44 = por %p42, %p43
    %p45 = scmp.ne.s32.totalorder %s31, %s32
    %p46 = scmp.eq.s32.totalorder %s24, 1
    %p47 = por %p45, %p46
    %p49 = scmp.ne.s32.totalorder %s32, %s48
    %p50 = scmp.eq.s32.totalorder %s24, 0
    %p51 = por %p49, %p50
    %s52 = ssub.s32 %s18, %s25
    %p53 = scmp.eq.s32.totalorder %s52, 0
    %s55 = sadd.s32 %s54, 1
    %s56 = scalar_select %p53, %s54, %s55
    %p59 = pneg %p53
    %p60 = scmp.eq.s32.totalorder %s18, 1
    %p61 = por %p59, %p60
    %p62 = scmp.ne.s32.totalorder %s54, %s57
    %p63 = scmp.eq.s32.totalorder %s18, 0
    %p64 = por %p62, %p63
    %p65 = scmp.ne.s32.totalorder %s54, %s57
    %p66 = scmp.eq.s32.totalorder %s23, 1
    %p67 = por %p65, %p66
    %p68 = scmp.ne.s32.totalorder %s57, %s58
    %p69 = scmp.eq.s32.totalorder %s23, 0
    %p70 = por %p68, %p69
    %p71 = scmp.ne.s32.totalorder %s57, %s58
    %p72 = scmp.eq.s32.totalorder %s24, 1
    %p73 = por %p71, %p72
    %p75 = scmp.ne.s32.totalorder %s58, %s74
    %p76 = scmp.eq.s32.totalorder %s24, 0
    %p77 = por %p75, %p76
    %s79 = sadd.s32 %s78, 1
    %p82 = scmp.eq.s32.totalorder %s18, 1
    %p83 = scmp.ne.s32.totalorder %s78, %s80
    %p84 = scmp.eq.s32.totalorder %s18, 0
    %p85 = por %p83, %p84
    %p86 = scmp.ne.s32.totalorder %s78, %s80
    %p87 = scmp.eq.s32.totalorder %s23, 1
    %p88 = por %p86, %p87
    %p89 = scmp.ne.s32.totalorder %s80, %s81
    %p90 = scmp.eq.s32.totalorder %s23, 0
    %p91 = por %p89, %p90
    %p92 = scmp.ne.s32.totalorder %s80, %s81
    %p93 = scmp.eq.s32.totalorder %s24, 1
    %p94 = por %p92, %p93
    %p96 = scmp.ne.s32.totalorder %s81, %s95
    %p97 = scmp.eq.s32.totalorder %s24, 0
    %p98 = por %p96, %p97
    %s100 = sadd.s32 %s99, 1
    %p103 = scmp.eq.s32.totalorder %s18, 1
    %p104 = scmp.ne.s32.totalorder %s99, %s101
    %p105 = scmp.eq.s32.totalorder %s18, 0
    %p106 = por %p104, %p105
    %p107 = scmp.ne.s32.totalorder %s99, %s101
    %p108 = scmp.eq.s32.totalorder %s23, 1
    %p109 = por %p107, %p108
    %p110 = scmp.ne.s32.totalorder %s101, %s102
    %p111 = scmp.eq.s32.totalorder %s23, 0
    %p112 = por %p110, %p111
    %p113 = scmp.ne.s32.totalorder %s101, %s102
    %p114 = scmp.eq.s32.totalorder %s24, 1
    %p115 = por %p113, %p114
    %p117 = scmp.ne.s32.totalorder %s102, %s116
    %p118 = scmp.eq.s32.totalorder %s24, 0
    %p119 = por %p117, %p118
    %s121 = sadd.s32 %s120, 1
    %p124 = scmp.eq.s32.totalorder %s18, 1
    %p125 = scmp.ne.s32.totalorder %s120, %s122
    %p126 = scmp.eq.s32.totalorder %s18, 0
    %p127 = por %p125, %p126
    %p128 = scmp.ne.s32.totalorder %s120, %s122
    %p129 = scmp.eq.s32.totalorder %s23, 1
    %p130 = por %p128, %p129
    %p131 = scmp.ne.s32.totalorder %s122, %s123
    %p132 = scmp.eq.s32.totalorder %s23, 0
    %p133 = por %p131, %p132
    %p134 = scmp.ne.s32.totalorder %s122, %s123
    %p135 = scmp.eq.s32.totalorder %s24, 1
    %p136 = por %p134, %p135
    %p138 = scmp.ne.s32.totalorder %s123, %s137
    %p139 = scmp.eq.s32.totalorder %s24, 0
    %p140 = por %p138, %p139
    %s142 = sadd.s32 %s141, 1
    %p145 = scmp.eq.s32.totalorder %s18, 1
    %p146 = scmp.ne.s32.totalorder %s141, %s143
    %p147 = scmp.eq.s32.totalorder %s18, 0
    %p148 = por %p146, %p147
    %p149 = scmp.ne.s32.totalorder %s141, %s143
    %p150 = scmp.eq.s32.totalorder %s23, 1
    %p151 = por %p149, %p150
    %p152 = scmp.ne.s32.totalorder %s143, %s144
    %p153 = scmp.eq.s32.totalorder %s23, 0
    %p154 = por %p152, %p153
    %p155 = scmp.ne.s32.totalorder %s143, %s144
    %p156 = scmp.eq.s32.totalorder %s24, 1
    %p157 = por %p155, %p156
    %p159 = scmp.ne.s32.totalorder %s144, %s158
    %p160 = scmp.eq.s32.totalorder %s24, 0
    %p161 = por %p159, %p160
    %s163 = sadd.s32 %s162, 1
    %p166 = scmp.eq.s32.totalorder %s18, 1
    %p167 = scmp.ne.s32.totalorder %s162, %s164
    %p168 = scmp.eq.s32.totalorder %s18, 0
    %p169 = por %p167, %p168
    %p170 = scmp.ne.s32.totalorder %s162, %s164
    %p171 = scmp.eq.s32.totalorder %s23, 1
    %p172 = por %p170, %p171
    %p173 = scmp.ne.s32.totalorder %s164, %s165
    %p174 = scmp.eq.s32.totalorder %s23, 0
    %p175 = por %p173, %p174
    %p176 = scmp.ne.s32.totalorder %s164, %s165
    %p177 = scmp.eq.s32.totalorder %s24, 1
    %p178 = por %p176, %p177
    %p180 = scmp.ne.s32.totalorder %s165, %s179
    %p181 = scmp.eq.s32.totalorder %s24, 0
    %p182 = por %p180, %p181
    %s184 = sadd.s32 %s183, 1
    %p187 = scmp.eq.s32.totalorder %s18, 1
    %p188 = scmp.ne.s32.totalorder %s183, %s185
    %p189 = scmp.eq.s32.totalorder %s18, 0
    %p190 = por %p188, %p189
    %p191 = scmp.ne.s32.totalorder %s183, %s185
    %p192 = scmp.eq.s32.totalorder %s23, 1
    %p193 = por %p191, %p192
    %p194 = scmp.ne.s32.totalorder %s185, %s186
    %p195 = scmp.eq.s32.totalorder %s23, 0
    %p196 = por %p194, %p195
    %p197 = scmp.ne.s32.totalorder %s185, %s186
    %p198 = scmp.eq.s32.totalorder %s24, 1
    %p199 = por %p197, %p198
    %p201 = scmp.ne.s32.totalorder %s186, %s200
    %p202 = scmp.eq.s32.totalorder %s24, 0
    %p203 = por %p201, %p202
    %s205 = sadd.s32 %s204, 1
    %p208 = scmp.eq.s32.totalorder %s18, 1
    %p209 = scmp.ne.s32.totalorder %s204, %s206
    %p210 = scmp.eq.s32.totalorder %s18, 0
    %p211 = por %p209, %p210
    %p212 = scmp.ne.s32.totalorder %s204, %s206
    %p213 = scmp.eq.s32.totalorder %s23, 1
    %p214 = por %p212, %p213
    %p215 = scmp.ne.s32.totalorder %s206, %s207
    %p216 = scmp.eq.s32.totalorder %s23, 0
    %p217 = por %p215, %p216
    %p218 = scmp.ne.s32.totalorder %s206, %s207
    %p219 = scmp.eq.s32.totalorder %s24, 1
    %p220 = por %p218, %p219
    %p222 = scmp.ne.s32.totalorder %s207, %s221
    %p223 = scmp.eq.s32.totalorder %s24, 0
    %p224 = por %p222, %p223
    %s226 = sadd.s32 %s225, 1
    %p229 = scmp.eq.s32.totalorder %s18, 1
    %p230 = scmp.ne.s32.totalorder %s225, %s227
    %p231 = scmp.eq.s32.totalorder %s18, 0
    %p232 = por %p230, %p231
    %p233 = scmp.ne.s32.totalorder %s225, %s227
    %p234 = scmp.eq.s32.totalorder %s23, 1
    %p235 = por %p233, %p234
    %p236 = scmp.ne.s32.totalorder %s227, %s228
    %p237 = scmp.eq.s32.totalorder %s23, 0
    %p238 = por %p236, %p237
    %p239 = scmp.ne.s32.totalorder %s227, %s228
    %p240 = scmp.eq.s32.totalorder %s24, 1
    %p241 = por %p239, %p240
    %p243 = scmp.ne.s32.totalorder %s228, %s242
    %p244 = scmp.eq.s32.totalorder %s24, 0
    %p245 = por %p243, %p244
    %s247 = sadd.s32 %s246, 1
    %p250 = scmp.eq.s32.totalorder %s18, 1
    %p251 = scmp.ne.s32.totalorder %s246, %s248
    %p252 = scmp.eq.s32.totalorder %s18, 0
    %p253 = por %p251, %p252
    %p254 = scmp.ne.s32.totalorder %s246, %s248
    %p255 = scmp.eq.s32.totalorder %s23, 1
    %p256 = por %p254, %p255
    %p257 = scmp.ne.s32.totalorder %s248, %s249
    %p258 = scmp.eq.s32.totalorder %s23, 0
    %p259 = por %p257, %p258
    %p260 = scmp.ne.s32.totalorder %s248, %s249
    %p261 = scmp.eq.s32.totalorder %s24, 1
    %p262 = por %p260, %p261
    %p264 = scmp.ne.s32.totalorder %s249, %s263
    %p265 = scmp.eq.s32.totalorder %s24, 0
    %p266 = por %p264, %p265
    %s268 = sadd.s32 %s267, 1
    %p271 = scmp.eq.s32.totalorder %s18, 1
    %p272 = scmp.ne.s32.totalorder %s267, %s269
    %p273 = scmp.eq.s32.totalorder %s18, 0
    %p274 = por %p272, %p273
    %p275 = scmp.ne.s32.totalorder %s267, %s269
    %p276 = scmp.eq.s32.totalorder %s23, 1
    %p277 = por %p275, %p276
    %p278 = scmp.ne.s32.totalorder %s269, %s270
    %p279 = scmp.eq.s32.totalorder %s23, 0
    %p280 = por %p278, %p279
    %p281 = scmp.ne.s32.totalorder %s269, %s270
    %p282 = scmp.eq.s32.totalorder %s24, 1
    %p283 = por %p281, %p282
    %p285 = scmp.ne.s32.totalorder %s270, %s284
    %p286 = scmp.eq.s32.totalorder %s24, 0
    %p287 = por %p285, %p286
    %s288 = ssub.s32 %s18, %s25
    %p289 = scmp.eq.s32.totalorder %s288, 0
    %s291 = sadd.s32 %s290, 1
    %s292 = scalar_select %p289, %s290, %s291
    %p295 = pneg %p289
    %p296 = scmp.eq.s32.totalorder %s18, 1
    %p297 = por %p295, %p296
    %p298 = scmp.ne.s32.totalorder %s290, %s293
    %p299 = scmp.eq.s32.totalorder %s18, 0
    %p300 = por %p298, %p299
    %p301 = scmp.ne.s32.totalorder %s290, %s293
    %p302 = scmp.eq.s32.totalorder %s23, 1
    %p303 = por %p301, %p302
    %p304 = scmp.ne.s32.totalorder %s293, %s294
    %p305 = scmp.eq.s32.totalorder %s23, 0
    %p306 = por %p304, %p305
    %p307 = scmp.ne.s32.totalorder %s293, %s294
    %p308 = scmp.eq.s32.totalorder %s24, 1
    %p309 = por %p307, %p308
    %p311 = scmp.ne.s32.totalorder %s294, %s310
    %p312 = scmp.eq.s32.totalorder %s24, 0
    %p313 = por %p311, %p312
    %p314 = scmp.le.s32.totalorder 1, %s18
    %p315 = scmp.lt.s32.totalorder %s18, 3
    %p316 = pnand %p314, %p315
    %p317 = pneg %p316
    // Predicated region
    $region9: #{feature_extractor_forward.1} parent=5 // pred_check
      _
    $region10: #{feature_extractor_forward.1} parent=5 // pred_check_branch
      %319 = sbr.rel (%p316) target = $region12
    $region11: #{feature_extractor_forward.1} parent=5 // pred_region
      %s320 = ssub.s32 %s18, 1
      // Predicated region
      $region13: #{feature_extractor_forward.1} parent=11 // pred_check
        %p321 = pneg %p91
      $region14: #{feature_extractor_forward.1} parent=11 // pred_check_branch
        %323 = sbr.rel (%p321) target = $region16
      $region15: #{feature_extractor_forward.1} parent=11 // pred_region
        _
      $region16: #{feature_extractor_forward.1} parent=11 // pred_fallthru
        _
      // Predicated region
      $region17: #{feature_extractor_forward.1} parent=11 // pred_check
        %p324 = pneg %p112
      $region18: #{feature_extractor_forward.1} parent=11 // pred_check_branch
        %326 = sbr.rel (%p324) target = $region20
      $region19: #{feature_extractor_forward.1} parent=11 // pred_region
        _
      $region20: #{feature_extractor_forward.1} parent=11 // pred_fallthru
        _
      // Predicated region
      $region21: #{feature_extractor_forward.1} parent=11 // pred_check
        %p327 = pneg %p133
      $region22: #{feature_extractor_forward.1} parent=11 // pred_check_branch
        %329 = sbr.rel (%p327) target = $region24
      $region23: #{feature_extractor_forward.1} parent=11 // pred_region
        _
      $region24: #{feature_extractor_forward.1} parent=11 // pred_fallthru
        _
      // Predicated region
      $region25: #{feature_extractor_forward.1} parent=11 // pred_check
        %p330 = pneg %p154
      $region26: #{feature_extractor_forward.1} parent=11 // pred_check_branch
        %332 = sbr.rel (%p330) target = $region28
      $region27: #{feature_extractor_forward.1} parent=11 // pred_region
        _
      $region28: #{feature_extractor_forward.1} parent=11 // pred_fallthru
        _
      // Predicated region
      $region29: #{feature_extractor_forward.1} parent=11 // pred_check
        %p333 = pneg %p175
      $region30: #{feature_extractor_forward.1} parent=11 // pred_check_branch
        %335 = sbr.rel (%p333) target = $region32
      $region31: #{feature_extractor_forward.1} parent=11 // pred_region
        _
      $region32: #{feature_extractor_forward.1} parent=11 // pred_fallthru
        _
      // Predicated region
      $region33: #{feature_extractor_forward.1} parent=11 // pred_check
        %p336 = pneg %p196
      $region34: #{feature_extractor_forward.1} parent=11 // pred_check_branch
        %338 = sbr.rel (%p336) target = $region36
      $region35: #{feature_extractor_forward.1} parent=11 // pred_region
        _
      $region36: #{feature_extractor_forward.1} parent=11 // pred_fallthru
        _
      // Predicated region
      $region37: #{feature_extractor_forward.1} parent=11 // pred_check
        %p339 = pneg %p217
      $region38: #{feature_extractor_forward.1} parent=11 // pred_check_branch
        %341 = sbr.rel (%p339) target = $region40
      $region39: #{feature_extractor_forward.1} parent=11 // pred_region
        _
      $region40: #{feature_extractor_forward.1} parent=11 // pred_fallthru
        _
      // Predicated region
      $region41: #{feature_extractor_forward.1} parent=11 // pred_check
        %p342 = pneg %p238
      $region42: #{feature_extractor_forward.1} parent=11 // pred_check_branch
        %344 = sbr.rel (%p342) target = $region44
      $region43: #{feature_extractor_forward.1} parent=11 // pred_region
        _
      $region44: #{feature_extractor_forward.1} parent=11 // pred_fallthru
        _
      // Predicated region
      $region45: #{feature_extractor_forward.1} parent=11 // pred_check
        %p345 = pneg %p259
      $region46: #{feature_extractor_forward.1} parent=11 // pred_check_branch
        %347 = sbr.rel (%p345) target = $region48
      $region47: #{feature_extractor_forward.1} parent=11 // pred_region
        _
      $region48: #{feature_extractor_forward.1} parent=11 // pred_fallthru
        _
      // Predicated region
      $region49: #{feature_extractor_forward.1} parent=11 // pred_check
        %p348 = pneg %p280
      $region50: #{feature_extractor_forward.1} parent=11 // pred_check_branch
        %350 = sbr.rel (%p348) target = $region52
      $region51: #{feature_extractor_forward.1} parent=11 // pred_region
        _
      $region52: #{feature_extractor_forward.1} parent=11 // pred_fallthru
        _
    $region12: #{feature_extractor_forward.1} parent=5 // pred_fallthru
      _
    %p351 = scmp.lt.s32.totalorder %s18, 2
    // Predicated region
    $region53: #{feature_extractor_forward.1} parent=5 // pred_check
      %p352 = pneg %p351
    $region54: #{feature_extractor_forward.1} parent=5 // pred_check_branch
      %354 = sbr.rel (%p352) target = $region56
    $region55: #{feature_extractor_forward.1} parent=5 // pred_region
      // Predicated region
      $region57: #{feature_extractor_forward.1} parent=55 // pred_check
        %p355 = pneg %p38
      $region58: #{feature_extractor_forward.1} parent=55 // pred_check_branch
        %357 = sbr.rel (%p355) target = $region60
      $region59: #{feature_extractor_forward.1} parent=55 // pred_region
        %p358 = scmp.lt.s32.totalorder %s18, 1
        %s359 = scalar_select %p358, %s18, 1
        %s360 = smul.addr %s359, 12
        %s361 = smul.addr %s360, 4
        %s362 = scalar_lea.vmem %s0, %s361
      $region60: #{feature_extractor_forward.1} parent=55 // pred_fallthru
        _
      // Predicated region
      $region61: #{feature_extractor_forward.1} parent=55 // pred_check
        %p363 = pneg %p64
      $region62: #{feature_extractor_forward.1} parent=55 // pred_check_branch
        %365 = sbr.rel (%p363) target = $region64
      $region63: #{feature_extractor_forward.1} parent=55 // pred_region
        %p366 = scmp.lt.s32.totalorder %s18, 1
        %s367 = scalar_select %p366, %s18, 1
        %s368 = smul.addr %s367, 24
        %s369 = smul.addr %s368, 2
        %s370 = scalar_lea.vmem %s1, %s369
      $region64: #{feature_extractor_forward.1} parent=55 // pred_fallthru
        _
    $region56: #{feature_extractor_forward.1} parent=5 // pred_fallthru
      _
    %p371 = scmp.le.s32.totalorder 1, %s18
    %p372 = scmp.lt.s32.totalorder %s18, 3
    %p373 = pnand %p371, %p372
    %p374 = pneg %p373
    // Predicated region
    $region65: #{feature_extractor_forward.1} parent=5 // pred_check
      _
    $region66: #{feature_extractor_forward.1} parent=5 // pred_check_branch
      %376 = sbr.rel (%p373) target = $region68
    $region67: #{feature_extractor_forward.1} parent=5 // pred_region
      %s377 = ssub.s32 %s18, 1
      %p378 = scmp.lt.s32.totalorder %s23, 1
      %s379 = scalar_select %p378, %s23, 1
      %s380 = smul.addr %s379, 12
      %s381 = smul.addr %s380, 4
      %s382 = scalar_lea.vmem %s0, %s381
      %p383 = pneg %p44
      %p384 = pneg %p41
      %p385 = scmp.lt.s32.totalorder %s23, 1
      %s386 = scalar_select %p385, %s23, 1
      %s387 = smul.addr %s386, 24
      %s388 = smul.addr %s387, 2
      %s389 = scalar_lea.vmem %s1, %s388
      %p390 = pneg %p70
      %p391 = pneg %p67
      %p392 = pneg %p91
      %p393 = pneg %p88
      %p394 = pneg %p112
      %p395 = pneg %p109
      %p396 = pneg %p133
      %p397 = pneg %p130
      %p398 = pneg %p154
      %p399 = pneg %p151
      %p400 = pneg %p175
      %p401 = pneg %p172
      %p402 = pneg %p196
      %p403 = pneg %p193
      %p404 = pneg %p217
      %p405 = pneg %p214
      %p406 = pneg %p238
      %p407 = pneg %p235
      %p408 = pneg %p259
      %p409 = pneg %p256
      %p410 = pneg %p280
      %p411 = pneg %p277
      %p412 = pneg %p306
      %p413 = pneg %p303
      %p414 = scmp.lt.s32.totalorder %s23, 1
      %s415 = scalar_select %p414, %s23, 1
      %s416 = smul.addr %s415, 4
      %s417 = smul.addr %s416, 8
      %s418 = scalar_lea.vmem %s12, %s417
      %p419 = scmp.lt.s32.totalorder %s23, 1
      %s420 = scalar_select %p419, %s23, 1
      %s421 = smul.addr %s420, 12
      %s422 = smul.addr %s421, 4
      %s423 = scalar_lea.vmem %s0, %s422
      %p424 = scmp.lt.s32.totalorder %s23, 1
      %s425 = scalar_select %p424, %s23, 1
      %s426 = smul.addr %s425, 24
      %s427 = smul.addr %s426, 2
      %s428 = scalar_lea.vmem %s1, %s427
      %p429 = scmp.lt.s32.totalorder %s23, 1
      %s430 = scalar_select %p429, %s23, 1
      %s431 = smul.addr %s430, 4
      %s432 = smul.addr %s431, 8
      %s433 = scalar_lea.vmem %s12, %s432
      %v434 = vld [vmem:[%s428] sm:$0xff]
      %v435 = vld [vmem:[%s428 + $0x8] sm:$0xff]
      %v436 = vld [vmem:[%s428 + $0x10] sm:$0xff]
      %v437 = vld [vmem:[%s428 + $0x18] sm:$0xff]
      %v438 = vld [vmem:[%s428 + $0x20] sm:$0xff]
      %v439 = vld [vmem:[%s428 + $0x28] sm:$0xff]
      %v440 = vld [vmem:[%s4] sm:$0xff]
      %v441 = vld [vmem:[%s4 + $0x8] sm:$0xff]
      %v442 = vld [vmem:[%s4 + $0x10] sm:$0xff]
      %v443 = vld [vmem:[%s4 + $0x18] sm:$0xff]
      %v444 = vld [vmem:[%s4 + $0x20] sm:$0xff]
      %v445 = vld [vmem:[%s4 + $0x28] sm:$0xff]
      %v446 = vld [vmem:[%s4 + $0x30] sm:$0xff]
      %v447 = vld [vmem:[%s4 + $0x38] sm:$0xff]
      %v448 = vld [vmem:[%s4 + $0x40] sm:$0xff]
      %v449 = vld [vmem:[%s4 + $0x48] sm:$0xff]
      %v450 = vld [vmem:[%s4 + $0x50] sm:$0xff]
      %v451 = vld [vmem:[%s4 + $0x58] sm:$0xff]
      %v452 = vld [vmem:[%s4 + $0x60] sm:$0xff]
      %v453 = vld [vmem:[%s4 + $0x68] sm:$0xff]
      %v454 = vld [vmem:[%s4 + $0x70] sm:$0xff]
      %v455 = vld [vmem:[%s4 + $0x78] sm:$0xff]
      %v456 = vld [vmem:[%s4 + $0x80] sm:$0xff]
      %v457 = vld [vmem:[%s4 + $0x88] sm:$0xff]
      %v458 = vld [vmem:[%s4 + $0x90] sm:$0xff]
      %v459 = vld [vmem:[%s4 + $0x98] sm:$0xff]
      %v460 = vld [vmem:[%s4 + $0xa0] sm:$0xff]
      %v461 = vld [vmem:[%s4 + $0xa8] sm:$0xff]
      %v462 = vld [vmem:[%s4 + $0xb0] sm:$0xff]
      %v463 = vld [vmem:[%s4 + $0xb8] sm:$0xff]
      %v464 = vld [vmem:[%s4 + $0xc0] sm:$0xff]
      %v465 = vld [vmem:[%s4 + $0xc8] sm:$0xff]
      %v466 = vld [vmem:[%s4 + $0xd0] sm:$0xff]
      %v467 = vld [vmem:[%s4 + $0xd8] sm:$0xff]
      %v468 = vld [vmem:[%s4 + $0xe0] sm:$0xff]
      %v469 = vld [vmem:[%s4 + $0xe8] sm:$0xff]
      %v470 = vld [vmem:[%s4 + $0xf0] sm:$0xff]
      %v471 = vld [vmem:[%s4 + $0xf8] sm:$0xff]
      %v472 = vld [vmem:[%s4 + $0x100] sm:$0xff]
      %v473 = vld [vmem:[%s4 + $0x108] sm:$0xff]
      %v474 = vld [vmem:[%s4 + $0x110] sm:$0xff]
      %v475 = vld [vmem:[%s4 + $0x118] sm:$0xff]
      %v476 = vld [vmem:[%s4 + $0x120] sm:$0xff]
      %v477 = vld [vmem:[%s4 + $0x128] sm:$0xff]
      %v478 = vld [vmem:[%s4 + $0x130] sm:$0xff]
      %v479 = vld [vmem:[%s4 + $0x138] sm:$0xff]
      %v480 = vld [vmem:[%s4 + $0x140] sm:$0xff]
      %v481 = vld [vmem:[%s4 + $0x148] sm:$0xff]
      %v482 = vld [vmem:[%s4 + $0x150] sm:$0xff]
      %v483 = vld [vmem:[%s4 + $0x158] sm:$0xff]
      %v484 = vld [vmem:[%s4 + $0x160] sm:$0xff]
      %v485 = vld [vmem:[%s4 + $0x168] sm:$0xff]
      %v486 = vld [vmem:[%s4 + $0x170] sm:$0xff]
      %v487 = vld [vmem:[%s4 + $0x178] sm:$0xff]
      %v488 = vld [vmem:[%s4 + $0x180] sm:$0xff]
      %v489 = vld [vmem:[%s4 + $0x188] sm:$0xff]
      %v490 = vld [vmem:[%s4 + $0x190] sm:$0xff]
      %v491 = vld [vmem:[%s4 + $0x198] sm:$0xff]
      %v492 = vld [vmem:[%s4 + $0x1a0] sm:$0xff]
      %v493 = vld [vmem:[%s4 + $0x1a8] sm:$0xff]
      %v494 = vld [vmem:[%s4 + $0x1b0] sm:$0xff]
      %v495 = vld [vmem:[%s4 + $0x1b8] sm:$0xff]
      %v496 = vld [vmem:[%s4 + $0x1c0] sm:$0xff]
      %v497 = vld [vmem:[%s4 + $0x1c8] sm:$0xff]
      %v498 = vld [vmem:[%s4 + $0x1d0] sm:$0xff]
      %v499 = vld [vmem:[%s4 + $0x1d8] sm:$0xff]
      %v500 = vld [vmem:[%s4 + $0x1e0] sm:$0xff]
      %v501 = vld [vmem:[%s4 + $0x1e8] sm:$0xff]
      %v502 = vld [vmem:[%s4 + $0x1f0] sm:$0xff]
      %v503 = vld [vmem:[%s4 + $0x1f8] sm:$0xff]
      %v504 = vld [vmem:[%s4 + $0x200] sm:$0xff]
      %v505 = vld [vmem:[%s4 + $0x208] sm:$0xff]
      %v506 = vld [vmem:[%s4 + $0x210] sm:$0xff]
      %v507 = vld [vmem:[%s4 + $0x218] sm:$0xff]
      %v508 = vld [vmem:[%s4 + $0x220] sm:$0xff]
      %v509 = vld [vmem:[%s4 + $0x228] sm:$0xff]
      %v510 = vld [vmem:[%s4 + $0x230] sm:$0xff]
      %v511 = vld [vmem:[%s4 + $0x238] sm:$0xff]
      %v512 = vld [vmem:[%s4 + $0x240] sm:$0xff]
      %v513 = vld [vmem:[%s4 + $0x248] sm:$0xff]
      %v514 = vld [vmem:[%s4 + $0x250] sm:$0xff]
      %v515 = vld [vmem:[%s4 + $0x258] sm:$0xff]
      %v516 = vld [vmem:[%s4 + $0x260] sm:$0xff]
      %v517 = vld [vmem:[%s4 + $0x268] sm:$0xff]
      %v518 = vld [vmem:[%s4 + $0x270] sm:$0xff]
      %v519 = vld [vmem:[%s4 + $0x278] sm:$0xff]
      %v520 = vld [vmem:[%s4 + $0x280] sm:$0xff]
      %v521 = vld [vmem:[%s4 + $0x288] sm:$0xff]
      %v522 = vld [vmem:[%s4 + $0x290] sm:$0xff]
      %v523 = vld [vmem:[%s4 + $0x298] sm:$0xff]
      %v524 = vld [vmem:[%s4 + $0x2a0] sm:$0xff]
      %v525 = vld [vmem:[%s4 + $0x2a8] sm:$0xff]
      %v526 = vld [vmem:[%s4 + $0x2b0] sm:$0xff]
      %v527 = vld [vmem:[%s4 + $0x2b8] sm:$0xff]
      %v528 = vld [vmem:[%s4 + $0x2c0] sm:$0xff]
      %v529 = vld [vmem:[%s4 + $0x2c8] sm:$0xff]
      %v530 = vld [vmem:[%s4 + $0x2d0] sm:$0xff]
      %v531 = vld [vmem:[%s4 + $0x2d8] sm:$0xff]
      %v532 = vld [vmem:[%s4 + $0x2e0] sm:$0xff]
      %v533 = vld [vmem:[%s4 + $0x2e8] sm:$0xff]
      %v534 = vld [vmem:[%s4 + $0x2f0] sm:$0xff]
      %v535 = vld [vmem:[%s4 + $0x2f8] sm:$0xff]
      %v536 = vld [vmem:[%s4 + $0x300] sm:$0xff]
      %v537 = vld [vmem:[%s4 + $0x308] sm:$0xff]
      %v538 = vld [vmem:[%s4 + $0x310] sm:$0xff]
      %v539 = vld [vmem:[%s4 + $0x318] sm:$0xff]
      %v540 = vld [vmem:[%s4 + $0x320] sm:$0xff]
      %v541 = vld [vmem:[%s4 + $0x328] sm:$0xff]
      %v542 = vld [vmem:[%s4 + $0x330] sm:$0xff]
      %v543 = vld [vmem:[%s4 + $0x338] sm:$0xff]
      %v544 = vld [vmem:[%s4 + $0x340] sm:$0xff]
      %v545 = vld [vmem:[%s4 + $0x348] sm:$0xff]
      %v546 = vld [vmem:[%s4 + $0x350] sm:$0xff]
      %v547 = vld [vmem:[%s4 + $0x358] sm:$0xff]
      %v548 = vld [vmem:[%s4 + $0x360] sm:$0xff]
      %v549 = vld [vmem:[%s4 + $0x368] sm:$0xff]
      %v550 = vld [vmem:[%s4 + $0x370] sm:$0xff]
      %v551 = vld [vmem:[%s4 + $0x378] sm:$0xff]
      %v552 = vld [vmem:[%s4 + $0x380] sm:$0xff]
      %v553 = vld [vmem:[%s4 + $0x388] sm:$0xff]
      %v554 = vld [vmem:[%s4 + $0x390] sm:$0xff]
      %v555 = vld [vmem:[%s4 + $0x398] sm:$0xff]
      %v556 = vld [vmem:[%s4 + $0x3a0] sm:$0xff]
      %v557 = vld [vmem:[%s4 + $0x3a8] sm:$0xff]
      %v558 = vld [vmem:[%s4 + $0x3b0] sm:$0xff]
      %v559 = vld [vmem:[%s4 + $0x3b8] sm:$0xff]
      %v560 = vld [vmem:[%s4 + $0x3c0] sm:$0xff]
      %v561 = vld [vmem:[%s4 + $0x3c8] sm:$0xff]
      %v562 = vld [vmem:[%s4 + $0x3d0] sm:$0xff]
      %v563 = vld [vmem:[%s4 + $0x3d8] sm:$0xff]
      %v564 = vld [vmem:[%s4 + $0x3e0] sm:$0xff]
      %v565 = vld [vmem:[%s4 + $0x3e8] sm:$0xff]
      %v566 = vld [vmem:[%s4 + $0x3f0] sm:$0xff]
      %v567 = vld [vmem:[%s4 + $0x3f8] sm:$0xff]
      %v568 = vld [vmem:[%s4 + $0x400] sm:$0xff]
      %v569 = vld [vmem:[%s4 + $0x408] sm:$0xff]
      %v570 = vld [vmem:[%s4 + $0x410] sm:$0xff]
      %v571 = vld [vmem:[%s4 + $0x418] sm:$0xff]
      %v572 = vld [vmem:[%s4 + $0x420] sm:$0xff]
      %v573 = vld [vmem:[%s4 + $0x428] sm:$0xff]
      %v574 = vld [vmem:[%s4 + $0x430] sm:$0xff]
      %v575 = vld [vmem:[%s4 + $0x438] sm:$0xff]
      %v576 = vld [vmem:[%s4 + $0x440] sm:$0xff]
      %v577 = vld [vmem:[%s4 + $0x448] sm:$0xff]
      %v578 = vld [vmem:[%s4 + $0x450] sm:$0xff]
      %v579 = vld [vmem:[%s4 + $0x458] sm:$0xff]
      %v580 = vld [vmem:[%s4 + $0x460] sm:$0xff]
      %v581 = vld [vmem:[%s4 + $0x468] sm:$0xff]
      %v582 = vld [vmem:[%s4 + $0x470] sm:$0xff]
      %v583 = vld [vmem:[%s4 + $0x478] sm:$0xff]
      %v584 = vld [vmem:[%s4 + $0x480] sm:$0xff]
      %v585 = vld [vmem:[%s4 + $0x488] sm:$0xff]
      %v586 = vld [vmem:[%s4 + $0x490] sm:$0xff]
      %v587 = vld [vmem:[%s4 + $0x498] sm:$0xff]
      %v588 = vld [vmem:[%s4 + $0x4a0] sm:$0xff]
      %v589 = vld [vmem:[%s4 + $0x4a8] sm:$0xff]
      %v590 = vld [vmem:[%s4 + $0x4b0] sm:$0xff]
      %v591 = vld [vmem:[%s4 + $0x4b8] sm:$0xff]
      %v592 = vld [vmem:[%s4 + $0x4c0] sm:$0xff]
      %v593 = vld [vmem:[%s4 + $0x4c8] sm:$0xff]
      %v594 = vld [vmem:[%s4 + $0x4d0] sm:$0xff]
      %v595 = vld [vmem:[%s4 + $0x4d8] sm:$0xff]
      %v596 = vld [vmem:[%s4 + $0x4e0] sm:$0xff]
      %v597 = vld [vmem:[%s4 + $0x4e8] sm:$0xff]
      %v598 = vld [vmem:[%s4 + $0x4f0] sm:$0xff]
      %v599 = vld [vmem:[%s4 + $0x4f8] sm:$0xff]
      %v600 = vld [vmem:[%s4 + $0x500] sm:$0xff]
      %v601 = vld [vmem:[%s4 + $0x508] sm:$0xff]
      %v602 = vld [vmem:[%s4 + $0x510] sm:$0xff]
      %v603 = vld [vmem:[%s4 + $0x518] sm:$0xff]
      %v604 = vld [vmem:[%s4 + $0x520] sm:$0xff]
      %v605 = vld [vmem:[%s4 + $0x528] sm:$0xff]
      %v606 = vld [vmem:[%s4 + $0x530] sm:$0xff]
      %v607 = vld [vmem:[%s4 + $0x538] sm:$0xff]
      %v608 = vld [vmem:[%s4 + $0x540] sm:$0xff]
      %v609 = vld [vmem:[%s4 + $0x548] sm:$0xff]
      %v610 = vld [vmem:[%s4 + $0x550] sm:$0xff]
      %v611 = vld [vmem:[%s4 + $0x558] sm:$0xff]
      %v612 = vld [vmem:[%s4 + $0x560] sm:$0xff]
      %v613 = vld [vmem:[%s4 + $0x568] sm:$0xff]
      %v614 = vld [vmem:[%s4 + $0x570] sm:$0xff]
      %v615 = vld [vmem:[%s4 + $0x578] sm:$0xff]
      %v616 = vld [vmem:[%s4 + $0x580] sm:$0xff]
      %v617 = vld [vmem:[%s4 + $0x588] sm:$0xff]
      %v618 = vld [vmem:[%s4 + $0x590] sm:$0xff]
      %v619 = vld [vmem:[%s4 + $0x598] sm:$0xff]
      %v620 = vld [vmem:[%s4 + $0x5a0] sm:$0xff]
      %v621 = vld [vmem:[%s4 + $0x5a8] sm:$0xff]
      %v622 = vld [vmem:[%s4 + $0x5b0] sm:$0xff]
      %v623 = vld [vmem:[%s4 + $0x5b8] sm:$0xff]
      %v624 = vld [vmem:[%s4 + $0x5c0] sm:$0xff]
      %v625 = vld [vmem:[%s4 + $0x5c8] sm:$0xff]
      %v626 = vld [vmem:[%s4 + $0x5d0] sm:$0xff]
      %v627 = vld [vmem:[%s4 + $0x5d8] sm:$0xff]
      %v628 = vld [vmem:[%s4 + $0x5e0] sm:$0xff]
      %v629 = vld [vmem:[%s4 + $0x5e8] sm:$0xff]
      %v630 = vld [vmem:[%s4 + $0x5f0] sm:$0xff]
      %v631 = vld [vmem:[%s4 + $0x5f8] sm:$0xff]
      %v632 = vld [vmem:[%s4 + $0x600] sm:$0xff]
      %v633 = vld [vmem:[%s4 + $0x608] sm:$0xff]
      %v634 = vld [vmem:[%s4 + $0x610] sm:$0xff]
      %v635 = vld [vmem:[%s4 + $0x618] sm:$0xff]
      %v636 = vld [vmem:[%s4 + $0x620] sm:$0xff]
      %v637 = vld [vmem:[%s4 + $0x628] sm:$0xff]
      %v638 = vld [vmem:[%s4 + $0x630] sm:$0xff]
      %v639 = vld [vmem:[%s4 + $0x638] sm:$0xff]
      %v640 = vld [vmem:[%s4 + $0x640] sm:$0xff]
      %v641 = vld [vmem:[%s4 + $0x648] sm:$0xff]
      %v642 = vld [vmem:[%s4 + $0x650] sm:$0xff]
      %v643 = vld [vmem:[%s4 + $0x658] sm:$0xff]
      %v644 = vld [vmem:[%s4 + $0x660] sm:$0xff]
      %v645 = vld [vmem:[%s4 + $0x668] sm:$0xff]
      %v646 = vld [vmem:[%s4 + $0x670] sm:$0xff]
      %v647 = vld [vmem:[%s4 + $0x678] sm:$0xff]
      %v648 = vld [vmem:[%s4 + $0x680] sm:$0xff]
      %v649 = vld [vmem:[%s4 + $0x688] sm:$0xff]
      %v650 = vld [vmem:[%s4 + $0x690] sm:$0xff]
      %v651 = vld [vmem:[%s4 + $0x698] sm:$0xff]
      %v652 = vld [vmem:[%s4 + $0x6a0] sm:$0xff]
      %v653 = vld [vmem:[%s4 + $0x6a8] sm:$0xff]
      %v654 = vld [vmem:[%s4 + $0x6b0] sm:$0xff]
      %v655 = vld [vmem:[%s4 + $0x6b8] sm:$0xff]
      %v656 = vld [vmem:[%s4 + $0x6c0] sm:$0xff]
      %v657 = vld [vmem:[%s4 + $0x6c8] sm:$0xff]
      %v658 = vld [vmem:[%s4 + $0x6d0] sm:$0xff]
      %v659 = vld [vmem:[%s4 + $0x6d8] sm:$0xff]
      %v660 = vld [vmem:[%s4 + $0x6e0] sm:$0xff]
      %v661 = vld [vmem:[%s4 + $0x6e8] sm:$0xff]
      %v662 = vld [vmem:[%s4 + $0x6f0] sm:$0xff]
      %v663 = vld [vmem:[%s4 + $0x6f8] sm:$0xff]
      %v664 = vld [vmem:[%s4 + $0x700] sm:$0xff]
      %v665 = vld [vmem:[%s4 + $0x708] sm:$0xff]
      %v666 = vld [vmem:[%s4 + $0x710] sm:$0xff]
      %v667 = vld [vmem:[%s4 + $0x718] sm:$0xff]
      %v668 = vld [vmem:[%s4 + $0x720] sm:$0xff]
      %v669 = vld [vmem:[%s4 + $0x728] sm:$0xff]
      %v670 = vld [vmem:[%s4 + $0x730] sm:$0xff]
      %v671 = vld [vmem:[%s4 + $0x738] sm:$0xff]
      %v672 = vld [vmem:[%s4 + $0x740] sm:$0xff]
      %v673 = vld [vmem:[%s4 + $0x748] sm:$0xff]
      %v674 = vld [vmem:[%s4 + $0x750] sm:$0xff]
      %v675 = vld [vmem:[%s4 + $0x758] sm:$0xff]
      %v676 = vld [vmem:[%s4 + $0x760] sm:$0xff]
      %v677 = vld [vmem:[%s4 + $0x768] sm:$0xff]
      %v678 = vld [vmem:[%s4 + $0x770] sm:$0xff]
      %v679 = vld [vmem:[%s4 + $0x778] sm:$0xff]
      %v680 = vld [vmem:[%s4 + $0x780] sm:$0xff]
      %v681 = vld [vmem:[%s4 + $0x788] sm:$0xff]
      %v682 = vld [vmem:[%s4 + $0x790] sm:$0xff]
      %v683 = vld [vmem:[%s4 + $0x798] sm:$0xff]
      %v684 = vld [vmem:[%s4 + $0x7a0] sm:$0xff]
      %v685 = vld [vmem:[%s4 + $0x7a8] sm:$0xff]
      %v686 = vld [vmem:[%s4 + $0x7b0] sm:$0xff]
      %v687 = vld [vmem:[%s4 + $0x7b8] sm:$0xff]
      %v688 = vld [vmem:[%s4 + $0x7c0] sm:$0xff]
      %v689 = vld [vmem:[%s4 + $0x7c8] sm:$0xff]
      %v690 = vld [vmem:[%s4 + $0x7d0] sm:$0xff]
      %v691 = vld [vmem:[%s4 + $0x7d8] sm:$0xff]
      %v692 = vld [vmem:[%s4 + $0x7e0] sm:$0xff]
      %v693 = vld [vmem:[%s4 + $0x7e8] sm:$0xff]
      %v694 = vld [vmem:[%s4 + $0x7f0] sm:$0xff]
      %v695 = vld [vmem:[%s4 + $0x7f8] sm:$0xff]
      %v696 = vld [vmem:[%s4 + $0x800] sm:$0xff]
      %v697 = vld [vmem:[%s4 + $0x808] sm:$0xff]
      %v698 = vld [vmem:[%s4 + $0x810] sm:$0xff]
      %v699 = vld [vmem:[%s4 + $0x818] sm:$0xff]
      %v700 = vld [vmem:[%s4 + $0x820] sm:$0xff]
      %v701 = vld [vmem:[%s4 + $0x828] sm:$0xff]
      %v702 = vld [vmem:[%s4 + $0x830] sm:$0xff]
      %v703 = vld [vmem:[%s4 + $0x838] sm:$0xff]
      %v704 = vld [vmem:[%s4 + $0x840] sm:$0xff]
      %v705 = vld [vmem:[%s4 + $0x848] sm:$0xff]
      %v706 = vld [vmem:[%s4 + $0x850] sm:$0xff]
      %v707 = vld [vmem:[%s4 + $0x858] sm:$0xff]
      %v708 = vld [vmem:[%s4 + $0x860] sm:$0xff]
      %v709 = vld [vmem:[%s4 + $0x868] sm:$0xff]
      %v710 = vld [vmem:[%s4 + $0x870] sm:$0xff]
      %v711 = vld [vmem:[%s4 + $0x878] sm:$0xff]
      %v712 = vld [vmem:[%s4 + $0x880] sm:$0xff]
      %v713 = vld [vmem:[%s4 + $0x888] sm:$0xff]
      %v714 = vld [vmem:[%s4 + $0x890] sm:$0xff]
      %v715 = vld [vmem:[%s4 + $0x898] sm:$0xff]
      %v716 = vld [vmem:[%s4 + $0x8a0] sm:$0xff]
      %v717 = vld [vmem:[%s4 + $0x8a8] sm:$0xff]
      %v718 = vld [vmem:[%s4 + $0x8b0] sm:$0xff]
      %v719 = vld [vmem:[%s4 + $0x8b8] sm:$0xff]
      %v720 = vld [vmem:[%s4 + $0x8c0] sm:$0xff]
      %v721 = vld [vmem:[%s4 + $0x8c8] sm:$0xff]
      %v722 = vld [vmem:[%s4 + $0x8d0] sm:$0xff]
      %v723 = vld [vmem:[%s4 + $0x8d8] sm:$0xff]
      %v724 = vld [vmem:[%s4 + $0x8e0] sm:$0xff]
      %v725 = vld [vmem:[%s4 + $0x8e8] sm:$0xff]
      %v726 = vld [vmem:[%s4 + $0x8f0] sm:$0xff]
      %v727 = vld [vmem:[%s4 + $0x8f8] sm:$0xff]
      %v728 = vld [vmem:[%s4 + $0x900] sm:$0xff]
      %v729 = vld [vmem:[%s4 + $0x908] sm:$0xff]
      %v730 = vld [vmem:[%s4 + $0x910] sm:$0xff]
      %v731 = vld [vmem:[%s4 + $0x918] sm:$0xff]
      %v732 = vld [vmem:[%s4 + $0x920] sm:$0xff]
      %v733 = vld [vmem:[%s4 + $0x928] sm:$0xff]
      %v734 = vld [vmem:[%s4 + $0x930] sm:$0xff]
      %v735 = vld [vmem:[%s4 + $0x938] sm:$0xff]
      %v736 = vld [vmem:[%s4 + $0x940] sm:$0xff]
      %v737 = vld [vmem:[%s4 + $0x948] sm:$0xff]
      %v738 = vld [vmem:[%s4 + $0x950] sm:$0xff]
      %v739 = vld [vmem:[%s4 + $0x958] sm:$0xff]
      %v740 = vld [vmem:[%s4 + $0x960] sm:$0xff]
      %v741 = vld [vmem:[%s4 + $0x968] sm:$0xff]
      %v742 = vld [vmem:[%s4 + $0x970] sm:$0xff]
      %v743 = vld [vmem:[%s4 + $0x978] sm:$0xff]
      %v744 = vld [vmem:[%s4 + $0x980] sm:$0xff]
      %v745 = vld [vmem:[%s4 + $0x988] sm:$0xff]
      %v746 = vld [vmem:[%s4 + $0x990] sm:$0xff]
      %v747 = vld [vmem:[%s4 + $0x998] sm:$0xff]
      %v748 = vld [vmem:[%s4 + $0x9a0] sm:$0xff]
      %v749 = vld [vmem:[%s4 + $0x9a8] sm:$0xff]
      %v750 = vld [vmem:[%s4 + $0x9b0] sm:$0xff]
      %v751 = vld [vmem:[%s4 + $0x9b8] sm:$0xff]
      %v752 = vld [vmem:[%s4 + $0x9c0] sm:$0xff]
      %v753 = vld [vmem:[%s4 + $0x9c8] sm:$0xff]
      %v754 = vld [vmem:[%s4 + $0x9d0] sm:$0xff]
      %v755 = vld [vmem:[%s4 + $0x9d8] sm:$0xff]
      %v756 = vld [vmem:[%s4 + $0x9e0] sm:$0xff]
      %v757 = vld [vmem:[%s4 + $0x9e8] sm:$0xff]
      %v758 = vld [vmem:[%s4 + $0x9f0] sm:$0xff]
      %v759 = vld [vmem:[%s4 + $0x9f8] sm:$0xff]
      %v760 = vld [vmem:[%s4 + $0xa00] sm:$0xff]
      %v761 = vld [vmem:[%s4 + $0xa08] sm:$0xff]
      %v762 = vld [vmem:[%s4 + $0xa10] sm:$0xff]
      %v763 = vld [vmem:[%s4 + $0xa18] sm:$0xff]
      %v764 = vld [vmem:[%s4 + $0xa20] sm:$0xff]
      %v765 = vld [vmem:[%s4 + $0xa28] sm:$0xff]
      %v766 = vld [vmem:[%s4 + $0xa30] sm:$0xff]
      %v767 = vld [vmem:[%s4 + $0xa38] sm:$0xff]
      %v768 = vld [vmem:[%s4 + $0xa40] sm:$0xff]
      %v769 = vld [vmem:[%s4 + $0xa48] sm:$0xff]
      %v770 = vld [vmem:[%s4 + $0xa50] sm:$0xff]
      %v771 = vld [vmem:[%s4 + $0xa58] sm:$0xff]
      %v772 = vld [vmem:[%s4 + $0xa60] sm:$0xff]
      %v773 = vld [vmem:[%s4 + $0xa68] sm:$0xff]
      %v774 = vld [vmem:[%s4 + $0xa70] sm:$0xff]
      %v775 = vld [vmem:[%s4 + $0xa78] sm:$0xff]
      %v776 = vld [vmem:[%s4 + $0xa80] sm:$0xff]
      %v777 = vld [vmem:[%s4 + $0xa88] sm:$0xff]
      %v778 = vld [vmem:[%s4 + $0xa90] sm:$0xff]
      %v779 = vld [vmem:[%s4 + $0xa98] sm:$0xff]
      %v780 = vld [vmem:[%s4 + $0xaa0] sm:$0xff]
      %v781 = vld [vmem:[%s4 + $0xaa8] sm:$0xff]
      %v782 = vld [vmem:[%s4 + $0xab0] sm:$0xff]
      %v783 = vld [vmem:[%s4 + $0xab8] sm:$0xff]
      %v784 = vld [vmem:[%s4 + $0xac0] sm:$0xff]
      %v785 = vld [vmem:[%s4 + $0xac8] sm:$0xff]
      %v786 = vld [vmem:[%s4 + $0xad0] sm:$0xff]
      %v787 = vld [vmem:[%s4 + $0xad8] sm:$0xff]
      %v788 = vld [vmem:[%s4 + $0xae0] sm:$0xff]
      %v789 = vld [vmem:[%s4 + $0xae8] sm:$0xff]
      %v790 = vld [vmem:[%s4 + $0xaf0] sm:$0xff]
      %v791 = vld [vmem:[%s4 + $0xaf8] sm:$0xff]
      %v792 = vld [vmem:[%s4 + $0xb00] sm:$0xff]
      %v793 = vld [vmem:[%s4 + $0xb08] sm:$0xff]
      %v794 = vld [vmem:[%s4 + $0xb10] sm:$0xff]
      %v795 = vld [vmem:[%s4 + $0xb18] sm:$0xff]
      %v796 = vld [vmem:[%s4 + $0xb20] sm:$0xff]
      %v797 = vld [vmem:[%s4 + $0xb28] sm:$0xff]
      %v798 = vld [vmem:[%s4 + $0xb30] sm:$0xff]
      %v799 = vld [vmem:[%s4 + $0xb38] sm:$0xff]
      %v800 = vld [vmem:[%s4 + $0xb40] sm:$0xff]
      %v801 = vld [vmem:[%s4 + $0xb48] sm:$0xff]
      %v802 = vld [vmem:[%s4 + $0xb50] sm:$0xff]
      %v803 = vld [vmem:[%s4 + $0xb58] sm:$0xff]
      %v804 = vld [vmem:[%s4 + $0xb60] sm:$0xff]
      %v805 = vld [vmem:[%s4 + $0xb68] sm:$0xff]
      %v806 = vld [vmem:[%s4 + $0xb70] sm:$0xff]
      %v807 = vld [vmem:[%s4 + $0xb78] sm:$0xff]
      %v808 = vld [vmem:[%s4 + $0xb80] sm:$0xff]
      %v809 = vld [vmem:[%s4 + $0xb88] sm:$0xff]
      %v810 = vld [vmem:[%s4 + $0xb90] sm:$0xff]
      %v811 = vld [vmem:[%s4 + $0xb98] sm:$0xff]
      %v812 = vld [vmem:[%s4 + $0xba0] sm:$0xff]
      %v813 = vld [vmem:[%s4 + $0xba8] sm:$0xff]
      %v814 = vld [vmem:[%s4 + $0xbb0] sm:$0xff]
      %v815 = vld [vmem:[%s4 + $0xbb8] sm:$0xff]
      %v816 = vld [vmem:[%s4 + $0xbc0] sm:$0xff]
      %v817 = vld [vmem:[%s4 + $0xbc8] sm:$0xff]
      %v818 = vld [vmem:[%s4 + $0xbd0] sm:$0xff]
      %v819 = vld [vmem:[%s4 + $0xbd8] sm:$0xff]
      %v820 = vld [vmem:[%s4 + $0xbe0] sm:$0xff]
      %v821 = vld [vmem:[%s4 + $0xbe8] sm:$0xff]
      %v822 = vld [vmem:[%s4 + $0xbf0] sm:$0xff]
      %v823 = vld [vmem:[%s4 + $0xbf8] sm:$0xff]
      %v824 = vld [vmem:[%s5] sm:$0x3]
      %v826 = vlaneseq
      %v827 = vshrl.u32 %v826, 7
      %v828 = vsub.s32 0, %v827
      %v829 = vrot.slane %v824, %v828
      %v830 = vlaneseq
      %v831 = vshrl.u32 %v830, 7
      %v832 = vsub.s32 1, %v831
      %v833 = vrot.slane %v824, %v832
      %v842 = vcombine.high %v434, %v434
      %v844 = vunpack.c.l.s4 1983009808
      %v845 = vunpack.c.0.s8 %v844
      %v846 = vlaneseq
      %v847 = vshrl.u32 %v846, 7
      %v848 = vsub.s32 %v845, %v847
      %v849 = vrot.slane %v434, %v848
      %v851 = vunpack.c.l.s4 1983009808
      %v852 = vunpack.c.0.s8 %v851
      %v853 = vlaneseq
      %v854 = vshrl.u32 %v853, 7
      %v855 = vsub.s32 %v852, %v854
      %v856 = vrot.slane %v842, %v855
      %v857 = vcombine.high %v849, %v849
      %v858 = vcombine.high %v856, %v856
      %v859 = vcombine.high %v435, %v435
      %v861 = vunpack.c.l.s4 1983009808
      %v862 = vunpack.c.0.s8 %v861
      %v863 = vlaneseq
      %v864 = vshrl.u32 %v863, 7
      %v865 = vsub.s32 %v862, %v864
      %v866 = vrot.slane %v435, %v865
      %v868 = vunpack.c.l.s4 1983009808
      %v869 = vunpack.c.0.s8 %v868
      %v870 = vlaneseq
      %v871 = vshrl.u32 %v870, 7
      %v872 = vsub.s32 %v869, %v871
      %v873 = vrot.slane %v859, %v872
      %v874 = vcombine.high %v866, %v866
      %v875 = vcombine.high %v873, %v873
      %v876 = vcombine.high %v436, %v436
      %v878 = vunpack.c.l.s4 1983009808
      %v879 = vunpack.c.0.s8 %v878
      %v880 = vlaneseq
      %v881 = vshrl.u32 %v880, 7
      %v882 = vsub.s32 %v879, %v881
      %v883 = vrot.slane %v436, %v882
      %v885 = vunpack.c.l.s4 1983009808
      %v886 = vunpack.c.0.s8 %v885
      %v887 = vlaneseq
      %v888 = vshrl.u32 %v887, 7
      %v889 = vsub.s32 %v886, %v888
      %v890 = vrot.slane %v876, %v889
      %v891 = vcombine.high %v883, %v883
      %v892 = vcombine.high %v890, %v890
      %v893 = vcombine.high %v437, %v437
      %v895 = vunpack.c.l.s4 1983009808
      %v896 = vunpack.c.0.s8 %v895
      %v897 = vlaneseq
      %v898 = vshrl.u32 %v897, 7
      %v899 = vsub.s32 %v896, %v898
      %v900 = vrot.slane %v437, %v899
      %v902 = vunpack.c.l.s4 1983009808
      %v903 = vunpack.c.0.s8 %v902
      %v904 = vlaneseq
      %v905 = vshrl.u32 %v904, 7
      %v906 = vsub.s32 %v903, %v905
      %v907 = vrot.slane %v893, %v906
      %v908 = vcombine.high %v900, %v900
      %v909 = vcombine.high %v907, %v907
      %v910 = vcombine.high %v438, %v438
      %v912 = vunpack.c.l.s4 1983009808
      %v913 = vunpack.c.0.s8 %v912
      %v914 = vlaneseq
      %v915 = vshrl.u32 %v914, 7
      %v916 = vsub.s32 %v913, %v915
      %v917 = vrot.slane %v438, %v916
      %v919 = vunpack.c.l.s4 1983009808
      %v920 = vunpack.c.0.s8 %v919
      %v921 = vlaneseq
      %v922 = vshrl.u32 %v921, 7
      %v923 = vsub.s32 %v920, %v922
      %v924 = vrot.slane %v910, %v923
      %v925 = vcombine.high %v917, %v917
      %v926 = vcombine.high %v924, %v924
      %v927 = vcombine.high %v439, %v439
      %v929 = vunpack.c.l.s4 1983009808
      %v930 = vunpack.c.0.s8 %v929
      %v931 = vlaneseq
      %v932 = vshrl.u32 %v931, 7
      %v933 = vsub.s32 %v930, %v932
      %v934 = vrot.slane %v439, %v933
      %v936 = vunpack.c.l.s4 1983009808
      %v937 = vunpack.c.0.s8 %v936
      %v938 = vlaneseq
      %v939 = vshrl.u32 %v938, 7
      %v940 = vsub.s32 %v937, %v939
      %v941 = vrot.slane %v927, %v940
      %v942 = vcombine.high %v934, %v934
      %v943 = vcombine.high %v941, %v941
      %v1352 = vunpack.c.l.b16 %v440
      %v1353 = vunpack.c.h.b16 %v440
      %v1354 = vunpack.c.l.b16 %v441
      %v1355 = vunpack.c.h.b16 %v441
      %v1356 = vunpack.c.l.b16 %v442
      %v1357 = vunpack.c.h.b16 %v442
      %v1358 = vunpack.c.l.b16 %v443
      %v1359 = vunpack.c.h.b16 %v443
      %v1360 = vunpack.c.l.b16 %v444
      %v1361 = vunpack.c.h.b16 %v444
      %v1362 = vunpack.c.l.b16 %v445
      %v1363 = vunpack.c.h.b16 %v445
      %v1364 = vunpack.c.l.b16 %v446
      %v1365 = vunpack.c.h.b16 %v446
      %v1366 = vunpack.c.l.b16 %v447
      %v1367 = vunpack.c.h.b16 %v447
      %v1368 = vunpack.c.l.b16 %v448
      %v1369 = vunpack.c.h.b16 %v448
      %v1370 = vunpack.c.l.b16 %v449
      %v1371 = vunpack.c.h.b16 %v449
      %v1372 = vunpack.c.l.b16 %v450
      %v1373 = vunpack.c.h.b16 %v450
      %v1374 = vunpack.c.l.b16 %v451
      %v1375 = vunpack.c.h.b16 %v451
      %v1376 = vunpack.c.l.b16 %v452
      %v1377 = vunpack.c.h.b16 %v452
      %v1378 = vunpack.c.l.b16 %v453
      %v1379 = vunpack.c.h.b16 %v453
      %v1380 = vunpack.c.l.b16 %v454
      %v1381 = vunpack.c.h.b16 %v454
      %v1382 = vunpack.c.l.b16 %v455
      %v1383 = vunpack.c.h.b16 %v455
      %v1384 = vunpack.c.l.b16 %v456
      %v1385 = vunpack.c.h.b16 %v456
      %v1386 = vunpack.c.l.b16 %v457
      %v1387 = vunpack.c.h.b16 %v457
      %v1388 = vunpack.c.l.b16 %v458
      %v1389 = vunpack.c.h.b16 %v458
      %v1390 = vunpack.c.l.b16 %v459
      %v1391 = vunpack.c.h.b16 %v459
      %v1392 = vunpack.c.l.b16 %v460
      %v1393 = vunpack.c.h.b16 %v460
      %v1394 = vunpack.c.l.b16 %v461
      %v1395 = vunpack.c.h.b16 %v461
      %v1396 = vunpack.c.l.b16 %v462
      %v1397 = vunpack.c.h.b16 %v462
      %v1398 = vunpack.c.l.b16 %v463
      %v1399 = vunpack.c.h.b16 %v463
      %v1400 = vunpack.c.l.b16 %v464
      %v1401 = vunpack.c.h.b16 %v464
      %v1402 = vunpack.c.l.b16 %v465
      %v1403 = vunpack.c.h.b16 %v465
      %v1404 = vunpack.c.l.b16 %v466
      %v1405 = vunpack.c.h.b16 %v466
      %v1406 = vunpack.c.l.b16 %v467
      %v1407 = vunpack.c.h.b16 %v467
      %v1408 = vunpack.c.l.b16 %v468
      %v1409 = vunpack.c.h.b16 %v468
      %v1410 = vunpack.c.l.b16 %v469
      %v1411 = vunpack.c.h.b16 %v469
      %v1412 = vunpack.c.l.b16 %v470
      %v1413 = vunpack.c.h.b16 %v470
      %v1414 = vunpack.c.l.b16 %v471
      %v1415 = vunpack.c.h.b16 %v471
      %v1416 = vunpack.c.l.b16 %v472
      %v1417 = vunpack.c.h.b16 %v472
      %v1418 = vunpack.c.l.b16 %v473
      %v1419 = vunpack.c.h.b16 %v473
      %v1420 = vunpack.c.l.b16 %v474
      %v1421 = vunpack.c.h.b16 %v474
      %v1422 = vunpack.c.l.b16 %v475
      %v1423 = vunpack.c.h.b16 %v475
      %v1424 = vunpack.c.l.b16 %v476
      %v1425 = vunpack.c.h.b16 %v476
      %v1426 = vunpack.c.l.b16 %v477
      %v1427 = vunpack.c.h.b16 %v477
      %v1428 = vunpack.c.l.b16 %v478
      %v1429 = vunpack.c.h.b16 %v478
      %v1430 = vunpack.c.l.b16 %v479
      %v1431 = vunpack.c.h.b16 %v479
      %v1432 = vunpack.c.l.b16 %v480
      %v1433 = vunpack.c.h.b16 %v480
      %v1434 = vunpack.c.l.b16 %v481
      %v1435 = vunpack.c.h.b16 %v481
      %v1436 = vunpack.c.l.b16 %v482
      %v1437 = vunpack.c.h.b16 %v482
      %v1438 = vunpack.c.l.b16 %v483
      %v1439 = vunpack.c.h.b16 %v483
      %v1440 = vunpack.c.l.b16 %v484
      %v1441 = vunpack.c.h.b16 %v484
      %v1442 = vunpack.c.l.b16 %v485
      %v1443 = vunpack.c.h.b16 %v485
      %v1444 = vunpack.c.l.b16 %v486
      %v1445 = vunpack.c.h.b16 %v486
      %v1446 = vunpack.c.l.b16 %v487
      %v1447 = vunpack.c.h.b16 %v487
      %v1448 = vunpack.c.l.b16 %v488
      %v1449 = vunpack.c.h.b16 %v488
      %v1450 = vunpack.c.l.b16 %v489
      %v1451 = vunpack.c.h.b16 %v489
      %v1452 = vunpack.c.l.b16 %v490
      %v1453 = vunpack.c.h.b16 %v490
      %v1454 = vunpack.c.l.b16 %v491
      %v1455 = vunpack.c.h.b16 %v491
      %v1456 = vunpack.c.l.b16 %v492
      %v1457 = vunpack.c.h.b16 %v492
      %v1458 = vunpack.c.l.b16 %v493
      %v1459 = vunpack.c.h.b16 %v493
      %v1460 = vunpack.c.l.b16 %v494
      %v1461 = vunpack.c.h.b16 %v494
      %v1462 = vunpack.c.l.b16 %v495
      %v1463 = vunpack.c.h.b16 %v495
      %v1464 = vunpack.c.l.b16 %v496
      %v1465 = vunpack.c.h.b16 %v496
      %v1466 = vunpack.c.l.b16 %v497
      %v1467 = vunpack.c.h.b16 %v497
      %v1468 = vunpack.c.l.b16 %v498
      %v1469 = vunpack.c.h.b16 %v498
      %v1470 = vunpack.c.l.b16 %v499
      %v1471 = vunpack.c.h.b16 %v499
      %v1472 = vunpack.c.l.b16 %v500
      %v1473 = vunpack.c.h.b16 %v500
      %v1474 = vunpack.c.l.b16 %v501
      %v1475 = vunpack.c.h.b16 %v501
      %v1476 = vunpack.c.l.b16 %v502
      %v1477 = vunpack.c.h.b16 %v502
      %v1478 = vunpack.c.l.b16 %v503
      %v1479 = vunpack.c.h.b16 %v503
      %v1480 = vunpack.c.l.b16 %v504
      %v1481 = vunpack.c.h.b16 %v504
      %v1482 = vunpack.c.l.b16 %v505
      %v1483 = vunpack.c.h.b16 %v505
      %v1484 = vunpack.c.l.b16 %v506
      %v1485 = vunpack.c.h.b16 %v506
      %v1486 = vunpack.c.l.b16 %v507
      %v1487 = vunpack.c.h.b16 %v507
      %v1488 = vunpack.c.l.b16 %v508
      %v1489 = vunpack.c.h.b16 %v508
      %v1490 = vunpack.c.l.b16 %v509
      %v1491 = vunpack.c.h.b16 %v509
      %v1492 = vunpack.c.l.b16 %v510
      %v1493 = vunpack.c.h.b16 %v510
      %v1494 = vunpack.c.l.b16 %v511
      %v1495 = vunpack.c.h.b16 %v511
      %v1496 = vunpack.c.l.b16 %v512
      %v1497 = vunpack.c.h.b16 %v512
      %v1498 = vunpack.c.l.b16 %v513
      %v1499 = vunpack.c.h.b16 %v513
      %v1500 = vunpack.c.l.b16 %v514
      %v1501 = vunpack.c.h.b16 %v514
      %v1502 = vunpack.c.l.b16 %v515
      %v1503 = vunpack.c.h.b16 %v515
      %v1504 = vunpack.c.l.b16 %v516
      %v1505 = vunpack.c.h.b16 %v516
      %v1506 = vunpack.c.l.b16 %v517
      %v1507 = vunpack.c.h.b16 %v517
      %v1508 = vunpack.c.l.b16 %v518
      %v1509 = vunpack.c.h.b16 %v518
      %v1510 = vunpack.c.l.b16 %v519
      %v1511 = vunpack.c.h.b16 %v519
      %v1512 = vunpack.c.l.b16 %v520
      %v1513 = vunpack.c.h.b16 %v520
      %v1514 = vunpack.c.l.b16 %v521
      %v1515 = vunpack.c.h.b16 %v521
      %v1516 = vunpack.c.l.b16 %v522
      %v1517 = vunpack.c.h.b16 %v522
      %v1518 = vunpack.c.l.b16 %v523
      %v1519 = vunpack.c.h.b16 %v523
      %v1520 = vunpack.c.l.b16 %v524
      %v1521 = vunpack.c.h.b16 %v524
      %v1522 = vunpack.c.l.b16 %v525
      %v1523 = vunpack.c.h.b16 %v525
      %v1524 = vunpack.c.l.b16 %v526
      %v1525 = vunpack.c.h.b16 %v526
      %v1526 = vunpack.c.l.b16 %v527
      %v1527 = vunpack.c.h.b16 %v527
      %v1528 = vunpack.c.l.b16 %v528
      %v1529 = vunpack.c.h.b16 %v528
      %v1530 = vunpack.c.l.b16 %v529
      %v1531 = vunpack.c.h.b16 %v529
      %v1532 = vunpack.c.l.b16 %v530
      %v1533 = vunpack.c.h.b16 %v530
      %v1534 = vunpack.c.l.b16 %v531
      %v1535 = vunpack.c.h.b16 %v531
      %v1536 = vunpack.c.l.b16 %v532
      %v1537 = vunpack.c.h.b16 %v532
      %v1538 = vunpack.c.l.b16 %v533
      %v1539 = vunpack.c.h.b16 %v533
      %v1540 = vunpack.c.l.b16 %v534
      %v1541 = vunpack.c.h.b16 %v534
      %v1542 = vunpack.c.l.b16 %v535
      %v1543 = vunpack.c.h.b16 %v535
      %v1544 = vunpack.c.l.b16 %v536
      %v1545 = vunpack.c.h.b16 %v536
      %v1546 = vunpack.c.l.b16 %v537
      %v1547 = vunpack.c.h.b16 %v537
      %v1548 = vunpack.c.l.b16 %v538
      %v1549 = vunpack.c.h.b16 %v538
      %v1550 = vunpack.c.l.b16 %v539
      %v1551 = vunpack.c.h.b16 %v539
      %v1552 = vunpack.c.l.b16 %v540
      %v1553 = vunpack.c.h.b16 %v540
      %v1554 = vunpack.c.l.b16 %v541
      %v1555 = vunpack.c.h.b16 %v541
      %v1556 = vunpack.c.l.b16 %v542
      %v1557 = vunpack.c.h.b16 %v542
      %v1558 = vunpack.c.l.b16 %v543
      %v1559 = vunpack.c.h.b16 %v543
      %v1560 = vunpack.c.l.b16 %v544
      %v1561 = vunpack.c.h.b16 %v544
      %v1562 = vunpack.c.l.b16 %v545
      %v1563 = vunpack.c.h.b16 %v545
      %v1564 = vunpack.c.l.b16 %v546
      %v1565 = vunpack.c.h.b16 %v546
      %v1566 = vunpack.c.l.b16 %v547
      %v1567 = vunpack.c.h.b16 %v547
      %v1568 = vunpack.c.l.b16 %v548
      %v1569 = vunpack.c.h.b16 %v548
      %v1570 = vunpack.c.l.b16 %v549
      %v1571 = vunpack.c.h.b16 %v549
      %v1572 = vunpack.c.l.b16 %v550
      %v1573 = vunpack.c.h.b16 %v550
      %v1574 = vunpack.c.l.b16 %v551
      %v1575 = vunpack.c.h.b16 %v551
      %v1576 = vunpack.c.l.b16 %v552
      %v1577 = vunpack.c.h.b16 %v552
      %v1578 = vunpack.c.l.b16 %v553
      %v1579 = vunpack.c.h.b16 %v553
      %v1580 = vunpack.c.l.b16 %v554
      %v1581 = vunpack.c.h.b16 %v554
      %v1582 = vunpack.c.l.b16 %v555
      %v1583 = vunpack.c.h.b16 %v555
      %v1584 = vunpack.c.l.b16 %v556
      %v1585 = vunpack.c.h.b16 %v556
      %v1586 = vunpack.c.l.b16 %v557
      %v1587 = vunpack.c.h.b16 %v557
      %v1588 = vunpack.c.l.b16 %v558
      %v1589 = vunpack.c.h.b16 %v558
      %v1590 = vunpack.c.l.b16 %v559
      %v1591 = vunpack.c.h.b16 %v559
      %v1592 = vunpack.c.l.b16 %v560
      %v1593 = vunpack.c.h.b16 %v560
      %v1594 = vunpack.c.l.b16 %v561
      %v1595 = vunpack.c.h.b16 %v561
      %v1596 = vunpack.c.l.b16 %v562
      %v1597 = vunpack.c.h.b16 %v562
      %v1598 = vunpack.c.l.b16 %v563
      %v1599 = vunpack.c.h.b16 %v563
      %v1600 = vunpack.c.l.b16 %v564
      %v1601 = vunpack.c.h.b16 %v564
      %v1602 = vunpack.c.l.b16 %v565
      %v1603 = vunpack.c.h.b16 %v565
      %v1604 = vunpack.c.l.b16 %v566
      %v1605 = vunpack.c.h.b16 %v566
      %v1606 = vunpack.c.l.b16 %v567
      %v1607 = vunpack.c.h.b16 %v567
      %v1608 = vunpack.c.l.b16 %v568
      %v1609 = vunpack.c.h.b16 %v568
      %v1610 = vunpack.c.l.b16 %v569
      %v1611 = vunpack.c.h.b16 %v569
      %v1612 = vunpack.c.l.b16 %v570
      %v1613 = vunpack.c.h.b16 %v570
      %v1614 = vunpack.c.l.b16 %v571
      %v1615 = vunpack.c.h.b16 %v571
      %v1616 = vunpack.c.l.b16 %v572
      %v1617 = vunpack.c.h.b16 %v572
      %v1618 = vunpack.c.l.b16 %v573
      %v1619 = vunpack.c.h.b16 %v573
      %v1620 = vunpack.c.l.b16 %v574
      %v1621 = vunpack.c.h.b16 %v574
      %v1622 = vunpack.c.l.b16 %v575
      %v1623 = vunpack.c.h.b16 %v575
      %v1624 = vunpack.c.l.b16 %v576
      %v1625 = vunpack.c.h.b16 %v576
      %v1626 = vunpack.c.l.b16 %v577
      %v1627 = vunpack.c.h.b16 %v577
      %v1628 = vunpack.c.l.b16 %v578
      %v1629 = vunpack.c.h.b16 %v578
      %v1630 = vunpack.c.l.b16 %v579
      %v1631 = vunpack.c.h.b16 %v579
      %v1632 = vunpack.c.l.b16 %v580
      %v1633 = vunpack.c.h.b16 %v580
      %v1634 = vunpack.c.l.b16 %v581
      %v1635 = vunpack.c.h.b16 %v581
      %v1636 = vunpack.c.l.b16 %v582
      %v1637 = vunpack.c.h.b16 %v582
      %v1638 = vunpack.c.l.b16 %v583
      %v1639 = vunpack.c.h.b16 %v583
      %v1640 = vunpack.c.l.b16 %v584
      %v1641 = vunpack.c.h.b16 %v584
      %v1642 = vunpack.c.l.b16 %v585
      %v1643 = vunpack.c.h.b16 %v585
      %v1644 = vunpack.c.l.b16 %v586
      %v1645 = vunpack.c.h.b16 %v586
      %v1646 = vunpack.c.l.b16 %v587
      %v1647 = vunpack.c.h.b16 %v587
      %v1648 = vunpack.c.l.b16 %v588
      %v1649 = vunpack.c.h.b16 %v588
      %v1650 = vunpack.c.l.b16 %v589
      %v1651 = vunpack.c.h.b16 %v589
      %v1652 = vunpack.c.l.b16 %v590
      %v1653 = vunpack.c.h.b16 %v590
      %v1654 = vunpack.c.l.b16 %v591
      %v1655 = vunpack.c.h.b16 %v591
      %v1656 = vunpack.c.l.b16 %v592
      %v1657 = vunpack.c.h.b16 %v592
      %v1658 = vunpack.c.l.b16 %v593
      %v1659 = vunpack.c.h.b16 %v593
      %v1660 = vunpack.c.l.b16 %v594
      %v1661 = vunpack.c.h.b16 %v594
      %v1662 = vunpack.c.l.b16 %v595
      %v1663 = vunpack.c.h.b16 %v595
      %v1664 = vunpack.c.l.b16 %v596
      %v1665 = vunpack.c.h.b16 %v596
      %v1666 = vunpack.c.l.b16 %v597
      %v1667 = vunpack.c.h.b16 %v597
      %v1668 = vunpack.c.l.b16 %v598
      %v1669 = vunpack.c.h.b16 %v598
      %v1670 = vunpack.c.l.b16 %v599
      %v1671 = vunpack.c.h.b16 %v599
      %v1672 = vunpack.c.l.b16 %v600
      %v1673 = vunpack.c.h.b16 %v600
      %v1674 = vunpack.c.l.b16 %v601
      %v1675 = vunpack.c.h.b16 %v601
      %v1676 = vunpack.c.l.b16 %v602
      %v1677 = vunpack.c.h.b16 %v602
      %v1678 = vunpack.c.l.b16 %v603
      %v1679 = vunpack.c.h.b16 %v603
      %v1680 = vunpack.c.l.b16 %v604
      %v1681 = vunpack.c.h.b16 %v604
      %v1682 = vunpack.c.l.b16 %v605
      %v1683 = vunpack.c.h.b16 %v605
      %v1684 = vunpack.c.l.b16 %v606
      %v1685 = vunpack.c.h.b16 %v606
      %v1686 = vunpack.c.l.b16 %v607
      %v1687 = vunpack.c.h.b16 %v607
      %v1688 = vunpack.c.l.b16 %v608
      %v1689 = vunpack.c.h.b16 %v608
      %v1690 = vunpack.c.l.b16 %v609
      %v1691 = vunpack.c.h.b16 %v609
      %v1692 = vunpack.c.l.b16 %v610
      %v1693 = vunpack.c.h.b16 %v610
      %v1694 = vunpack.c.l.b16 %v611
      %v1695 = vunpack.c.h.b16 %v611
      %v1696 = vunpack.c.l.b16 %v612
      %v1697 = vunpack.c.h.b16 %v612
      %v1698 = vunpack.c.l.b16 %v613
      %v1699 = vunpack.c.h.b16 %v613
      %v1700 = vunpack.c.l.b16 %v614
      %v1701 = vunpack.c.h.b16 %v614
      %v1702 = vunpack.c.l.b16 %v615
      %v1703 = vunpack.c.h.b16 %v615
      %v1704 = vunpack.c.l.b16 %v616
      %v1705 = vunpack.c.h.b16 %v616
      %v1706 = vunpack.c.l.b16 %v617
      %v1707 = vunpack.c.h.b16 %v617
      %v1708 = vunpack.c.l.b16 %v618
      %v1709 = vunpack.c.h.b16 %v618
      %v1710 = vunpack.c.l.b16 %v619
      %v1711 = vunpack.c.h.b16 %v619
      %v1712 = vunpack.c.l.b16 %v620
      %v1713 = vunpack.c.h.b16 %v620
      %v1714 = vunpack.c.l.b16 %v621
      %v1715 = vunpack.c.h.b16 %v621
      %v1716 = vunpack.c.l.b16 %v622
      %v1717 = vunpack.c.h.b16 %v622
      %v1718 = vunpack.c.l.b16 %v623
      %v1719 = vunpack.c.h.b16 %v623
      %v1720 = vunpack.c.l.b16 %v624
      %v1721 = vunpack.c.h.b16 %v624
      %v1722 = vunpack.c.l.b16 %v625
      %v1723 = vunpack.c.h.b16 %v625
      %v1724 = vunpack.c.l.b16 %v626
      %v1725 = vunpack.c.h.b16 %v626
      %v1726 = vunpack.c.l.b16 %v627
      %v1727 = vunpack.c.h.b16 %v627
      %v1728 = vunpack.c.l.b16 %v628
      %v1729 = vunpack.c.h.b16 %v628
      %v1730 = vunpack.c.l.b16 %v629
      %v1731 = vunpack.c.h.b16 %v629
      %v1732 = vunpack.c.l.b16 %v630
      %v1733 = vunpack.c.h.b16 %v630
      %v1734 = vunpack.c.l.b16 %v631
      %v1735 = vunpack.c.h.b16 %v631
      %v1736 = vunpack.c.l.b16 %v632
      %v1737 = vunpack.c.h.b16 %v632
      %v1738 = vunpack.c.l.b16 %v633
      %v1739 = vunpack.c.h.b16 %v633
      %v1740 = vunpack.c.l.b16 %v634
      %v1741 = vunpack.c.h.b16 %v634
      %v1742 = vunpack.c.l.b16 %v635
      %v1743 = vunpack.c.h.b16 %v635
      %v1744 = vunpack.c.l.b16 %v636
      %v1745 = vunpack.c.h.b16 %v636
      %v1746 = vunpack.c.l.b16 %v637
      %v1747 = vunpack.c.h.b16 %v637
      %v1748 = vunpack.c.l.b16 %v638
      %v1749 = vunpack.c.h.b16 %v638
      %v1750 = vunpack.c.l.b16 %v639
      %v1751 = vunpack.c.h.b16 %v639
      %v1752 = vunpack.c.l.b16 %v640
      %v1753 = vunpack.c.h.b16 %v640
      %v1754 = vunpack.c.l.b16 %v641
      %v1755 = vunpack.c.h.b16 %v641
      %v1756 = vunpack.c.l.b16 %v642
      %v1757 = vunpack.c.h.b16 %v642
      %v1758 = vunpack.c.l.b16 %v643
      %v1759 = vunpack.c.h.b16 %v643
      %v1760 = vunpack.c.l.b16 %v644
      %v1761 = vunpack.c.h.b16 %v644
      %v1762 = vunpack.c.l.b16 %v645
      %v1763 = vunpack.c.h.b16 %v645
      %v1764 = vunpack.c.l.b16 %v646
      %v1765 = vunpack.c.h.b16 %v646
      %v1766 = vunpack.c.l.b16 %v647
      %v1767 = vunpack.c.h.b16 %v647
      %v1768 = vunpack.c.l.b16 %v648
      %v1769 = vunpack.c.h.b16 %v648
      %v1770 = vunpack.c.l.b16 %v649
      %v1771 = vunpack.c.h.b16 %v649
      %v1772 = vunpack.c.l.b16 %v650
      %v1773 = vunpack.c.h.b16 %v650
      %v1774 = vunpack.c.l.b16 %v651
      %v1775 = vunpack.c.h.b16 %v651
      %v1776 = vunpack.c.l.b16 %v652
      %v1777 = vunpack.c.h.b16 %v652
      %v1778 = vunpack.c.l.b16 %v653
      %v1779 = vunpack.c.h.b16 %v653
      %v1780 = vunpack.c.l.b16 %v654
      %v1781 = vunpack.c.h.b16 %v654
      %v1782 = vunpack.c.l.b16 %v655
      %v1783 = vunpack.c.h.b16 %v655
      %v1784 = vunpack.c.l.b16 %v656
      %v1785 = vunpack.c.h.b16 %v656
      %v1786 = vunpack.c.l.b16 %v657
      %v1787 = vunpack.c.h.b16 %v657
      %v1788 = vunpack.c.l.b16 %v658
      %v1789 = vunpack.c.h.b16 %v658
      %v1790 = vunpack.c.l.b16 %v659
      %v1791 = vunpack.c.h.b16 %v659
      %v1792 = vunpack.c.l.b16 %v660
      %v1793 = vunpack.c.h.b16 %v660
      %v1794 = vunpack.c.l.b16 %v661
      %v1795 = vunpack.c.h.b16 %v661
      %v1796 = vunpack.c.l.b16 %v662
      %v1797 = vunpack.c.h.b16 %v662
      %v1798 = vunpack.c.l.b16 %v663
      %v1799 = vunpack.c.h.b16 %v663
      %v1800 = vunpack.c.l.b16 %v664
      %v1801 = vunpack.c.h.b16 %v664
      %v1802 = vunpack.c.l.b16 %v665
      %v1803 = vunpack.c.h.b16 %v665
      %v1804 = vunpack.c.l.b16 %v666
      %v1805 = vunpack.c.h.b16 %v666
      %v1806 = vunpack.c.l.b16 %v667
      %v1807 = vunpack.c.h.b16 %v667
      %v1808 = vunpack.c.l.b16 %v668
      %v1809 = vunpack.c.h.b16 %v668
      %v1810 = vunpack.c.l.b16 %v669
      %v1811 = vunpack.c.h.b16 %v669
      %v1812 = vunpack.c.l.b16 %v670
      %v1813 = vunpack.c.h.b16 %v670
      %v1814 = vunpack.c.l.b16 %v671
      %v1815 = vunpack.c.h.b16 %v671
      %v1816 = vunpack.c.l.b16 %v672
      %v1817 = vunpack.c.h.b16 %v672
      %v1818 = vunpack.c.l.b16 %v673
      %v1819 = vunpack.c.h.b16 %v673
      %v1820 = vunpack.c.l.b16 %v674
      %v1821 = vunpack.c.h.b16 %v674
      %v1822 = vunpack.c.l.b16 %v675
      %v1823 = vunpack.c.h.b16 %v675
      %v1824 = vunpack.c.l.b16 %v676
      %v1825 = vunpack.c.h.b16 %v676
      %v1826 = vunpack.c.l.b16 %v677
      %v1827 = vunpack.c.h.b16 %v677
      %v1828 = vunpack.c.l.b16 %v678
      %v1829 = vunpack.c.h.b16 %v678
      %v1830 = vunpack.c.l.b16 %v679
      %v1831 = vunpack.c.h.b16 %v679
      %v1832 = vunpack.c.l.b16 %v680
      %v1833 = vunpack.c.h.b16 %v680
      %v1834 = vunpack.c.l.b16 %v681
      %v1835 = vunpack.c.h.b16 %v681
      %v1836 = vunpack.c.l.b16 %v682
      %v1837 = vunpack.c.h.b16 %v682
      %v1838 = vunpack.c.l.b16 %v683
      %v1839 = vunpack.c.h.b16 %v683
      %v1840 = vunpack.c.l.b16 %v684
      %v1841 = vunpack.c.h.b16 %v684
      %v1842 = vunpack.c.l.b16 %v685
      %v1843 = vunpack.c.h.b16 %v685
      %v1844 = vunpack.c.l.b16 %v686
      %v1845 = vunpack.c.h.b16 %v686
      %v1846 = vunpack.c.l.b16 %v687
      %v1847 = vunpack.c.h.b16 %v687
      %v1848 = vunpack.c.l.b16 %v688
      %v1849 = vunpack.c.h.b16 %v688
      %v1850 = vunpack.c.l.b16 %v689
      %v1851 = vunpack.c.h.b16 %v689
      %v1852 = vunpack.c.l.b16 %v690
      %v1853 = vunpack.c.h.b16 %v690
      %v1854 = vunpack.c.l.b16 %v691
      %v1855 = vunpack.c.h.b16 %v691
      %v1856 = vunpack.c.l.b16 %v692
      %v1857 = vunpack.c.h.b16 %v692
      %v1858 = vunpack.c.l.b16 %v693
      %v1859 = vunpack.c.h.b16 %v693
      %v1860 = vunpack.c.l.b16 %v694
      %v1861 = vunpack.c.h.b16 %v694
      %v1862 = vunpack.c.l.b16 %v695
      %v1863 = vunpack.c.h.b16 %v695
      %v1864 = vunpack.c.l.b16 %v696
      %v1865 = vunpack.c.h.b16 %v696
      %v1866 = vunpack.c.l.b16 %v697
      %v1867 = vunpack.c.h.b16 %v697
      %v1868 = vunpack.c.l.b16 %v698
      %v1869 = vunpack.c.h.b16 %v698
      %v1870 = vunpack.c.l.b16 %v699
      %v1871 = vunpack.c.h.b16 %v699
      %v1872 = vunpack.c.l.b16 %v700
      %v1873 = vunpack.c.h.b16 %v700
      %v1874 = vunpack.c.l.b16 %v701
      %v1875 = vunpack.c.h.b16 %v701
      %v1876 = vunpack.c.l.b16 %v702
      %v1877 = vunpack.c.h.b16 %v702
      %v1878 = vunpack.c.l.b16 %v703
      %v1879 = vunpack.c.h.b16 %v703
      %v1880 = vunpack.c.l.b16 %v704
      %v1881 = vunpack.c.h.b16 %v704
      %v1882 = vunpack.c.l.b16 %v705
      %v1883 = vunpack.c.h.b16 %v705
      %v1884 = vunpack.c.l.b16 %v706
      %v1885 = vunpack.c.h.b16 %v706
      %v1886 = vunpack.c.l.b16 %v707
      %v1887 = vunpack.c.h.b16 %v707
      %v1888 = vunpack.c.l.b16 %v708
      %v1889 = vunpack.c.h.b16 %v708
      %v1890 = vunpack.c.l.b16 %v709
      %v1891 = vunpack.c.h.b16 %v709
      %v1892 = vunpack.c.l.b16 %v710
      %v1893 = vunpack.c.h.b16 %v710
      %v1894 = vunpack.c.l.b16 %v711
      %v1895 = vunpack.c.h.b16 %v711
      %v1896 = vunpack.c.l.b16 %v712
      %v1897 = vunpack.c.h.b16 %v712
      %v1898 = vunpack.c.l.b16 %v713
      %v1899 = vunpack.c.h.b16 %v713
      %v1900 = vunpack.c.l.b16 %v714
      %v1901 = vunpack.c.h.b16 %v714
      %v1902 = vunpack.c.l.b16 %v715
      %v1903 = vunpack.c.h.b16 %v715
      %v1904 = vunpack.c.l.b16 %v716
      %v1905 = vunpack.c.h.b16 %v716
      %v1906 = vunpack.c.l.b16 %v717
      %v1907 = vunpack.c.h.b16 %v717
      %v1908 = vunpack.c.l.b16 %v718
      %v1909 = vunpack.c.h.b16 %v718
      %v1910 = vunpack.c.l.b16 %v719
      %v1911 = vunpack.c.h.b16 %v719
      %v1912 = vunpack.c.l.b16 %v720
      %v1913 = vunpack.c.h.b16 %v720
      %v1914 = vunpack.c.l.b16 %v721
      %v1915 = vunpack.c.h.b16 %v721
      %v1916 = vunpack.c.l.b16 %v722
      %v1917 = vunpack.c.h.b16 %v722
      %v1918 = vunpack.c.l.b16 %v723
      %v1919 = vunpack.c.h.b16 %v723
      %v1920 = vunpack.c.l.b16 %v724
      %v1921 = vunpack.c.h.b16 %v724
      %v1922 = vunpack.c.l.b16 %v725
      %v1923 = vunpack.c.h.b16 %v725
      %v1924 = vunpack.c.l.b16 %v726
      %v1925 = vunpack.c.h.b16 %v726
      %v1926 = vunpack.c.l.b16 %v727
      %v1927 = vunpack.c.h.b16 %v727
      %v1928 = vunpack.c.l.b16 %v728
      %v1929 = vunpack.c.h.b16 %v728
      %v1930 = vunpack.c.l.b16 %v729
      %v1931 = vunpack.c.h.b16 %v729
      %v1932 = vunpack.c.l.b16 %v730
      %v1933 = vunpack.c.h.b16 %v730
      %v1934 = vunpack.c.l.b16 %v731
      %v1935 = vunpack.c.h.b16 %v731
      %v1936 = vunpack.c.l.b16 %v732
      %v1937 = vunpack.c.h.b16 %v732
      %v1938 = vunpack.c.l.b16 %v733
      %v1939 = vunpack.c.h.b16 %v733
      %v1940 = vunpack.c.l.b16 %v734
      %v1941 = vunpack.c.h.b16 %v734
      %v1942 = vunpack.c.l.b16 %v735
      %v1943 = vunpack.c.h.b16 %v735
      %v1944 = vunpack.c.l.b16 %v736
      %v1945 = vunpack.c.h.b16 %v736
      %v1946 = vunpack.c.l.b16 %v737
      %v1947 = vunpack.c.h.b16 %v737
      %v1948 = vunpack.c.l.b16 %v738
      %v1949 = vunpack.c.h.b16 %v738
      %v1950 = vunpack.c.l.b16 %v739
      %v1951 = vunpack.c.h.b16 %v739
      %v1952 = vunpack.c.l.b16 %v740
      %v1953 = vunpack.c.h.b16 %v740
      %v1954 = vunpack.c.l.b16 %v741
      %v1955 = vunpack.c.h.b16 %v741
      %v1956 = vunpack.c.l.b16 %v742
      %v1957 = vunpack.c.h.b16 %v742
      %v1958 = vunpack.c.l.b16 %v743
      %v1959 = vunpack.c.h.b16 %v743
      %v1960 = vunpack.c.l.b16 %v744
      %v1961 = vunpack.c.h.b16 %v744
      %v1962 = vunpack.c.l.b16 %v745
      %v1963 = vunpack.c.h.b16 %v745
      %v1964 = vunpack.c.l.b16 %v746
      %v1965 = vunpack.c.h.b16 %v746
      %v1966 = vunpack.c.l.b16 %v747
      %v1967 = vunpack.c.h.b16 %v747
      %v1968 = vunpack.c.l.b16 %v748
      %v1969 = vunpack.c.h.b16 %v748
      %v1970 = vunpack.c.l.b16 %v749
      %v1971 = vunpack.c.h.b16 %v749
      %v1972 = vunpack.c.l.b16 %v750
      %v1973 = vunpack.c.h.b16 %v750
      %v1974 = vunpack.c.l.b16 %v751
      %v1975 = vunpack.c.h.b16 %v751
      %v1976 = vunpack.c.l.b16 %v752
      %v1977 = vunpack.c.h.b16 %v752
      %v1978 = vunpack.c.l.b16 %v753
      %v1979 = vunpack.c.h.b16 %v753
      %v1980 = vunpack.c.l.b16 %v754
      %v1981 = vunpack.c.h.b16 %v754
      %v1982 = vunpack.c.l.b16 %v755
      %v1983 = vunpack.c.h.b16 %v755
      %v1984 = vunpack.c.l.b16 %v756
      %v1985 = vunpack.c.h.b16 %v756
      %v1986 = vunpack.c.l.b16 %v757
      %v1987 = vunpack.c.h.b16 %v757
      %v1988 = vunpack.c.l.b16 %v758
      %v1989 = vunpack.c.h.b16 %v758
      %v1990 = vunpack.c.l.b16 %v759
      %v1991 = vunpack.c.h.b16 %v759
      %v1992 = vunpack.c.l.b16 %v760
      %v1993 = vunpack.c.h.b16 %v760
      %v1994 = vunpack.c.l.b16 %v761
      %v1995 = vunpack.c.h.b16 %v761
      %v1996 = vunpack.c.l.b16 %v762
      %v1997 = vunpack.c.h.b16 %v762
      %v1998 = vunpack.c.l.b16 %v763
      %v1999 = vunpack.c.h.b16 %v763
      %v2000 = vunpack.c.l.b16 %v764
      %v2001 = vunpack.c.h.b16 %v764
      %v2002 = vunpack.c.l.b16 %v765
      %v2003 = vunpack.c.h.b16 %v765
      %v2004 = vunpack.c.l.b16 %v766
      %v2005 = vunpack.c.h.b16 %v766
      %v2006 = vunpack.c.l.b16 %v767
      %v2007 = vunpack.c.h.b16 %v767
      %v2008 = vunpack.c.l.b16 %v768
      %v2009 = vunpack.c.h.b16 %v768
      %v2010 = vunpack.c.l.b16 %v769
      %v2011 = vunpack.c.h.b16 %v769
      %v2012 = vunpack.c.l.b16 %v770
      %v2013 = vunpack.c.h.b16 %v770
      %v2014 = vunpack.c.l.b16 %v771
      %v2015 = vunpack.c.h.b16 %v771
      %v2016 = vunpack.c.l.b16 %v772
      %v2017 = vunpack.c.h.b16 %v772
      %v2018 = vunpack.c.l.b16 %v773
      %v2019 = vunpack.c.h.b16 %v773
      %v2020 = vunpack.c.l.b16 %v774
      %v2021 = vunpack.c.h.b16 %v774
      %v2022 = vunpack.c.l.b16 %v775
      %v2023 = vunpack.c.h.b16 %v775
      %v2024 = vunpack.c.l.b16 %v776
      %v2025 = vunpack.c.h.b16 %v776
      %v2026 = vunpack.c.l.b16 %v777
      %v2027 = vunpack.c.h.b16 %v777
      %v2028 = vunpack.c.l.b16 %v778
      %v2029 = vunpack.c.h.b16 %v778
      %v2030 = vunpack.c.l.b16 %v779
      %v2031 = vunpack.c.h.b16 %v779
      %v2032 = vunpack.c.l.b16 %v780
      %v2033 = vunpack.c.h.b16 %v780
      %v2034 = vunpack.c.l.b16 %v781
      %v2035 = vunpack.c.h.b16 %v781
      %v2036 = vunpack.c.l.b16 %v782
      %v2037 = vunpack.c.h.b16 %v782
      %v2038 = vunpack.c.l.b16 %v783
      %v2039 = vunpack.c.h.b16 %v783
      %v2040 = vunpack.c.l.b16 %v784
      %v2041 = vunpack.c.h.b16 %v784
      %v2042 = vunpack.c.l.b16 %v785
      %v2043 = vunpack.c.h.b16 %v785
      %v2044 = vunpack.c.l.b16 %v786
      %v2045 = vunpack.c.h.b16 %v786
      %v2046 = vunpack.c.l.b16 %v787
      %v2047 = vunpack.c.h.b16 %v787
      %v2048 = vunpack.c.l.b16 %v788
      %v2049 = vunpack.c.h.b16 %v788
      %v2050 = vunpack.c.l.b16 %v789
      %v2051 = vunpack.c.h.b16 %v789
      %v2052 = vunpack.c.l.b16 %v790
      %v2053 = vunpack.c.h.b16 %v790
      %v2054 = vunpack.c.l.b16 %v791
      %v2055 = vunpack.c.h.b16 %v791
      %v2056 = vunpack.c.l.b16 %v792
      %v2057 = vunpack.c.h.b16 %v792
      %v2058 = vunpack.c.l.b16 %v793
      %v2059 = vunpack.c.h.b16 %v793
      %v2060 = vunpack.c.l.b16 %v794
      %v2061 = vunpack.c.h.b16 %v794
      %v2062 = vunpack.c.l.b16 %v795
      %v2063 = vunpack.c.h.b16 %v795
      %v2064 = vunpack.c.l.b16 %v796
      %v2065 = vunpack.c.h.b16 %v796
      %v2066 = vunpack.c.l.b16 %v797
      %v2067 = vunpack.c.h.b16 %v797
      %v2068 = vunpack.c.l.b16 %v798
      %v2069 = vunpack.c.h.b16 %v798
      %v2070 = vunpack.c.l.b16 %v799
      %v2071 = vunpack.c.h.b16 %v799
      %v2072 = vunpack.c.l.b16 %v800
      %v2073 = vunpack.c.h.b16 %v800
      %v2074 = vunpack.c.l.b16 %v801
      %v2075 = vunpack.c.h.b16 %v801
      %v2076 = vunpack.c.l.b16 %v802
      %v2077 = vunpack.c.h.b16 %v802
      %v2078 = vunpack.c.l.b16 %v803
      %v2079 = vunpack.c.h.b16 %v803
      %v2080 = vunpack.c.l.b16 %v804
      %v2081 = vunpack.c.h.b16 %v804
      %v2082 = vunpack.c.l.b16 %v805
      %v2083 = vunpack.c.h.b16 %v805
      %v2084 = vunpack.c.l.b16 %v806
      %v2085 = vunpack.c.h.b16 %v806
      %v2086 = vunpack.c.l.b16 %v807
      %v2087 = vunpack.c.h.b16 %v807
      %v2088 = vunpack.c.l.b16 %v808
      %v2089 = vunpack.c.h.b16 %v808
      %v2090 = vunpack.c.l.b16 %v809
      %v2091 = vunpack.c.h.b16 %v809
      %v2092 = vunpack.c.l.b16 %v810
      %v2093 = vunpack.c.h.b16 %v810
      %v2094 = vunpack.c.l.b16 %v811
      %v2095 = vunpack.c.h.b16 %v811
      %v2096 = vunpack.c.l.b16 %v812
      %v2097 = vunpack.c.h.b16 %v812
      %v2098 = vunpack.c.l.b16 %v813
      %v2099 = vunpack.c.h.b16 %v813
      %v2100 = vunpack.c.l.b16 %v814
      %v2101 = vunpack.c.h.b16 %v814
      %v2102 = vunpack.c.l.b16 %v815
      %v2103 = vunpack.c.h.b16 %v815
      %v2104 = vunpack.c.l.b16 %v816
      %v2105 = vunpack.c.h.b16 %v816
      %v2106 = vunpack.c.l.b16 %v817
      %v2107 = vunpack.c.h.b16 %v817
      %v2108 = vunpack.c.l.b16 %v818
      %v2109 = vunpack.c.h.b16 %v818
      %v2110 = vunpack.c.l.b16 %v819
      %v2111 = vunpack.c.h.b16 %v819
      %v2112 = vunpack.c.l.b16 %v820
      %v2113 = vunpack.c.h.b16 %v820
      %v2114 = vunpack.c.l.b16 %v821
      %v2115 = vunpack.c.h.b16 %v821
      %v2116 = vunpack.c.l.b16 %v822
      %v2117 = vunpack.c.h.b16 %v822
      %v2118 = vunpack.c.l.b16 %v823
      %v2119 = vunpack.c.h.b16 %v823
      %v2120 = vpack.c.b16 %v1354, %v1352
      %v2121 = vpack.c.b16 %v1355, %v1353
      %v2122 = vpack.c.b16 %v1358, %v1356
      %v2123 = vpack.c.b16 %v1359, %v1357
      %v2124 = vpack.c.b16 %v1362, %v1360
      %v2125 = vpack.c.b16 %v1363, %v1361
      %v2126 = vpack.c.b16 %v1366, %v1364
      %v2127 = vpack.c.b16 %v1367, %v1365
      %v2128 = vpack.c.b16 %v1370, %v1368
      %v2129 = vpack.c.b16 %v1371, %v1369
      %v2130 = vpack.c.b16 %v1374, %v1372
      %v2131 = vpack.c.b16 %v1375, %v1373
      %v2132 = vpack.c.b16 %v1378, %v1376
      %v2133 = vpack.c.b16 %v1379, %v1377
      %v2134 = vpack.c.b16 %v1382, %v1380
      %v2135 = vpack.c.b16 %v1383, %v1381
      %v2136 = vpack.c.b16 %v1386, %v1384
      %v2137 = vpack.c.b16 %v1387, %v1385
      %v2138 = vpack.c.b16 %v1390, %v1388
      %v2139 = vpack.c.b16 %v1391, %v1389
      %v2140 = vpack.c.b16 %v1394, %v1392
      %v2141 = vpack.c.b16 %v1395, %v1393
      %v2142 = vpack.c.b16 %v1398, %v1396
      %v2143 = vpack.c.b16 %v1399, %v1397
      %v2144 = vpack.c.b16 %v1402, %v1400
      %v2145 = vpack.c.b16 %v1403, %v1401
      %v2146 = vpack.c.b16 %v1406, %v1404
      %v2147 = vpack.c.b16 %v1407, %v1405
      %v2148 = vpack.c.b16 %v1410, %v1408
      %v2149 = vpack.c.b16 %v1411, %v1409
      %v2150 = vpack.c.b16 %v1414, %v1412
      %v2151 = vpack.c.b16 %v1415, %v1413
      %v2152 = vpack.c.b16 %v1418, %v1416
      %v2153 = vpack.c.b16 %v1419, %v1417
      %v2154 = vpack.c.b16 %v1422, %v1420
      %v2155 = vpack.c.b16 %v1423, %v1421
      %v2156 = vpack.c.b16 %v1426, %v1424
      %v2157 = vpack.c.b16 %v1427, %v1425
      %v2158 = vpack.c.b16 %v1430, %v1428
      %v2159 = vpack.c.b16 %v1431, %v1429
      %v2160 = vpack.c.b16 %v1434, %v1432
      %v2161 = vpack.c.b16 %v1435, %v1433
      %v2162 = vpack.c.b16 %v1438, %v1436
      %v2163 = vpack.c.b16 %v1439, %v1437
      %v2164 = vpack.c.b16 %v1442, %v1440
      %v2165 = vpack.c.b16 %v1443, %v1441
      %v2166 = vpack.c.b16 %v1446, %v1444
      %v2167 = vpack.c.b16 %v1447, %v1445
      %v2168 = vpack.c.b16 %v1450, %v1448
      %v2169 = vpack.c.b16 %v1451, %v1449
      %v2170 = vpack.c.b16 %v1454, %v1452
      %v2171 = vpack.c.b16 %v1455, %v1453
      %v2172 = vpack.c.b16 %v1458, %v1456
      %v2173 = vpack.c.b16 %v1459, %v1457
      %v2174 = vpack.c.b16 %v1462, %v1460
      %v2175 = vpack.c.b16 %v1463, %v1461
      %v2176 = vpack.c.b16 %v1466, %v1464
      %v2177 = vpack.c.b16 %v1467, %v1465
      %v2178 = vpack.c.b16 %v1470, %v1468
      %v2179 = vpack.c.b16 %v1471, %v1469
      %v2180 = vpack.c.b16 %v1474, %v1472
      %v2181 = vpack.c.b16 %v1475, %v1473
      %v2182 = vpack.c.b16 %v1478, %v1476
      %v2183 = vpack.c.b16 %v1479, %v1477
      %v2184 = vpack.c.b16 %v1482, %v1480
      %v2185 = vpack.c.b16 %v1483, %v1481
      %v2186 = vpack.c.b16 %v1486, %v1484
      %v2187 = vpack.c.b16 %v1487, %v1485
      %v2188 = vpack.c.b16 %v1490, %v1488
      %v2189 = vpack.c.b16 %v1491, %v1489
      %v2190 = vpack.c.b16 %v1494, %v1492
      %v2191 = vpack.c.b16 %v1495, %v1493
      %v2192 = vpack.c.b16 %v1498, %v1496
      %v2193 = vpack.c.b16 %v1499, %v1497
      %v2194 = vpack.c.b16 %v1502, %v1500
      %v2195 = vpack.c.b16 %v1503, %v1501
      %v2196 = vpack.c.b16 %v1506, %v1504
      %v2197 = vpack.c.b16 %v1507, %v1505
      %v2198 = vpack.c.b16 %v1510, %v1508
      %v2199 = vpack.c.b16 %v1511, %v1509
      %v2200 = vpack.c.b16 %v1514, %v1512
      %v2201 = vpack.c.b16 %v1515, %v1513
      %v2202 = vpack.c.b16 %v1518, %v1516
      %v2203 = vpack.c.b16 %v1519, %v1517
      %v2204 = vpack.c.b16 %v1522, %v1520
      %v2205 = vpack.c.b16 %v1523, %v1521
      %v2206 = vpack.c.b16 %v1526, %v1524
      %v2207 = vpack.c.b16 %v1527, %v1525
      %v2208 = vpack.c.b16 %v1530, %v1528
      %v2209 = vpack.c.b16 %v1531, %v1529
      %v2210 = vpack.c.b16 %v1534, %v1532
      %v2211 = vpack.c.b16 %v1535, %v1533
      %v2212 = vpack.c.b16 %v1538, %v1536
      %v2213 = vpack.c.b16 %v1539, %v1537
      %v2214 = vpack.c.b16 %v1542, %v1540
      %v2215 = vpack.c.b16 %v1543, %v1541
      %v2216 = vpack.c.b16 %v1546, %v1544
      %v2217 = vpack.c.b16 %v1547, %v1545
      %v2218 = vpack.c.b16 %v1550, %v1548
      %v2219 = vpack.c.b16 %v1551, %v1549
      %v2220 = vpack.c.b16 %v1554, %v1552
      %v2221 = vpack.c.b16 %v1555, %v1553
      %v2222 = vpack.c.b16 %v1558, %v1556
      %v2223 = vpack.c.b16 %v1559, %v1557
      %v2224 = vpack.c.b16 %v1562, %v1560
      %v2225 = vpack.c.b16 %v1563, %v1561
      %v2226 = vpack.c.b16 %v1566, %v1564
      %v2227 = vpack.c.b16 %v1567, %v1565
      %v2228 = vpack.c.b16 %v1570, %v1568
      %v2229 = vpack.c.b16 %v1571, %v1569
      %v2230 = vpack.c.b16 %v1574, %v1572
      %v2231 = vpack.c.b16 %v1575, %v1573
      %v2232 = vpack.c.b16 %v1578, %v1576
      %v2233 = vpack.c.b16 %v1579, %v1577
      %v2234 = vpack.c.b16 %v1582, %v1580
      %v2235 = vpack.c.b16 %v1583, %v1581
      %v2236 = vpack.c.b16 %v1586, %v1584
      %v2237 = vpack.c.b16 %v1587, %v1585
      %v2238 = vpack.c.b16 %v1590, %v1588
      %v2239 = vpack.c.b16 %v1591, %v1589
      %v2240 = vpack.c.b16 %v1594, %v1592
      %v2241 = vpack.c.b16 %v1595, %v1593
      %v2242 = vpack.c.b16 %v1598, %v1596
      %v2243 = vpack.c.b16 %v1599, %v1597
      %v2244 = vpack.c.b16 %v1602, %v1600
      %v2245 = vpack.c.b16 %v1603, %v1601
      %v2246 = vpack.c.b16 %v1606, %v1604
      %v2247 = vpack.c.b16 %v1607, %v1605
      %v2248 = vpack.c.b16 %v1610, %v1608
      %v2249 = vpack.c.b16 %v1611, %v1609
      %v2250 = vpack.c.b16 %v1614, %v1612
      %v2251 = vpack.c.b16 %v1615, %v1613
      %v2252 = vpack.c.b16 %v1618, %v1616
      %v2253 = vpack.c.b16 %v1619, %v1617
      %v2254 = vpack.c.b16 %v1622, %v1620
      %v2255 = vpack.c.b16 %v1623, %v1621
      %v2256 = vpack.c.b16 %v1626, %v1624
      %v2257 = vpack.c.b16 %v1627, %v1625
      %v2258 = vpack.c.b16 %v1630, %v1628
      %v2259 = vpack.c.b16 %v1631, %v1629
      %v2260 = vpack.c.b16 %v1634, %v1632
      %v2261 = vpack.c.b16 %v1635, %v1633
      %v2262 = vpack.c.b16 %v1638, %v1636
      %v2263 = vpack.c.b16 %v1639, %v1637
      %v2264 = vpack.c.b16 %v1642, %v1640
      %v2265 = vpack.c.b16 %v1643, %v1641
      %v2266 = vpack.c.b16 %v1646, %v1644
      %v2267 = vpack.c.b16 %v1647, %v1645
      %v2268 = vpack.c.b16 %v1650, %v1648
      %v2269 = vpack.c.b16 %v1651, %v1649
      %v2270 = vpack.c.b16 %v1654, %v1652
      %v2271 = vpack.c.b16 %v1655, %v1653
      %v2272 = vpack.c.b16 %v1658, %v1656
      %v2273 = vpack.c.b16 %v1659, %v1657
      %v2274 = vpack.c.b16 %v1662, %v1660
      %v2275 = vpack.c.b16 %v1663, %v1661
      %v2276 = vpack.c.b16 %v1666, %v1664
      %v2277 = vpack.c.b16 %v1667, %v1665
      %v2278 = vpack.c.b16 %v1670, %v1668
      %v2279 = vpack.c.b16 %v1671, %v1669
      %v2280 = vpack.c.b16 %v1674, %v1672
      %v2281 = vpack.c.b16 %v1675, %v1673
      %v2282 = vpack.c.b16 %v1678, %v1676
      %v2283 = vpack.c.b16 %v1679, %v1677
      %v2284 = vpack.c.b16 %v1682, %v1680
      %v2285 = vpack.c.b16 %v1683, %v1681
      %v2286 = vpack.c.b16 %v1686, %v1684
      %v2287 = vpack.c.b16 %v1687, %v1685
      %v2288 = vpack.c.b16 %v1690, %v1688
      %v2289 = vpack.c.b16 %v1691, %v1689
      %v2290 = vpack.c.b16 %v1694, %v1692
      %v2291 = vpack.c.b16 %v1695, %v1693
      %v2292 = vpack.c.b16 %v1698, %v1696
      %v2293 = vpack.c.b16 %v1699, %v1697
      %v2294 = vpack.c.b16 %v1702, %v1700
      %v2295 = vpack.c.b16 %v1703, %v1701
      %v2296 = vpack.c.b16 %v1706, %v1704
      %v2297 = vpack.c.b16 %v1707, %v1705
      %v2298 = vpack.c.b16 %v1710, %v1708
      %v2299 = vpack.c.b16 %v1711, %v1709
      %v2300 = vpack.c.b16 %v1714, %v1712
      %v2301 = vpack.c.b16 %v1715, %v1713
      %v2302 = vpack.c.b16 %v1718, %v1716
      %v2303 = vpack.c.b16 %v1719, %v1717
      %v2304 = vpack.c.b16 %v1722, %v1720
      %v2305 = vpack.c.b16 %v1723, %v1721
      %v2306 = vpack.c.b16 %v1726, %v1724
      %v2307 = vpack.c.b16 %v1727, %v1725
      %v2308 = vpack.c.b16 %v1730, %v1728
      %v2309 = vpack.c.b16 %v1731, %v1729
      %v2310 = vpack.c.b16 %v1734, %v1732
      %v2311 = vpack.c.b16 %v1735, %v1733
      %v2312 = vpack.c.b16 %v1738, %v1736
      %v2313 = vpack.c.b16 %v1739, %v1737
      %v2314 = vpack.c.b16 %v1742, %v1740
      %v2315 = vpack.c.b16 %v1743, %v1741
      %v2316 = vpack.c.b16 %v1746, %v1744
      %v2317 = vpack.c.b16 %v1747, %v1745
      %v2318 = vpack.c.b16 %v1750, %v1748
      %v2319 = vpack.c.b16 %v1751, %v1749
      %v2320 = vpack.c.b16 %v1754, %v1752
      %v2321 = vpack.c.b16 %v1755, %v1753
      %v2322 = vpack.c.b16 %v1758, %v1756
      %v2323 = vpack.c.b16 %v1759, %v1757
      %v2324 = vpack.c.b16 %v1762, %v1760
      %v2325 = vpack.c.b16 %v1763, %v1761
      %v2326 = vpack.c.b16 %v1766, %v1764
      %v2327 = vpack.c.b16 %v1767, %v1765
      %v2328 = vpack.c.b16 %v1770, %v1768
      %v2329 = vpack.c.b16 %v1771, %v1769
      %v2330 = vpack.c.b16 %v1774, %v1772
      %v2331 = vpack.c.b16 %v1775, %v1773
      %v2332 = vpack.c.b16 %v1778, %v1776
      %v2333 = vpack.c.b16 %v1779, %v1777
      %v2334 = vpack.c.b16 %v1782, %v1780
      %v2335 = vpack.c.b16 %v1783, %v1781
      %v2336 = vpack.c.b16 %v1786, %v1784
      %v2337 = vpack.c.b16 %v1787, %v1785
      %v2338 = vpack.c.b16 %v1790, %v1788
      %v2339 = vpack.c.b16 %v1791, %v1789
      %v2340 = vpack.c.b16 %v1794, %v1792
      %v2341 = vpack.c.b16 %v1795, %v1793
      %v2342 = vpack.c.b16 %v1798, %v1796
      %v2343 = vpack.c.b16 %v1799, %v1797
      %v2344 = vpack.c.b16 %v1802, %v1800
      %v2345 = vpack.c.b16 %v1803, %v1801
      %v2346 = vpack.c.b16 %v1806, %v1804
      %v2347 = vpack.c.b16 %v1807, %v1805
      %v2348 = vpack.c.b16 %v1810, %v1808
      %v2349 = vpack.c.b16 %v1811, %v1809
      %v2350 = vpack.c.b16 %v1814, %v1812
      %v2351 = vpack.c.b16 %v1815, %v1813
      %v2352 = vpack.c.b16 %v1818, %v1816
      %v2353 = vpack.c.b16 %v1819, %v1817
      %v2354 = vpack.c.b16 %v1822, %v1820
      %v2355 = vpack.c.b16 %v1823, %v1821
      %v2356 = vpack.c.b16 %v1826, %v1824
      %v2357 = vpack.c.b16 %v1827, %v1825
      %v2358 = vpack.c.b16 %v1830, %v1828
      %v2359 = vpack.c.b16 %v1831, %v1829
      %v2360 = vpack.c.b16 %v1834, %v1832
      %v2361 = vpack.c.b16 %v1835, %v1833
      %v2362 = vpack.c.b16 %v1838, %v1836
      %v2363 = vpack.c.b16 %v1839, %v1837
      %v2364 = vpack.c.b16 %v1842, %v1840
      %v2365 = vpack.c.b16 %v1843, %v1841
      %v2366 = vpack.c.b16 %v1846, %v1844
      %v2367 = vpack.c.b16 %v1847, %v1845
      %v2368 = vpack.c.b16 %v1850, %v1848
      %v2369 = vpack.c.b16 %v1851, %v1849
      %v2370 = vpack.c.b16 %v1854, %v1852
      %v2371 = vpack.c.b16 %v1855, %v1853
      %v2372 = vpack.c.b16 %v1858, %v1856
      %v2373 = vpack.c.b16 %v1859, %v1857
      %v2374 = vpack.c.b16 %v1862, %v1860
      %v2375 = vpack.c.b16 %v1863, %v1861
      %v2376 = vpack.c.b16 %v1866, %v1864
      %v2377 = vpack.c.b16 %v1867, %v1865
      %v2378 = vpack.c.b16 %v1870, %v1868
      %v2379 = vpack.c.b16 %v1871, %v1869
      %v2380 = vpack.c.b16 %v1874, %v1872
      %v2381 = vpack.c.b16 %v1875, %v1873
      %v2382 = vpack.c.b16 %v1878, %v1876
      %v2383 = vpack.c.b16 %v1879, %v1877
      %v2384 = vpack.c.b16 %v1882, %v1880
      %v2385 = vpack.c.b16 %v1883, %v1881
      %v2386 = vpack.c.b16 %v1886, %v1884
      %v2387 = vpack.c.b16 %v1887, %v1885
      %v2388 = vpack.c.b16 %v1890, %v1888
      %v2389 = vpack.c.b16 %v1891, %v1889
      %v2390 = vpack.c.b16 %v1894, %v1892
      %v2391 = vpack.c.b16 %v1895, %v1893
      %v2392 = vpack.c.b16 %v1898, %v1896
      %v2393 = vpack.c.b16 %v1899, %v1897
      %v2394 = vpack.c.b16 %v1902, %v1900
      %v2395 = vpack.c.b16 %v1903, %v1901
      %v2396 = vpack.c.b16 %v1906, %v1904
      %v2397 = vpack.c.b16 %v1907, %v1905
      %v2398 = vpack.c.b16 %v1910, %v1908
      %v2399 = vpack.c.b16 %v1911, %v1909
      %v2400 = vpack.c.b16 %v1914, %v1912
      %v2401 = vpack.c.b16 %v1915, %v1913
      %v2402 = vpack.c.b16 %v1918, %v1916
      %v2403 = vpack.c.b16 %v1919, %v1917
      %v2404 = vpack.c.b16 %v1922, %v1920
      %v2405 = vpack.c.b16 %v1923, %v1921
      %v2406 = vpack.c.b16 %v1926, %v1924
      %v2407 = vpack.c.b16 %v1927, %v1925
      %v2408 = vpack.c.b16 %v1930, %v1928
      %v2409 = vpack.c.b16 %v1931, %v1929
      %v2410 = vpack.c.b16 %v1934, %v1932
      %v2411 = vpack.c.b16 %v1935, %v1933
      %v2412 = vpack.c.b16 %v1938, %v1936
      %v2413 = vpack.c.b16 %v1939, %v1937
      %v2414 = vpack.c.b16 %v1942, %v1940
      %v2415 = vpack.c.b16 %v1943, %v1941
      %v2416 = vpack.c.b16 %v1946, %v1944
      %v2417 = vpack.c.b16 %v1947, %v1945
      %v2418 = vpack.c.b16 %v1950, %v1948
      %v2419 = vpack.c.b16 %v1951, %v1949
      %v2420 = vpack.c.b16 %v1954, %v1952
      %v2421 = vpack.c.b16 %v1955, %v1953
      %v2422 = vpack.c.b16 %v1958, %v1956
      %v2423 = vpack.c.b16 %v1959, %v1957
      %v2424 = vpack.c.b16 %v1962, %v1960
      %v2425 = vpack.c.b16 %v1963, %v1961
      %v2426 = vpack.c.b16 %v1966, %v1964
      %v2427 = vpack.c.b16 %v1967, %v1965
      %v2428 = vpack.c.b16 %v1970, %v1968
      %v2429 = vpack.c.b16 %v1971, %v1969
      %v2430 = vpack.c.b16 %v1974, %v1972
      %v2431 = vpack.c.b16 %v1975, %v1973
      %v2432 = vpack.c.b16 %v1978, %v1976
      %v2433 = vpack.c.b16 %v1979, %v1977
      %v2434 = vpack.c.b16 %v1982, %v1980
      %v2435 = vpack.c.b16 %v1983, %v1981
      %v2436 = vpack.c.b16 %v1986, %v1984
      %v2437 = vpack.c.b16 %v1987, %v1985
      %v2438 = vpack.c.b16 %v1990, %v1988
      %v2439 = vpack.c.b16 %v1991, %v1989
      %v2440 = vpack.c.b16 %v1994, %v1992
      %v2441 = vpack.c.b16 %v1995, %v1993
      %v2442 = vpack.c.b16 %v1998, %v1996
      %v2443 = vpack.c.b16 %v1999, %v1997
      %v2444 = vpack.c.b16 %v2002, %v2000
      %v2445 = vpack.c.b16 %v2003, %v2001
      %v2446 = vpack.c.b16 %v2006, %v2004
      %v2447 = vpack.c.b16 %v2007, %v2005
      %v2448 = vpack.c.b16 %v2010, %v2008
      %v2449 = vpack.c.b16 %v2011, %v2009
      %v2450 = vpack.c.b16 %v2014, %v2012
      %v2451 = vpack.c.b16 %v2015, %v2013
      %v2452 = vpack.c.b16 %v2018, %v2016
      %v2453 = vpack.c.b16 %v2019, %v2017
      %v2454 = vpack.c.b16 %v2022, %v2020
      %v2455 = vpack.c.b16 %v2023, %v2021
      %v2456 = vpack.c.b16 %v2026, %v2024
      %v2457 = vpack.c.b16 %v2027, %v2025
      %v2458 = vpack.c.b16 %v2030, %v2028
      %v2459 = vpack.c.b16 %v2031, %v2029
      %v2460 = vpack.c.b16 %v2034, %v2032
      %v2461 = vpack.c.b16 %v2035, %v2033
      %v2462 = vpack.c.b16 %v2038, %v2036
      %v2463 = vpack.c.b16 %v2039, %v2037
      %v2464 = vpack.c.b16 %v2042, %v2040
      %v2465 = vpack.c.b16 %v2043, %v2041
      %v2466 = vpack.c.b16 %v2046, %v2044
      %v2467 = vpack.c.b16 %v2047, %v2045
      %v2468 = vpack.c.b16 %v2050, %v2048
      %v2469 = vpack.c.b16 %v2051, %v2049
      %v2470 = vpack.c.b16 %v2054, %v2052
      %v2471 = vpack.c.b16 %v2055, %v2053
      %v2472 = vpack.c.b16 %v2058, %v2056
      %v2473 = vpack.c.b16 %v2059, %v2057
      %v2474 = vpack.c.b16 %v2062, %v2060
      %v2475 = vpack.c.b16 %v2063, %v2061
      %v2476 = vpack.c.b16 %v2066, %v2064
      %v2477 = vpack.c.b16 %v2067, %v2065
      %v2478 = vpack.c.b16 %v2070, %v2068
      %v2479 = vpack.c.b16 %v2071, %v2069
      %v2480 = vpack.c.b16 %v2074, %v2072
      %v2481 = vpack.c.b16 %v2075, %v2073
      %v2482 = vpack.c.b16 %v2078, %v2076
      %v2483 = vpack.c.b16 %v2079, %v2077
      %v2484 = vpack.c.b16 %v2082, %v2080
      %v2485 = vpack.c.b16 %v2083, %v2081
      %v2486 = vpack.c.b16 %v2086, %v2084
      %v2487 = vpack.c.b16 %v2087, %v2085
      %v2488 = vpack.c.b16 %v2090, %v2088
      %v2489 = vpack.c.b16 %v2091, %v2089
      %v2490 = vpack.c.b16 %v2094, %v2092
      %v2491 = vpack.c.b16 %v2095, %v2093
      %v2492 = vpack.c.b16 %v2098, %v2096
      %v2493 = vpack.c.b16 %v2099, %v2097
      %v2494 = vpack.c.b16 %v2102, %v2100
      %v2495 = vpack.c.b16 %v2103, %v2101
      %v2496 = vpack.c.b16 %v2106, %v2104
      %v2497 = vpack.c.b16 %v2107, %v2105
      %v2498 = vpack.c.b16 %v2110, %v2108
      %v2499 = vpack.c.b16 %v2111, %v2109
      %v2500 = vpack.c.b16 %v2114, %v2112
      %v2501 = vpack.c.b16 %v2115, %v2113
      %v2502 = vpack.c.b16 %v2118, %v2116
      %v2503 = vpack.c.b16 %v2119, %v2117
      %2888 = vmatprep.subr.bf16.mxu0 %v2121
      %2889 = vmatpush1.bf16.msra.mxu0 %v2120
      %2890 = vmatprep.subr.bf16.mxu0 %v2123
      %2891 = vmatpush1.bf16.msra.mxu0 %v2122
      %2892 = vmatprep.subr.bf16.mxu0 %v2125
      %2893 = vmatpush1.bf16.msra.mxu0 %v2124
      %2894 = vmatprep.subr.bf16.mxu0 %v2127
      %2895 = vmatpush1.bf16.msra.mxu0 %v2126
      %2896 = vmatprep.subr.bf16.mxu0 %v2129
      %2897 = vmatpush1.bf16.msra.mxu0 %v2128
      %2898 = vmatprep.subr.bf16.mxu0 %v2131
      %2899 = vmatpush1.bf16.msra.mxu0 %v2130
      %2900 = vmatprep.subr.bf16.mxu0 %v2133
      %2901 = vmatpush1.bf16.msra.mxu0 %v2132
      %2902 = vmatprep.subr.bf16.mxu0 %v2135
      %2903 = vmatpush1.bf16.msra.mxu0 %v2134
      %2904 = vmatprep.subr.bf16.mxu0 %v2137
      %2905 = vmatpush1.bf16.msra.mxu0 %v2136
      %2906 = vmatprep.subr.bf16.mxu0 %v2139
      %2907 = vmatpush1.bf16.msra.mxu0 %v2138
      %2908 = vmatprep.subr.bf16.mxu0 %v2141
      %2909 = vmatpush1.bf16.msra.mxu0 %v2140
      %2910 = vmatprep.subr.bf16.mxu0 %v2143
      %2911 = vmatpush1.bf16.msra.mxu0 %v2142
      %2912 = vmatprep.subr.bf16.mxu0 %v2145
      %2913 = vmatpush1.bf16.msra.mxu0 %v2144
      %2914 = vmatprep.subr.bf16.mxu0 %v2147
      %2915 = vmatpush1.bf16.msra.mxu0 %v2146
      %2916 = vmatprep.subr.bf16.mxu0 %v2149
      %2917 = vmatpush1.bf16.msra.mxu0 %v2148
      %2918 = vmatprep.subr.bf16.mxu0 %v2151
      %2919 = vmatpush1.bf16.msra.mxu0 %v2150
      %2920 = vmatprep.mubr.bf16.mxu0 %v857
      %2921 = vmatmul.mubr.bf16.gmra.mrb[0].mxu0 %v849
      %v2922 = vpop.f32.mrb[0].mxu0
      %v2923 = vadd.f32 %v829, %v2922
      %v2924 = vpop.f32.mrb[0].mxu0
      %v2925 = vadd.f32 %v833, %v2924
      %v2926 = vpop.f32.mrb[0].mxu0
      %v2927 = vpop.f32.mrb[0].mxu0
      %2928 = vdwg.mxu0
      %2929 = vmatprep.subr.bf16.mxu0 %v2153
      %2930 = vmatpush1.bf16.msra.mxu0 %v2152
      %2931 = vmatprep.subr.bf16.mxu0 %v2155
      %2932 = vmatpush1.bf16.msra.mxu0 %v2154
      %2933 = vmatprep.subr.bf16.mxu0 %v2157
      %2934 = vmatpush1.bf16.msra.mxu0 %v2156
      %2935 = vmatprep.subr.bf16.mxu0 %v2159
      %2936 = vmatpush1.bf16.msra.mxu0 %v2158
      %2937 = vmatprep.subr.bf16.mxu0 %v2161
      %2938 = vmatpush1.bf16.msra.mxu0 %v2160
      %2939 = vmatprep.subr.bf16.mxu0 %v2163
      %2940 = vmatpush1.bf16.msra.mxu0 %v2162
      %2941 = vmatprep.subr.bf16.mxu0 %v2165
      %2942 = vmatpush1.bf16.msra.mxu0 %v2164
      %2943 = vmatprep.subr.bf16.mxu0 %v2167
      %2944 = vmatpush1.bf16.msra.mxu0 %v2166
      %2945 = vmatprep.subr.bf16.mxu0 %v2169
      %2946 = vmatpush1.bf16.msra.mxu0 %v2168
      %2947 = vmatprep.subr.bf16.mxu0 %v2171
      %2948 = vmatpush1.bf16.msra.mxu0 %v2170
      %2949 = vmatprep.subr.bf16.mxu0 %v2173
      %2950 = vmatpush1.bf16.msra.mxu0 %v2172
      %2951 = vmatprep.subr.bf16.mxu0 %v2175
      %2952 = vmatpush1.bf16.msra.mxu0 %v2174
      %2953 = vmatprep.subr.bf16.mxu0 %v2177
      %2954 = vmatpush1.bf16.msra.mxu0 %v2176
      %2955 = vmatprep.subr.bf16.mxu0 %v2179
      %2956 = vmatpush1.bf16.msra.mxu0 %v2178
      %2957 = vmatprep.subr.bf16.mxu0 %v2181
      %2958 = vmatpush1.bf16.msra.mxu0 %v2180
      %2959 = vmatprep.subr.bf16.mxu0 %v2183
      %2960 = vmatpush1.bf16.msra.mxu0 %v2182
      %2961 = vmatprep.mubr.bf16.mxu0 %v858
      %2962 = vmatmul.mubr.bf16.gmra.mrb[0].mxu0 %v856
      %v2963 = vpop.f32.mrb[0].mxu0
      %v2964 = vadd.f32 %v2923, %v2963
      %v2965 = vpop.f32.mrb[0].mxu0
      %v2966 = vadd.f32 %v2925, %v2965
      %v2967 = vpop.f32.mrb[0].mxu0
      %v2968 = vpop.f32.mrb[0].mxu0
      %2969 = vdwg.mxu0
      %2970 = vmatprep.subr.bf16.mxu0 %v2185
      %2971 = vmatpush1.bf16.msra.mxu0 %v2184
      %2972 = vmatprep.subr.bf16.mxu0 %v2187
      %2973 = vmatpush1.bf16.msra.mxu0 %v2186
      %2974 = vmatprep.subr.bf16.mxu0 %v2189
      %2975 = vmatpush1.bf16.msra.mxu0 %v2188
      %2976 = vmatprep.subr.bf16.mxu0 %v2191
      %2977 = vmatpush1.bf16.msra.mxu0 %v2190
      %2978 = vmatprep.subr.bf16.mxu0 %v2193
      %2979 = vmatpush1.bf16.msra.mxu0 %v2192
      %2980 = vmatprep.subr.bf16.mxu0 %v2195
      %2981 = vmatpush1.bf16.msra.mxu0 %v2194
      %2982 = vmatprep.subr.bf16.mxu0 %v2197
      %2983 = vmatpush1.bf16.msra.mxu0 %v2196
      %2984 = vmatprep.subr.bf16.mxu0 %v2199
      %2985 = vmatpush1.bf16.msra.mxu0 %v2198
      %2986 = vmatprep.subr.bf16.mxu0 %v2201
      %2987 = vmatpush1.bf16.msra.mxu0 %v2200
      %2988 = vmatprep.subr.bf16.mxu0 %v2203
      %2989 = vmatpush1.bf16.msra.mxu0 %v2202
      %2990 = vmatprep.subr.bf16.mxu0 %v2205
      %2991 = vmatpush1.bf16.msra.mxu0 %v2204
      %2992 = vmatprep.subr.bf16.mxu0 %v2207
      %2993 = vmatpush1.bf16.msra.mxu0 %v2206
      %2994 = vmatprep.subr.bf16.mxu0 %v2209
      %2995 = vmatpush1.bf16.msra.mxu0 %v2208
      %2996 = vmatprep.subr.bf16.mxu0 %v2211
      %2997 = vmatpush1.bf16.msra.mxu0 %v2210
      %2998 = vmatprep.subr.bf16.mxu0 %v2213
      %2999 = vmatpush1.bf16.msra.mxu0 %v2212
      %3000 = vmatprep.subr.bf16.mxu0 %v2215
      %3001 = vmatpush1.bf16.msra.mxu0 %v2214
      %3002 = vmatprep.mubr.bf16.mxu0 %v874
      %3003 = vmatmul.mubr.bf16.gmra.mrb[0].mxu0 %v866
      %v3004 = vpop.f32.mrb[0].mxu0
      %v3005 = vadd.f32 %v2964, %v3004
      %v3006 = vpop.f32.mrb[0].mxu0
      %v3007 = vadd.f32 %v2966, %v3006
      %v3008 = vpop.f32.mrb[0].mxu0
      %v3009 = vpop.f32.mrb[0].mxu0
      %3010 = vdwg.mxu0
      %3011 = vmatprep.subr.bf16.mxu0 %v2217
      %3012 = vmatpush1.bf16.msra.mxu0 %v2216
      %3013 = vmatprep.subr.bf16.mxu0 %v2219
      %3014 = vmatpush1.bf16.msra.mxu0 %v2218
      %3015 = vmatprep.subr.bf16.mxu0 %v2221
      %3016 = vmatpush1.bf16.msra.mxu0 %v2220
      %3017 = vmatprep.subr.bf16.mxu0 %v2223
      %3018 = vmatpush1.bf16.msra.mxu0 %v2222
      %3019 = vmatprep.subr.bf16.mxu0 %v2225
      %3020 = vmatpush1.bf16.msra.mxu0 %v2224
      %3021 = vmatprep.subr.bf16.mxu0 %v2227
      %3022 = vmatpush1.bf16.msra.mxu0 %v2226
      %3023 = vmatprep.subr.bf16.mxu0 %v2229
      %3024 = vmatpush1.bf16.msra.mxu0 %v2228
      %3025 = vmatprep.subr.bf16.mxu0 %v2231
      %3026 = vmatpush1.bf16.msra.mxu0 %v2230
      %3027 = vmatprep.subr.bf16.mxu0 %v2233
      %3028 = vmatpush1.bf16.msra.mxu0 %v2232
      %3029 = vmatprep.subr.bf16.mxu0 %v2235
      %3030 = vmatpush1.bf16.msra.mxu0 %v2234
      %3031 = vmatprep.subr.bf16.mxu0 %v2237
      %3032 = vmatpush1.bf16.msra.mxu0 %v2236
      %3033 = vmatprep.subr.bf16.mxu0 %v2239
      %3034 = vmatpush1.bf16.msra.mxu0 %v2238
      %3035 = vmatprep.subr.bf16.mxu0 %v2241
      %3036 = vmatpush1.bf16.msra.mxu0 %v2240
      %3037 = vmatprep.subr.bf16.mxu0 %v2243
      %3038 = vmatpush1.bf16.msra.mxu0 %v2242
      %3039 = vmatprep.subr.bf16.mxu0 %v2245
      %3040 = vmatpush1.bf16.msra.mxu0 %v2244
      %3041 = vmatprep.subr.bf16.mxu0 %v2247
      %3042 = vmatpush1.bf16.msra.mxu0 %v2246
      %3043 = vmatprep.mubr.bf16.mxu0 %v875
      %3044 = vmatmul.mubr.bf16.gmra.mrb[0].mxu0 %v873
      %v3045 = vpop.f32.mrb[0].mxu0
      %v3046 = vadd.f32 %v3005, %v3045
      %v3047 = vpop.f32.mrb[0].mxu0
      %v3048 = vadd.f32 %v3007, %v3047
      %v3049 = vpop.f32.mrb[0].mxu0
      %v3050 = vpop.f32.mrb[0].mxu0
      %3051 = vdwg.mxu0
      %3052 = vmatprep.subr.bf16.mxu0 %v2249
      %3053 = vmatpush1.bf16.msra.mxu0 %v2248
      %3054 = vmatprep.subr.bf16.mxu0 %v2251
      %3055 = vmatpush1.bf16.msra.mxu0 %v2250
      %3056 = vmatprep.subr.bf16.mxu0 %v2253
      %3057 = vmatpush1.bf16.msra.mxu0 %v2252
      %3058 = vmatprep.subr.bf16.mxu0 %v2255
      %3059 = vmatpush1.bf16.msra.mxu0 %v2254
      %3060 = vmatprep.subr.bf16.mxu0 %v2257
      %3061 = vmatpush1.bf16.msra.mxu0 %v2256
      %3062 = vmatprep.subr.bf16.mxu0 %v2259
      %3063 = vmatpush1.bf16.msra.mxu0 %v2258
      %3064 = vmatprep.subr.bf16.mxu0 %v2261
      %3065 = vmatpush1.bf16.msra.mxu0 %v2260
      %3066 = vmatprep.subr.bf16.mxu0 %v2263
      %3067 = vmatpush1.bf16.msra.mxu0 %v2262
      %3068 = vmatprep.subr.bf16.mxu0 %v2265
      %3069 = vmatpush1.bf16.msra.mxu0 %v2264
      %3070 = vmatprep.subr.bf16.mxu0 %v2267
      %3071 = vmatpush1.bf16.msra.mxu0 %v2266
      %3072 = vmatprep.subr.bf16.mxu0 %v2269
      %3073 = vmatpush1.bf16.msra.mxu0 %v2268
      %3074 = vmatprep.subr.bf16.mxu0 %v2271
      %3075 = vmatpush1.bf16.msra.mxu0 %v2270
      %3076 = vmatprep.subr.bf16.mxu0 %v2273
      %3077 = vmatpush1.bf16.msra.mxu0 %v2272
      %3078 = vmatprep.subr.bf16.mxu0 %v2275
      %3079 = vmatpush1.bf16.msra.mxu0 %v2274
      %3080 = vmatprep.subr.bf16.mxu0 %v2277
      %3081 = vmatpush1.bf16.msra.mxu0 %v2276
      %3082 = vmatprep.subr.bf16.mxu0 %v2279
      %3083 = vmatpush1.bf16.msra.mxu0 %v2278
      %3084 = vmatprep.mubr.bf16.mxu0 %v891
      %3085 = vmatmul.mubr.bf16.gmra.mrb[0].mxu0 %v883
      %v3086 = vpop.f32.mrb[0].mxu0
      %v3087 = vadd.f32 %v3046, %v3086
      %v3088 = vpop.f32.mrb[0].mxu0
      %v3089 = vadd.f32 %v3048, %v3088
      %v3090 = vpop.f32.mrb[0].mxu0
      %v3091 = vpop.f32.mrb[0].mxu0
      %3092 = vdwg.mxu0
      %3093 = vmatprep.subr.bf16.mxu0 %v2281
      %3094 = vmatpush1.bf16.msra.mxu0 %v2280
      %3095 = vmatprep.subr.bf16.mxu0 %v2283
      %3096 = vmatpush1.bf16.msra.mxu0 %v2282
      %3097 = vmatprep.subr.bf16.mxu0 %v2285
      %3098 = vmatpush1.bf16.msra.mxu0 %v2284
      %3099 = vmatprep.subr.bf16.mxu0 %v2287
      %3100 = vmatpush1.bf16.msra.mxu0 %v2286
      %3101 = vmatprep.subr.bf16.mxu0 %v2289
      %3102 = vmatpush1.bf16.msra.mxu0 %v2288
      %3103 = vmatprep.subr.bf16.mxu0 %v2291
      %3104 = vmatpush1.bf16.msra.mxu0 %v2290
      %3105 = vmatprep.subr.bf16.mxu0 %v2293
      %3106 = vmatpush1.bf16.msra.mxu0 %v2292
      %3107 = vmatprep.subr.bf16.mxu0 %v2295
      %3108 = vmatpush1.bf16.msra.mxu0 %v2294
      %3109 = vmatprep.subr.bf16.mxu0 %v2297
      %3110 = vmatpush1.bf16.msra.mxu0 %v2296
      %3111 = vmatprep.subr.bf16.mxu0 %v2299
      %3112 = vmatpush1.bf16.msra.mxu0 %v2298
      %3113 = vmatprep.subr.bf16.mxu0 %v2301
      %3114 = vmatpush1.bf16.msra.mxu0 %v2300
      %3115 = vmatprep.subr.bf16.mxu0 %v2303
      %3116 = vmatpush1.bf16.msra.mxu0 %v2302
      %3117 = vmatprep.subr.bf16.mxu0 %v2305
      %3118 = vmatpush1.bf16.msra.mxu0 %v2304
      %3119 = vmatprep.subr.bf16.mxu0 %v2307
      %3120 = vmatpush1.bf16.msra.mxu0 %v2306
      %3121 = vmatprep.subr.bf16.mxu0 %v2309
      %3122 = vmatpush1.bf16.msra.mxu0 %v2308
      %3123 = vmatprep.subr.bf16.mxu0 %v2311
      %3124 = vmatpush1.bf16.msra.mxu0 %v2310
      %3125 = vmatprep.mubr.bf16.mxu0 %v892
      %3126 = vmatmul.mubr.bf16.gmra.mrb[0].mxu0 %v890
      %v3127 = vpop.f32.mrb[0].mxu0
      %v3128 = vadd.f32 %v3087, %v3127
      %v3129 = vpop.f32.mrb[0].mxu0
      %v3130 = vadd.f32 %v3089, %v3129
      %v3131 = vpop.f32.mrb[0].mxu0
      %v3132 = vpop.f32.mrb[0].mxu0
      %3133 = vdwg.mxu0
      %3134 = vmatprep.subr.bf16.mxu0 %v2313
      %3135 = vmatpush1.bf16.msra.mxu0 %v2312
      %3136 = vmatprep.subr.bf16.mxu0 %v2315
      %3137 = vmatpush1.bf16.msra.mxu0 %v2314
      %3138 = vmatprep.subr.bf16.mxu0 %v2317
      %3139 = vmatpush1.bf16.msra.mxu0 %v2316
      %3140 = vmatprep.subr.bf16.mxu0 %v2319
      %3141 = vmatpush1.bf16.msra.mxu0 %v2318
      %3142 = vmatprep.subr.bf16.mxu0 %v2321
      %3143 = vmatpush1.bf16.msra.mxu0 %v2320
      %3144 = vmatprep.subr.bf16.mxu0 %v2323
      %3145 = vmatpush1.bf16.msra.mxu0 %v2322
      %3146 = vmatprep.subr.bf16.mxu0 %v2325
      %3147 = vmatpush1.bf16.msra.mxu0 %v2324
      %3148 = vmatprep.subr.bf16.mxu0 %v2327
      %3149 = vmatpush1.bf16.msra.mxu0 %v2326
      %3150 = vmatprep.subr.bf16.mxu0 %v2329
      %3151 = vmatpush1.bf16.msra.mxu0 %v2328
      %3152 = vmatprep.subr.bf16.mxu0 %v2331
      %3153 = vmatpush1.bf16.msra.mxu0 %v2330
      %3154 = vmatprep.subr.bf16.mxu0 %v2333
      %3155 = vmatpush1.bf16.msra.mxu0 %v2332
      %3156 = vmatprep.subr.bf16.mxu0 %v2335
      %3157 = vmatpush1.bf16.msra.mxu0 %v2334
      %3158 = vmatprep.subr.bf16.mxu0 %v2337
      %3159 = vmatpush1.bf16.msra.mxu0 %v2336
      %3160 = vmatprep.subr.bf16.mxu0 %v2339
      %3161 = vmatpush1.bf16.msra.mxu0 %v2338
      %3162 = vmatprep.subr.bf16.mxu0 %v2341
      %3163 = vmatpush1.bf16.msra.mxu0 %v2340
      %3164 = vmatprep.subr.bf16.mxu0 %v2343
      %3165 = vmatpush1.bf16.msra.mxu0 %v2342
      %3166 = vmatprep.mubr.bf16.mxu0 %v908
      %3167 = vmatmul.mubr.bf16.gmra.mrb[0].mxu0 %v900
      %v3168 = vpop.f32.mrb[0].mxu0
      %v3169 = vadd.f32 %v3128, %v3168
      %v3170 = vpop.f32.mrb[0].mxu0
      %v3171 = vadd.f32 %v3130, %v3170
      %v3172 = vpop.f32.mrb[0].mxu0
      %v3173 = vpop.f32.mrb[0].mxu0
      %3174 = vdwg.mxu0
      %3175 = vmatprep.subr.bf16.mxu0 %v2345
      %3176 = vmatpush1.bf16.msra.mxu0 %v2344
      %3177 = vmatprep.subr.bf16.mxu0 %v2347
      %3178 = vmatpush1.bf16.msra.mxu0 %v2346
      %3179 = vmatprep.subr.bf16.mxu0 %v2349
      %3180 = vmatpush1.bf16.msra.mxu0 %v2348
      %3181 = vmatprep.subr.bf16.mxu0 %v2351
      %3182 = vmatpush1.bf16.msra.mxu0 %v2350
      %3183 = vmatprep.subr.bf16.mxu0 %v2353
      %3184 = vmatpush1.bf16.msra.mxu0 %v2352
      %3185 = vmatprep.subr.bf16.mxu0 %v2355
      %3186 = vmatpush1.bf16.msra.mxu0 %v2354
      %3187 = vmatprep.subr.bf16.mxu0 %v2357
      %3188 = vmatpush1.bf16.msra.mxu0 %v2356
      %3189 = vmatprep.subr.bf16.mxu0 %v2359
      %3190 = vmatpush1.bf16.msra.mxu0 %v2358
      %3191 = vmatprep.subr.bf16.mxu0 %v2361
      %3192 = vmatpush1.bf16.msra.mxu0 %v2360
      %3193 = vmatprep.subr.bf16.mxu0 %v2363
      %3194 = vmatpush1.bf16.msra.mxu0 %v2362
      %3195 = vmatprep.subr.bf16.mxu0 %v2365
      %3196 = vmatpush1.bf16.msra.mxu0 %v2364
      %3197 = vmatprep.subr.bf16.mxu0 %v2367
      %3198 = vmatpush1.bf16.msra.mxu0 %v2366
      %3199 = vmatprep.subr.bf16.mxu0 %v2369
      %3200 = vmatpush1.bf16.msra.mxu0 %v2368
      %3201 = vmatprep.subr.bf16.mxu0 %v2371
      %3202 = vmatpush1.bf16.msra.mxu0 %v2370
      %3203 = vmatprep.subr.bf16.mxu0 %v2373
      %3204 = vmatpush1.bf16.msra.mxu0 %v2372
      %3205 = vmatprep.subr.bf16.mxu0 %v2375
      %3206 = vmatpush1.bf16.msra.mxu0 %v2374
      %3207 = vmatprep.mubr.bf16.mxu0 %v909
      %3208 = vmatmul.mubr.bf16.gmra.mrb[0].mxu0 %v907
      %v3209 = vpop.f32.mrb[0].mxu0
      %v3210 = vadd.f32 %v3169, %v3209
      %v3211 = vpop.f32.mrb[0].mxu0
      %v3212 = vadd.f32 %v3171, %v3211
      %v3213 = vpop.f32.mrb[0].mxu0
      %v3214 = vpop.f32.mrb[0].mxu0
      %3215 = vdwg.mxu0
      %3216 = vmatprep.subr.bf16.mxu0 %v2377
      %3217 = vmatpush1.bf16.msra.mxu0 %v2376
      %3218 = vmatprep.subr.bf16.mxu0 %v2379
      %3219 = vmatpush1.bf16.msra.mxu0 %v2378
      %3220 = vmatprep.subr.bf16.mxu0 %v2381
      %3221 = vmatpush1.bf16.msra.mxu0 %v2380
      %3222 = vmatprep.subr.bf16.mxu0 %v2383
      %3223 = vmatpush1.bf16.msra.mxu0 %v2382
      %3224 = vmatprep.subr.bf16.mxu0 %v2385
      %3225 = vmatpush1.bf16.msra.mxu0 %v2384
      %3226 = vmatprep.subr.bf16.mxu0 %v2387
      %3227 = vmatpush1.bf16.msra.mxu0 %v2386
      %3228 = vmatprep.subr.bf16.mxu0 %v2389
      %3229 = vmatpush1.bf16.msra.mxu0 %v2388
      %3230 = vmatprep.subr.bf16.mxu0 %v2391
      %3231 = vmatpush1.bf16.msra.mxu0 %v2390
      %3232 = vmatprep.subr.bf16.mxu0 %v2393
      %3233 = vmatpush1.bf16.msra.mxu0 %v2392
      %3234 = vmatprep.subr.bf16.mxu0 %v2395
      %3235 = vmatpush1.bf16.msra.mxu0 %v2394
      %3236 = vmatprep.subr.bf16.mxu0 %v2397
      %3237 = vmatpush1.bf16.msra.mxu0 %v2396
      %3238 = vmatprep.subr.bf16.mxu0 %v2399
      %3239 = vmatpush1.bf16.msra.mxu0 %v2398
      %3240 = vmatprep.subr.bf16.mxu0 %v2401
      %3241 = vmatpush1.bf16.msra.mxu0 %v2400
      %3242 = vmatprep.subr.bf16.mxu0 %v2403
      %3243 = vmatpush1.bf16.msra.mxu0 %v2402
      %3244 = vmatprep.subr.bf16.mxu0 %v2405
      %3245 = vmatpush1.bf16.msra.mxu0 %v2404
      %3246 = vmatprep.subr.bf16.mxu0 %v2407
      %3247 = vmatpush1.bf16.msra.mxu0 %v2406
      %3248 = vmatprep.mubr.bf16.mxu0 %v925
      %3249 = vmatmul.mubr.bf16.gmra.mrb[0].mxu0 %v917
      %v3250 = vpop.f32.mrb[0].mxu0
      %v3251 = vadd.f32 %v3210, %v3250
      %v3252 = vpop.f32.mrb[0].mxu0
      %v3253 = vadd.f32 %v3212, %v3252
      %v3254 = vpop.f32.mrb[0].mxu0
      %v3255 = vpop.f32.mrb[0].mxu0
      %3256 = vdwg.mxu0
      %3257 = vmatprep.subr.bf16.mxu0 %v2409
      %3258 = vmatpush1.bf16.msra.mxu0 %v2408
      %3259 = vmatprep.subr.bf16.mxu0 %v2411
      %3260 = vmatpush1.bf16.msra.mxu0 %v2410
      %3261 = vmatprep.subr.bf16.mxu0 %v2413
      %3262 = vmatpush1.bf16.msra.mxu0 %v2412
      %3263 = vmatprep.subr.bf16.mxu0 %v2415
      %3264 = vmatpush1.bf16.msra.mxu0 %v2414
      %3265 = vmatprep.subr.bf16.mxu0 %v2417
      %3266 = vmatpush1.bf16.msra.mxu0 %v2416
      %3267 = vmatprep.subr.bf16.mxu0 %v2419
      %3268 = vmatpush1.bf16.msra.mxu0 %v2418
      %3269 = vmatprep.subr.bf16.mxu0 %v2421
      %3270 = vmatpush1.bf16.msra.mxu0 %v2420
      %3271 = vmatprep.subr.bf16.mxu0 %v2423
      %3272 = vmatpush1.bf16.msra.mxu0 %v2422
      %3273 = vmatprep.subr.bf16.mxu0 %v2425
      %3274 = vmatpush1.bf16.msra.mxu0 %v2424
      %3275 = vmatprep.subr.bf16.mxu0 %v2427
      %3276 = vmatpush1.bf16.msra.mxu0 %v2426
      %3277 = vmatprep.subr.bf16.mxu0 %v2429
      %3278 = vmatpush1.bf16.msra.mxu0 %v2428
      %3279 = vmatprep.subr.bf16.mxu0 %v2431
      %3280 = vmatpush1.bf16.msra.mxu0 %v2430
      %3281 = vmatprep.subr.bf16.mxu0 %v2433
      %3282 = vmatpush1.bf16.msra.mxu0 %v2432
      %3283 = vmatprep.subr.bf16.mxu0 %v2435
      %3284 = vmatpush1.bf16.msra.mxu0 %v2434
      %3285 = vmatprep.subr.bf16.mxu0 %v2437
      %3286 = vmatpush1.bf16.msra.mxu0 %v2436
      %3287 = vmatprep.subr.bf16.mxu0 %v2439
      %3288 = vmatpush1.bf16.msra.mxu0 %v2438
      %3289 = vmatprep.mubr.bf16.mxu0 %v926
      %3290 = vmatmul.mubr.bf16.gmra.mrb[0].mxu0 %v924
      %v3291 = vpop.f32.mrb[0].mxu0
      %v3292 = vadd.f32 %v3251, %v3291
      %v3293 = vpop.f32.mrb[0].mxu0
      %v3294 = vadd.f32 %v3253, %v3293
      %v3295 = vpop.f32.mrb[0].mxu0
      %v3296 = vpop.f32.mrb[0].mxu0
      %3297 = vdwg.mxu0
      %3298 = vmatprep.subr.bf16.mxu0 %v2441
      %3299 = vmatpush1.bf16.msra.mxu0 %v2440
      %3300 = vmatprep.subr.bf16.mxu0 %v2443
      %3301 = vmatpush1.bf16.msra.mxu0 %v2442
      %3302 = vmatprep.subr.bf16.mxu0 %v2445
      %3303 = vmatpush1.bf16.msra.mxu0 %v2444
      %3304 = vmatprep.subr.bf16.mxu0 %v2447
      %3305 = vmatpush1.bf16.msra.mxu0 %v2446
      %3306 = vmatprep.subr.bf16.mxu0 %v2449
      %3307 = vmatpush1.bf16.msra.mxu0 %v2448
      %3308 = vmatprep.subr.bf16.mxu0 %v2451
      %3309 = vmatpush1.bf16.msra.mxu0 %v2450
      %3310 = vmatprep.subr.bf16.mxu0 %v2453
      %3311 = vmatpush1.bf16.msra.mxu0 %v2452
      %3312 = vmatprep.subr.bf16.mxu0 %v2455
      %3313 = vmatpush1.bf16.msra.mxu0 %v2454
      %3314 = vmatprep.subr.bf16.mxu0 %v2457
      %3315 = vmatpush1.bf16.msra.mxu0 %v2456
      %3316 = vmatprep.subr.bf16.mxu0 %v2459
      %3317 = vmatpush1.bf16.msra.mxu0 %v2458
      %3318 = vmatprep.subr.bf16.mxu0 %v2461
      %3319 = vmatpush1.bf16.msra.mxu0 %v2460
      %3320 = vmatprep.subr.bf16.mxu0 %v2463
      %3321 = vmatpush1.bf16.msra.mxu0 %v2462
      %3322 = vmatprep.subr.bf16.mxu0 %v2465
      %3323 = vmatpush1.bf16.msra.mxu0 %v2464
      %3324 = vmatprep.subr.bf16.mxu0 %v2467
      %3325 = vmatpush1.bf16.msra.mxu0 %v2466
      %3326 = vmatprep.subr.bf16.mxu0 %v2469
      %3327 = vmatpush1.bf16.msra.mxu0 %v2468
      %3328 = vmatprep.subr.bf16.mxu0 %v2471
      %3329 = vmatpush1.bf16.msra.mxu0 %v2470
      %3330 = vmatprep.mubr.bf16.mxu0 %v942
      %3331 = vmatmul.mubr.bf16.gmra.mrb[0].mxu0 %v934
      %v3332 = vpop.f32.mrb[0].mxu0
      %v3333 = vadd.f32 %v3292, %v3332
      %v3334 = vpop.f32.mrb[0].mxu0
      %v3335 = vadd.f32 %v3294, %v3334
      %v3336 = vpop.f32.mrb[0].mxu0
      %v3337 = vpop.f32.mrb[0].mxu0
      %3338 = vdwg.mxu0
      %3339 = vmatprep.subr.bf16.mxu0 %v2473
      %3340 = vmatpush1.bf16.msra.mxu0 %v2472
      %3341 = vmatprep.subr.bf16.mxu0 %v2475
      %3342 = vmatpush1.bf16.msra.mxu0 %v2474
      %3343 = vmatprep.subr.bf16.mxu0 %v2477
      %3344 = vmatpush1.bf16.msra.mxu0 %v2476
      %3345 = vmatprep.subr.bf16.mxu0 %v2479
      %3346 = vmatpush1.bf16.msra.mxu0 %v2478
      %3347 = vmatprep.subr.bf16.mxu0 %v2481
      %3348 = vmatpush1.bf16.msra.mxu0 %v2480
      %3349 = vmatprep.subr.bf16.mxu0 %v2483
      %3350 = vmatpush1.bf16.msra.mxu0 %v2482
      %3351 = vmatprep.subr.bf16.mxu0 %v2485
      %3352 = vmatpush1.bf16.msra.mxu0 %v2484
      %3353 = vmatprep.subr.bf16.mxu0 %v2487
      %3354 = vmatpush1.bf16.msra.mxu0 %v2486
      %3355 = vmatprep.subr.bf16.mxu0 %v2489
      %3356 = vmatpush1.bf16.msra.mxu0 %v2488
      %3357 = vmatprep.subr.bf16.mxu0 %v2491
      %3358 = vmatpush1.bf16.msra.mxu0 %v2490
      %3359 = vmatprep.subr.bf16.mxu0 %v2493
      %3360 = vmatpush1.bf16.msra.mxu0 %v2492
      %3361 = vmatprep.subr.bf16.mxu0 %v2495
      %3362 = vmatpush1.bf16.msra.mxu0 %v2494
      %3363 = vmatprep.subr.bf16.mxu0 %v2497
      %3364 = vmatpush1.bf16.msra.mxu0 %v2496
      %3365 = vmatprep.subr.bf16.mxu0 %v2499
      %3366 = vmatpush1.bf16.msra.mxu0 %v2498
      %3367 = vmatprep.subr.bf16.mxu0 %v2501
      %3368 = vmatpush1.bf16.msra.mxu0 %v2500
      %3369 = vmatprep.subr.bf16.mxu0 %v2503
      %3370 = vmatpush1.bf16.msra.mxu0 %v2502
      %3371 = vmatprep.mubr.bf16.mxu0 %v943
      %3372 = vmatmul.mubr.bf16.gmra.mrb[0].mxu0 %v941
      %v3373 = vpop.f32.mrb[0].mxu0
      %v3374 = vadd.f32 %v3333, %v3373
      %v3375 = vpop.f32.mrb[0].mxu0
      %v3376 = vadd.f32 %v3335, %v3375
      %v3377 = vpop.f32.mrb[0].mxu0
      %v3378 = vpop.f32.mrb[0].mxu0
      %3379 = vdwg.mxu0
      %vm3380 = vcmp.ge.f32.partialorder %v3374, 0.0
      %vm3381 = vcmp.ge.f32.partialorder %v3376, 0.0
      %v3382 = vmul.f32 %v3374, 0.01
      %v3383 = vmul.f32 %v3376, 0.01
      %v3384 = vsel %vm3380, %v3374, %v3382
      %v3385 = vsel %vm3381, %v3376, %v3383
      %v3386 = vpack.c.bf16 %v3384, %v3384
      %v3387 = vpack.c.bf16 %v3385, %v3385
      %v3388 = vld [vmem:[%s6] sm:$0xff]
      %v3389 = vld [vmem:[%s6 + $0x8] sm:$0xff]
      %v3390 = vld [vmem:[%s6 + $0x10] sm:$0xff]
      %v3391 = vld [vmem:[%s6 + $0x18] sm:$0xff]
      %v3392 = vld [vmem:[%s6 + $0x20] sm:$0xff]
      %v3393 = vld [vmem:[%s6 + $0x28] sm:$0xff]
      %v3394 = vld [vmem:[%s6 + $0x30] sm:$0xff]
      %v3395 = vld [vmem:[%s6 + $0x38] sm:$0xff]
      %v3396 = vld [vmem:[%s6 + $0x40] sm:$0xff]
      %v3397 = vld [vmem:[%s6 + $0x48] sm:$0xff]
      %v3398 = vld [vmem:[%s6 + $0x50] sm:$0xff]
      %v3399 = vld [vmem:[%s6 + $0x58] sm:$0xff]
      %v3400 = vld [vmem:[%s6 + $0x60] sm:$0xff]
      %v3401 = vld [vmem:[%s6 + $0x68] sm:$0xff]
      %v3402 = vld [vmem:[%s6 + $0x70] sm:$0xff]
      %v3403 = vld [vmem:[%s6 + $0x78] sm:$0xff]
      %v3404 = vld [vmem:[%s6 + $0x80] sm:$0xff]
      %v3405 = vld [vmem:[%s6 + $0x88] sm:$0xff]
      %v3406 = vld [vmem:[%s6 + $0x90] sm:$0xff]
      %v3407 = vld [vmem:[%s6 + $0x98] sm:$0xff]
      %v3408 = vld [vmem:[%s6 + $0xa0] sm:$0xff]
      %v3409 = vld [vmem:[%s6 + $0xa8] sm:$0xff]
      %v3410 = vld [vmem:[%s6 + $0xb0] sm:$0xff]
      %v3411 = vld [vmem:[%s6 + $0xb8] sm:$0xff]
      %v3412 = vld [vmem:[%s6 + $0xc0] sm:$0xff]
      %v3413 = vld [vmem:[%s6 + $0xc8] sm:$0xff]
      %v3414 = vld [vmem:[%s6 + $0xd0] sm:$0xff]
      %v3415 = vld [vmem:[%s6 + $0xd8] sm:$0xff]
      %v3416 = vld [vmem:[%s6 + $0xe0] sm:$0xff]
      %v3417 = vld [vmem:[%s6 + $0xe8] sm:$0xff]
      %v3418 = vld [vmem:[%s6 + $0xf0] sm:$0xff]
      %v3419 = vld [vmem:[%s6 + $0xf8] sm:$0xff]
      %v3452 = vunpack.c.l.b16 %v3388
      %v3453 = vunpack.c.h.b16 %v3388
      %v3454 = vunpack.c.l.b16 %v3389
      %v3455 = vunpack.c.h.b16 %v3389
      %v3456 = vunpack.c.l.b16 %v3390
      %v3457 = vunpack.c.h.b16 %v3390
      %v3458 = vunpack.c.l.b16 %v3391
      %v3459 = vunpack.c.h.b16 %v3391
      %v3460 = vunpack.c.l.b16 %v3392
      %v3461 = vunpack.c.h.b16 %v3392
      %v3462 = vunpack.c.l.b16 %v3393
      %v3463 = vunpack.c.h.b16 %v3393
      %v3464 = vunpack.c.l.b16 %v3394
      %v3465 = vunpack.c.h.b16 %v3394
      %v3466 = vunpack.c.l.b16 %v3395
      %v3467 = vunpack.c.h.b16 %v3395
      %v3468 = vunpack.c.l.b16 %v3396
      %v3469 = vunpack.c.h.b16 %v3396
      %v3470 = vunpack.c.l.b16 %v3397
      %v3471 = vunpack.c.h.b16 %v3397
      %v3472 = vunpack.c.l.b16 %v3398
      %v3473 = vunpack.c.h.b16 %v3398
      %v3474 = vunpack.c.l.b16 %v3399
      %v3475 = vunpack.c.h.b16 %v3399
      %v3476 = vunpack.c.l.b16 %v3400
      %v3477 = vunpack.c.h.b16 %v3400
      %v3478 = vunpack.c.l.b16 %v3401
      %v3479 = vunpack.c.h.b16 %v3401
      %v3480 = vunpack.c.l.b16 %v3402
      %v3481 = vunpack.c.h.b16 %v3402
      %v3482 = vunpack.c.l.b16 %v3403
      %v3483 = vunpack.c.h.b16 %v3403
      %v3484 = vunpack.c.l.b16 %v3404
      %v3485 = vunpack.c.h.b16 %v3404
      %v3486 = vunpack.c.l.b16 %v3405
      %v3487 = vunpack.c.h.b16 %v3405
      %v3488 = vunpack.c.l.b16 %v3406
      %v3489 = vunpack.c.h.b16 %v3406
      %v3490 = vunpack.c.l.b16 %v3407
      %v3491 = vunpack.c.h.b16 %v3407
      %v3492 = vunpack.c.l.b16 %v3408
      %v3493 = vunpack.c.h.b16 %v3408
      %v3494 = vunpack.c.l.b16 %v3409
      %v3495 = vunpack.c.h.b16 %v3409
      %v3496 = vunpack.c.l.b16 %v3410
      %v3497 = vunpack.c.h.b16 %v3410
      %v3498 = vunpack.c.l.b16 %v3411
      %v3499 = vunpack.c.h.b16 %v3411
      %v3500 = vunpack.c.l.b16 %v3412
      %v3501 = vunpack.c.h.b16 %v3412
      %v3502 = vunpack.c.l.b16 %v3413
      %v3503 = vunpack.c.h.b16 %v3413
      %v3504 = vunpack.c.l.b16 %v3414
      %v3505 = vunpack.c.h.b16 %v3414
      %v3506 = vunpack.c.l.b16 %v3415
      %v3507 = vunpack.c.h.b16 %v3415
      %v3508 = vunpack.c.l.b16 %v3416
      %v3509 = vunpack.c.h.b16 %v3416
      %v3510 = vunpack.c.l.b16 %v3417
      %v3511 = vunpack.c.h.b16 %v3417
      %v3512 = vunpack.c.l.b16 %v3418
      %v3513 = vunpack.c.h.b16 %v3418
      %v3514 = vunpack.c.l.b16 %v3419
      %v3515 = vunpack.c.h.b16 %v3419
      %v3516 = vpack.c.b16 %v3454, %v3452
      %v3517 = vpack.c.b16 %v3455, %v3453
      %v3518 = vpack.c.b16 %v3458, %v3456
      %v3519 = vpack.c.b16 %v3459, %v3457
      %v3520 = vpack.c.b16 %v3462, %v3460
      %v3521 = vpack.c.b16 %v3463, %v3461
      %v3522 = vpack.c.b16 %v3466, %v3464
      %v3523 = vpack.c.b16 %v3467, %v3465
      %v3524 = vpack.c.b16 %v3470, %v3468
      %v3525 = vpack.c.b16 %v3471, %v3469
      %v3526 = vpack.c.b16 %v3474, %v3472
      %v3527 = vpack.c.b16 %v3475, %v3473
      %v3528 = vpack.c.b16 %v3478, %v3476
      %v3529 = vpack.c.b16 %v3479, %v3477
      %v3530 = vpack.c.b16 %v3482, %v3480
      %v3531 = vpack.c.b16 %v3483, %v3481
      %v3532 = vpack.c.b16 %v3486, %v3484
      %v3533 = vpack.c.b16 %v3487, %v3485
      %v3534 = vpack.c.b16 %v3490, %v3488
      %v3535 = vpack.c.b16 %v3491, %v3489
      %v3536 = vpack.c.b16 %v3494, %v3492
      %v3537 = vpack.c.b16 %v3495, %v3493
      %v3538 = vpack.c.b16 %v3498, %v3496
      %v3539 = vpack.c.b16 %v3499, %v3497
      %v3540 = vpack.c.b16 %v3502, %v3500
      %v3541 = vpack.c.b16 %v3503, %v3501
      %v3542 = vpack.c.b16 %v3506, %v3504
      %v3543 = vpack.c.b16 %v3507, %v3505
      %v3544 = vpack.c.b16 %v3510, %v3508
      %v3545 = vpack.c.b16 %v3511, %v3509
      %v3546 = vpack.c.b16 %v3514, %v3512
      %v3547 = vpack.c.b16 %v3515, %v3513
      %3580 = vmatprep.subr.bf16.mxu0 %v3517
      %3581 = vmatpush1.bf16.msra.mxu0 %v3516
      %3582 = vmatprep.subr.bf16.mxu0 %v3519
      %3583 = vmatpush1.bf16.msra.mxu0 %v3518
      %3584 = vmatprep.subr.bf16.mxu0 %v3521
      %3585 = vmatpush1.bf16.msra.mxu0 %v3520
      %3586 = vmatprep.subr.bf16.mxu0 %v3523
      %3587 = vmatpush1.bf16.msra.mxu0 %v3522
      %3588 = vmatprep.subr.bf16.mxu0 %v3525
      %3589 = vmatpush1.bf16.msra.mxu0 %v3524
      %3590 = vmatprep.subr.bf16.mxu0 %v3527
      %3591 = vmatpush1.bf16.msra.mxu0 %v3526
      %3592 = vmatprep.subr.bf16.mxu0 %v3529
      %3593 = vmatpush1.bf16.msra.mxu0 %v3528
      %3594 = vmatprep.subr.bf16.mxu0 %v3531
      %3595 = vmatpush1.bf16.msra.mxu0 %v3530
      %3596 = vmatprep.subr.bf16.mxu0 %v3533
      %3597 = vmatpush1.bf16.msra.mxu0 %v3532
      %3598 = vmatprep.subr.bf16.mxu0 %v3535
      %3599 = vmatpush1.bf16.msra.mxu0 %v3534
      %3600 = vmatprep.subr.bf16.mxu0 %v3537
      %3601 = vmatpush1.bf16.msra.mxu0 %v3536
      %3602 = vmatprep.subr.bf16.mxu0 %v3539
      %3603 = vmatpush1.bf16.msra.mxu0 %v3538
      %3604 = vmatprep.subr.bf16.mxu0 %v3541
      %3605 = vmatpush1.bf16.msra.mxu0 %v3540
      %3606 = vmatprep.subr.bf16.mxu0 %v3543
      %3607 = vmatpush1.bf16.msra.mxu0 %v3542
      %3608 = vmatprep.subr.bf16.mxu0 %v3545
      %3609 = vmatpush1.bf16.msra.mxu0 %v3544
      %3610 = vmatprep.subr.bf16.mxu0 %v3547
      %3611 = vmatpush1.bf16.msra.mxu0 %v3546
      %3612 = vmatprep.mubr.bf16.mxu0 %v3387
      %3613 = vmatmul.mubr.bf16.gmra.mrb[0].mxu0 %v3386
      %v3614 = vpop.f32.mrb[0].mxu0
      %v3615 = vadd.f32 0.0, %v3614
      %v3616 = vpop.f32.mrb[0].mxu0
      %v3617 = vadd.f32 0.0, %v3616
      %v3618 = vpop.f32.mrb[0].mxu0
      %v3619 = vpop.f32.mrb[0].mxu0
      %3620 = vdwg.mxu0
      %v3621 = vld [vmem:[%s11] sm:$0xf]
      %vm3622 = vcmask 15360
      %v3624 = vsel %vm3622, %v3621, 0
      %vm3626 = vcmask 1041408
      %v3628 = vsel %vm3626, %v3615, 0
      %v3631 = vsel %vm3626, %v3617, 0
      %3633 = vmatprep.subr.mxu0 %v3631
      %3634 = vmatpush1.msra.mxu0 %v3628
      %3635 = vmatprep.subr.mxu0 0.0
      %3636 = vmatpush1.msra.mxu0 0.0
      %3637 = vmatprep.subr.mxu0 0.0
      %3638 = vmatpush1.msra.mxu0 0.0
      %3639 = vmatprep.subr.mxu0 0.0
      %3640 = vmatpush1.msra.mxu0 0.0
      %3641 = vmatprep.subr.mxu0 0.0
      %3642 = vmatpush1.msra.mxu0 0.0
      %3643 = vmatprep.subr.mxu0 0.0
      %3644 = vmatpush1.msra.mxu0 0.0
      %3645 = vmatprep.subr.mxu0 0.0
      %3646 = vmatpush1.msra.mxu0 0.0
      %3647 = vmatprep.subr.mxu0 0.0
      %3648 = vmatpush1.msra.mxu0 0.0
      %3649 = vmatprep.subr.mxu0 0.0
      %3650 = vmatpush1.msra.mxu0 0.0
      %3651 = vmatprep.subr.mxu0 0.0
      %3652 = vmatpush1.msra.mxu0 0.0
      %3653 = vmatprep.subr.mxu0 0.0
      %3654 = vmatpush1.msra.mxu0 0.0
      %3655 = vmatprep.subr.mxu0 0.0
      %3656 = vmatpush1.msra.mxu0 0.0
      %3657 = vmatprep.subr.mxu0 0.0
      %3658 = vmatpush1.msra.mxu0 0.0
      %3659 = vmatprep.subr.mxu0 0.0
      %3660 = vmatpush1.msra.mxu0 0.0
      %3661 = vmatprep.subr.mxu0 0.0
      %3662 = vmatpush1.msra.mxu0 0.0
      %3663 = vmatprep.subr.mxu0 0.0
      %3664 = vmatpush1.msra.mxu0 0.0
      %3665 = vmatprep.subr.mxu0 0.0
      %3666 = vmatpush1.msra.mxu0 0.0
      %3667 = vmatprep.subr.mxu0 0.0
      %3668 = vmatpush1.msra.mxu0 0.0
      %3669 = vmatprep.subr.mxu0 0.0
      %3670 = vmatpush1.msra.mxu0 0.0
      %3671 = vmatprep.subr.mxu0 0.0
      %3672 = vmatpush1.msra.mxu0 0.0
      %3673 = vmatprep.subr.mxu0 0.0
      %3674 = vmatpush1.msra.mxu0 0.0
      %3675 = vmatprep.subr.mxu0 0.0
      %3676 = vmatpush1.msra.mxu0 0.0
      %3677 = vmatprep.subr.mxu0 0.0
      %3678 = vmatpush1.msra.mxu0 0.0
      %3679 = vmatprep.subr.mxu0 0.0
      %3680 = vmatpush1.msra.mxu0 0.0
      %3681 = vmatprep.subr.mxu0 0.0
      %3682 = vmatpush1.msra.mxu0 0.0
      %3683 = vmatprep.subr.mxu0 0.0
      %3684 = vmatpush1.msra.mxu0 0.0
      %3685 = vmatprep.subr.mxu0 0.0
      %3686 = vmatpush1.msra.mxu0 0.0
      %3687 = vmatprep.subr.mxu0 0.0
      %3688 = vmatpush1.msra.mxu0 0.0
      %3689 = vmatprep.subr.mxu0 0.0
      %3690 = vmatpush1.msra.mxu0 0.0
      %3691 = vmatprep.subr.mxu0 0.0
      %3692 = vmatpush1.msra.mxu0 0.0
      %3693 = vmatprep.subr.mxu0 0.0
      %3694 = vmatpush1.msra.mxu0 0.0
      %3695 = vmatprep.subr.mxu0 0.0
      %3696 = vmatpush1.msra.mxu0 0.0
      %3697 = vmatprep.mubr.f32.mxu0 0.0
      %3698 = vmatmul.mubr.f32.gmra.mrb[0].mxu0 %v3624
      %v3699 = vpop.f32.mrb[0].mxu0
      %v3700 = vadd.f32 0.0, %v3699
      %v3701 = vpop.f32.mrb[0].mxu0
      %v3702 = vadd.f32 0.0, %v3701
      %3703 = vdwg.mxu0
      %v3704 = vrot.slane %v3615, 2
      %v3705 = vrot.slane %v3617, 2
      %v3706 = vsel %vm3626, %v3704, 0
      %v3708 = vsel %vm3626, %v3705, 0
      %3710 = vmatprep.subr.mxu0 %v3708
      %3711 = vmatpush1.msra.mxu0 %v3706
      %3712 = vmatprep.subr.mxu0 0.0
      %3713 = vmatpush1.msra.mxu0 0.0
      %3714 = vmatprep.subr.mxu0 0.0
      %3715 = vmatpush1.msra.mxu0 0.0
      %3716 = vmatprep.subr.mxu0 0.0
      %3717 = vmatpush1.msra.mxu0 0.0
      %3718 = vmatprep.subr.mxu0 0.0
      %3719 = vmatpush1.msra.mxu0 0.0
      %3720 = vmatprep.subr.mxu0 0.0
      %3721 = vmatpush1.msra.mxu0 0.0
      %3722 = vmatprep.subr.mxu0 0.0
      %3723 = vmatpush1.msra.mxu0 0.0
      %3724 = vmatprep.subr.mxu0 0.0
      %3725 = vmatpush1.msra.mxu0 0.0
      %3726 = vmatprep.subr.mxu0 0.0
      %3727 = vmatpush1.msra.mxu0 0.0
      %3728 = vmatprep.subr.mxu0 0.0
      %3729 = vmatpush1.msra.mxu0 0.0
      %3730 = vmatprep.subr.mxu0 0.0
      %3731 = vmatpush1.msra.mxu0 0.0
      %3732 = vmatprep.subr.mxu0 0.0
      %3733 = vmatpush1.msra.mxu0 0.0
      %3734 = vmatprep.subr.mxu0 0.0
      %3735 = vmatpush1.msra.mxu0 0.0
      %3736 = vmatprep.subr.mxu0 0.0
      %3737 = vmatpush1.msra.mxu0 0.0
      %3738 = vmatprep.subr.mxu0 0.0
      %3739 = vmatpush1.msra.mxu0 0.0
      %3740 = vmatprep.subr.mxu0 0.0
      %3741 = vmatpush1.msra.mxu0 0.0
      %3742 = vmatprep.subr.mxu0 0.0
      %3743 = vmatpush1.msra.mxu0 0.0
      %3744 = vmatprep.subr.mxu0 0.0
      %3745 = vmatpush1.msra.mxu0 0.0
      %3746 = vmatprep.subr.mxu0 0.0
      %3747 = vmatpush1.msra.mxu0 0.0
      %3748 = vmatprep.subr.mxu0 0.0
      %3749 = vmatpush1.msra.mxu0 0.0
      %3750 = vmatprep.subr.mxu0 0.0
      %3751 = vmatpush1.msra.mxu0 0.0
      %3752 = vmatprep.subr.mxu0 0.0
      %3753 = vmatpush1.msra.mxu0 0.0
      %3754 = vmatprep.subr.mxu0 0.0
      %3755 = vmatpush1.msra.mxu0 0.0
      %3756 = vmatprep.subr.mxu0 0.0
      %3757 = vmatpush1.msra.mxu0 0.0
      %3758 = vmatprep.subr.mxu0 0.0
      %3759 = vmatpush1.msra.mxu0 0.0
      %3760 = vmatprep.subr.mxu0 0.0
      %3761 = vmatpush1.msra.mxu0 0.0
      %3762 = vmatprep.subr.mxu0 0.0
      %3763 = vmatpush1.msra.mxu0 0.0
      %3764 = vmatprep.subr.mxu0 0.0
      %3765 = vmatpush1.msra.mxu0 0.0
      %3766 = vmatprep.subr.mxu0 0.0
      %3767 = vmatpush1.msra.mxu0 0.0
      %3768 = vmatprep.subr.mxu0 0.0
      %3769 = vmatpush1.msra.mxu0 0.0
      %3770 = vmatprep.subr.mxu0 0.0
      %3771 = vmatpush1.msra.mxu0 0.0
      %3772 = vmatprep.subr.mxu0 0.0
      %3773 = vmatpush1.msra.mxu0 0.0
      %3774 = vmatprep.mubr.f32.mxu0 0.0
      %3775 = vmatmul.mubr.f32.gmra.mrb[0].mxu0 %v3624
      %v3776 = vpop.f32.mrb[0].mxu0
      %v3777 = vadd.f32 0.0, %v3776
      %v3778 = vpop.f32.mrb[0].mxu0
      %v3779 = vadd.f32 0.0, %v3778
      %3780 = vdwg.mxu0
      %v3781 = vld [vmem:[%s423] sm:$0xff]
      %v3782 = vld [vmem:[%s423 + $0x8] sm:$0xff]
      %v3783 = vld [vmem:[%s423 + $0x10] sm:$0xff]
      %v3784 = vld [vmem:[%s423 + $0x18] sm:$0xff]
      %v3785 = vld [vmem:[%s423 + $0x20] sm:$0xff]
      %v3786 = vld [vmem:[%s423 + $0x28] sm:$0xff]
      %v3787 = vld [vmem:[%s2] sm:$0xff]
      %v3788 = vld [vmem:[%s2 + $0x8] sm:$0xff]
      %v3789 = vld [vmem:[%s2 + $0x10] sm:$0xff]
      %v3790 = vld [vmem:[%s2 + $0x18] sm:$0xff]
      %v3791 = vld [vmem:[%s2 + $0x20] sm:$0xff]
      %v3792 = vld [vmem:[%s2 + $0x28] sm:$0xff]
      %v3793 = vld [vmem:[%s2 + $0x30] sm:$0xff]
      %v3794 = vld [vmem:[%s2 + $0x38] sm:$0xff]
      %v3795 = vld [vmem:[%s2 + $0x40] sm:$0xff]
      %v3796 = vld [vmem:[%s2 + $0x48] sm:$0xff]
      %v3797 = vld [vmem:[%s2 + $0x50] sm:$0xff]
      %v3798 = vld [vmem:[%s2 + $0x58] sm:$0xff]
      %v3799 = vld [vmem:[%s2 + $0x60] sm:$0xff]
      %v3800 = vld [vmem:[%s2 + $0x68] sm:$0xff]
      %v3801 = vld [vmem:[%s2 + $0x70] sm:$0xff]
      %v3802 = vld [vmem:[%s2 + $0x78] sm:$0xff]
      %v3803 = vld [vmem:[%s2 + $0x80] sm:$0xff]
      %v3804 = vld [vmem:[%s2 + $0x88] sm:$0xff]
      %v3805 = vld [vmem:[%s2 + $0x90] sm:$0xff]
      %v3806 = vld [vmem:[%s2 + $0x98] sm:$0xff]
      %v3807 = vld [vmem:[%s2 + $0xa0] sm:$0xff]
      %v3808 = vld [vmem:[%s2 + $0xa8] sm:$0xff]
      %v3809 = vld [vmem:[%s2 + $0xb0] sm:$0xff]
      %v3810 = vld [vmem:[%s2 + $0xb8] sm:$0xff]
      %v3811 = vld [vmem:[%s2 + $0xc0] sm:$0xff]
      %v3812 = vld [vmem:[%s2 + $0xc8] sm:$0xff]
      %v3813 = vld [vmem:[%s2 + $0xd0] sm:$0xff]
      %v3814 = vld [vmem:[%s2 + $0xd8] sm:$0xff]
      %v3815 = vld [vmem:[%s2 + $0xe0] sm:$0xff]
      %v3816 = vld [vmem:[%s2 + $0xe8] sm:$0xff]
      %v3817 = vld [vmem:[%s2 + $0xf0] sm:$0xff]
      %v3818 = vld [vmem:[%s2 + $0xf8] sm:$0xff]
      %v3819 = vld [vmem:[%s2 + $0x100] sm:$0xff]
      %v3820 = vld [vmem:[%s2 + $0x108] sm:$0xff]
      %v3821 = vld [vmem:[%s2 + $0x110] sm:$0xff]
      %v3822 = vld [vmem:[%s2 + $0x118] sm:$0xff]
      %v3823 = vld [vmem:[%s2 + $0x120] sm:$0xff]
      %v3824 = vld [vmem:[%s2 + $0x128] sm:$0xff]
      %v3825 = vld [vmem:[%s2 + $0x130] sm:$0xff]
      %v3826 = vld [vmem:[%s2 + $0x138] sm:$0xff]
      %v3827 = vld [vmem:[%s2 + $0x140] sm:$0xff]
      %v3828 = vld [vmem:[%s2 + $0x148] sm:$0xff]
      %v3829 = vld [vmem:[%s2 + $0x150] sm:$0xff]
      %v3830 = vld [vmem:[%s2 + $0x158] sm:$0xff]
      %v3831 = vld [vmem:[%s2 + $0x160] sm:$0xff]
      %v3832 = vld [vmem:[%s2 + $0x168] sm:$0xff]
      %v3833 = vld [vmem:[%s2 + $0x170] sm:$0xff]
      %v3834 = vld [vmem:[%s2 + $0x178] sm:$0xff]
      %v3835 = vld [vmem:[%s2 + $0x180] sm:$0xff]
      %v3836 = vld [vmem:[%s2 + $0x188] sm:$0xff]
      %v3837 = vld [vmem:[%s2 + $0x190] sm:$0xff]
      %v3838 = vld [vmem:[%s2 + $0x198] sm:$0xff]
      %v3839 = vld [vmem:[%s2 + $0x1a0] sm:$0xff]
      %v3840 = vld [vmem:[%s2 + $0x1a8] sm:$0xff]
      %v3841 = vld [vmem:[%s2 + $0x1b0] sm:$0xff]
      %v3842 = vld [vmem:[%s2 + $0x1b8] sm:$0xff]
      %v3843 = vld [vmem:[%s2 + $0x1c0] sm:$0xff]
      %v3844 = vld [vmem:[%s2 + $0x1c8] sm:$0xff]
      %v3845 = vld [vmem:[%s2 + $0x1d0] sm:$0xff]
      %v3846 = vld [vmem:[%s2 + $0x1d8] sm:$0xff]
      %v3847 = vld [vmem:[%s2 + $0x1e0] sm:$0xff]
      %v3848 = vld [vmem:[%s2 + $0x1e8] sm:$0xff]
      %v3849 = vld [vmem:[%s2 + $0x1f0] sm:$0xff]
      %v3850 = vld [vmem:[%s2 + $0x1f8] sm:$0xff]
      %v3851 = vld [vmem:[%s2 + $0x200] sm:$0xff]
      %v3852 = vld [vmem:[%s2 + $0x208] sm:$0xff]
      %v3853 = vld [vmem:[%s2 + $0x210] sm:$0xff]
      %v3854 = vld [vmem:[%s2 + $0x218] sm:$0xff]
      %v3855 = vld [vmem:[%s2 + $0x220] sm:$0xff]
      %v3856 = vld [vmem:[%s2 + $0x228] sm:$0xff]
      %v3857 = vld [vmem:[%s2 + $0x230] sm:$0xff]
      %v3858 = vld [vmem:[%s2 + $0x238] sm:$0xff]
      %v3859 = vld [vmem:[%s2 + $0x240] sm:$0xff]
      %v3860 = vld [vmem:[%s2 + $0x248] sm:$0xff]
      %v3861 = vld [vmem:[%s2 + $0x250] sm:$0xff]
      %v3862 = vld [vmem:[%s2 + $0x258] sm:$0xff]
      %v3863 = vld [vmem:[%s2 + $0x260] sm:$0xff]
      %v3864 = vld [vmem:[%s2 + $0x268] sm:$0xff]
      %v3865 = vld [vmem:[%s2 + $0x270] sm:$0xff]
      %v3866 = vld [vmem:[%s2 + $0x278] sm:$0xff]
      %v3867 = vld [vmem:[%s2 + $0x280] sm:$0xff]
      %v3868 = vld [vmem:[%s2 + $0x288] sm:$0xff]
      %v3869 = vld [vmem:[%s2 + $0x290] sm:$0xff]
      %v3870 = vld [vmem:[%s2 + $0x298] sm:$0xff]
      %v3871 = vld [vmem:[%s2 + $0x2a0] sm:$0xff]
      %v3872 = vld [vmem:[%s2 + $0x2a8] sm:$0xff]
      %v3873 = vld [vmem:[%s2 + $0x2b0] sm:$0xff]
      %v3874 = vld [vmem:[%s2 + $0x2b8] sm:$0xff]
      %v3875 = vld [vmem:[%s2 + $0x2c0] sm:$0xff]
      %v3876 = vld [vmem:[%s2 + $0x2c8] sm:$0xff]
      %v3877 = vld [vmem:[%s2 + $0x2d0] sm:$0xff]
      %v3878 = vld [vmem:[%s2 + $0x2d8] sm:$0xff]
      %v3879 = vld [vmem:[%s2 + $0x2e0] sm:$0xff]
      %v3880 = vld [vmem:[%s2 + $0x2e8] sm:$0xff]
      %v3881 = vld [vmem:[%s2 + $0x2f0] sm:$0xff]
      %v3882 = vld [vmem:[%s2 + $0x2f8] sm:$0xff]
      %v3883 = vld [vmem:[%s3] sm:$0x3]
      %v3885 = vlaneseq
      %v3886 = vshrl.u32 %v3885, 7
      %v3887 = vsub.s32 0, %v3886
      %v3888 = vrot.slane %v3883, %v3887
      %v3889 = vlaneseq
      %v3890 = vshrl.u32 %v3889, 7
      %v3891 = vsub.s32 1, %v3890
      %v3892 = vrot.slane %v3883, %v3891
      %v3901 = vunpack.c.l.b16 %v3781
      %v3902 = vunpack.c.h.b16 %v3781
      %v3903 = vunpack.c.l.b16 %v3782
      %v3904 = vunpack.c.h.b16 %v3782
      %v3905 = vunpack.c.l.b16 %v3783
      %v3906 = vunpack.c.h.b16 %v3783
      %v3907 = vunpack.c.l.b16 %v3784
      %v3908 = vunpack.c.h.b16 %v3784
      %v3909 = vunpack.c.l.b16 %v3785
      %v3910 = vunpack.c.h.b16 %v3785
      %v3911 = vunpack.c.l.b16 %v3786
      %v3912 = vunpack.c.h.b16 %v3786
      %v3913 = vpack.c.b16 %v3907, %v3901
      %v3914 = vpack.c.b16 %v3908, %v3902
      %v3915 = vpack.c.b16 %v3909, %v3903
      %v3916 = vpack.c.b16 %v3910, %v3904
      %v3917 = vpack.c.b16 %v3911, %v3905
      %v3918 = vpack.c.b16 %v3912, %v3906
      %v4021 = vunpack.c.l.b16 %v3787
      %v4022 = vunpack.c.h.b16 %v3787
      %v4023 = vunpack.c.l.b16 %v3788
      %v4024 = vunpack.c.h.b16 %v3788
      %v4025 = vunpack.c.l.b16 %v3789
      %v4026 = vunpack.c.h.b16 %v3789
      %v4027 = vunpack.c.l.b16 %v3790
      %v4028 = vunpack.c.h.b16 %v3790
      %v4029 = vunpack.c.l.b16 %v3791
      %v4030 = vunpack.c.h.b16 %v3791
      %v4031 = vunpack.c.l.b16 %v3792
      %v4032 = vunpack.c.h.b16 %v3792
      %v4033 = vunpack.c.l.b16 %v3793
      %v4034 = vunpack.c.h.b16 %v3793
      %v4035 = vunpack.c.l.b16 %v3794
      %v4036 = vunpack.c.h.b16 %v3794
      %v4037 = vunpack.c.l.b16 %v3795
      %v4038 = vunpack.c.h.b16 %v3795
      %v4039 = vunpack.c.l.b16 %v3796
      %v4040 = vunpack.c.h.b16 %v3796
      %v4041 = vunpack.c.l.b16 %v3797
      %v4042 = vunpack.c.h.b16 %v3797
      %v4043 = vunpack.c.l.b16 %v3798
      %v4044 = vunpack.c.h.b16 %v3798
      %v4045 = vunpack.c.l.b16 %v3799
      %v4046 = vunpack.c.h.b16 %v3799
      %v4047 = vunpack.c.l.b16 %v3800
      %v4048 = vunpack.c.h.b16 %v3800
      %v4049 = vunpack.c.l.b16 %v3801
      %v4050 = vunpack.c.h.b16 %v3801
      %v4051 = vunpack.c.l.b16 %v3802
      %v4052 = vunpack.c.h.b16 %v3802
      %v4053 = vunpack.c.l.b16 %v3803
      %v4054 = vunpack.c.h.b16 %v3803
      %v4055 = vunpack.c.l.b16 %v3804
      %v4056 = vunpack.c.h.b16 %v3804
      %v4057 = vunpack.c.l.b16 %v3805
      %v4058 = vunpack.c.h.b16 %v3805
      %v4059 = vunpack.c.l.b16 %v3806
      %v4060 = vunpack.c.h.b16 %v3806
      %v4061 = vunpack.c.l.b16 %v3807
      %v4062 = vunpack.c.h.b16 %v3807
      %v4063 = vunpack.c.l.b16 %v3808
      %v4064 = vunpack.c.h.b16 %v3808
      %v4065 = vunpack.c.l.b16 %v3809
      %v4066 = vunpack.c.h.b16 %v3809
      %v4067 = vunpack.c.l.b16 %v3810
      %v4068 = vunpack.c.h.b16 %v3810
      %v4069 = vunpack.c.l.b16 %v3811
      %v4070 = vunpack.c.h.b16 %v3811
      %v4071 = vunpack.c.l.b16 %v3812
      %v4072 = vunpack.c.h.b16 %v3812
      %v4073 = vunpack.c.l.b16 %v3813
      %v4074 = vunpack.c.h.b16 %v3813
      %v4075 = vunpack.c.l.b16 %v3814
      %v4076 = vunpack.c.h.b16 %v3814
      %v4077 = vunpack.c.l.b16 %v3815
      %v4078 = vunpack.c.h.b16 %v3815
      %v4079 = vunpack.c.l.b16 %v3816
      %v4080 = vunpack.c.h.b16 %v3816
      %v4081 = vunpack.c.l.b16 %v3817
      %v4082 = vunpack.c.h.b16 %v3817
      %v4083 = vunpack.c.l.b16 %v3818
      %v4084 = vunpack.c.h.b16 %v3818
      %v4085 = vunpack.c.l.b16 %v3819
      %v4086 = vunpack.c.h.b16 %v3819
      %v4087 = vunpack.c.l.b16 %v3820
      %v4088 = vunpack.c.h.b16 %v3820
      %v4089 = vunpack.c.l.b16 %v3821
      %v4090 = vunpack.c.h.b16 %v3821
      %v4091 = vunpack.c.l.b16 %v3822
      %v4092 = vunpack.c.h.b16 %v3822
      %v4093 = vunpack.c.l.b16 %v3823
      %v4094 = vunpack.c.h.b16 %v3823
      %v4095 = vunpack.c.l.b16 %v3824
      %v4096 = vunpack.c.h.b16 %v3824
      %v4097 = vunpack.c.l.b16 %v3825
      %v4098 = vunpack.c.h.b16 %v3825
      %v4099 = vunpack.c.l.b16 %v3826
      %v4100 = vunpack.c.h.b16 %v3826
      %v4101 = vunpack.c.l.b16 %v3827
      %v4102 = vunpack.c.h.b16 %v3827
      %v4103 = vunpack.c.l.b16 %v3828
      %v4104 = vunpack.c.h.b16 %v3828
      %v4105 = vunpack.c.l.b16 %v3829
      %v4106 = vunpack.c.h.b16 %v3829
      %v4107 = vunpack.c.l.b16 %v3830
      %v4108 = vunpack.c.h.b16 %v3830
      %v4109 = vunpack.c.l.b16 %v3831
      %v4110 = vunpack.c.h.b16 %v3831
      %v4111 = vunpack.c.l.b16 %v3832
      %v4112 = vunpack.c.h.b16 %v3832
      %v4113 = vunpack.c.l.b16 %v3833
      %v4114 = vunpack.c.h.b16 %v3833
      %v4115 = vunpack.c.l.b16 %v3834
      %v4116 = vunpack.c.h.b16 %v3834
      %v4117 = vunpack.c.l.b16 %v3835
      %v4118 = vunpack.c.h.b16 %v3835
      %v4119 = vunpack.c.l.b16 %v3836
      %v4120 = vunpack.c.h.b16 %v3836
      %v4121 = vunpack.c.l.b16 %v3837
      %v4122 = vunpack.c.h.b16 %v3837
      %v4123 = vunpack.c.l.b16 %v3838
      %v4124 = vunpack.c.h.b16 %v3838
      %v4125 = vunpack.c.l.b16 %v3839
      %v4126 = vunpack.c.h.b16 %v3839
      %v4127 = vunpack.c.l.b16 %v3840
      %v4128 = vunpack.c.h.b16 %v3840
      %v4129 = vunpack.c.l.b16 %v3841
      %v4130 = vunpack.c.h.b16 %v3841
      %v4131 = vunpack.c.l.b16 %v3842
      %v4132 = vunpack.c.h.b16 %v3842
      %v4133 = vunpack.c.l.b16 %v3843
      %v4134 = vunpack.c.h.b16 %v3843
      %v4135 = vunpack.c.l.b16 %v3844
      %v4136 = vunpack.c.h.b16 %v3844
      %v4137 = vunpack.c.l.b16 %v3845
      %v4138 = vunpack.c.h.b16 %v3845
      %v4139 = vunpack.c.l.b16 %v3846
      %v4140 = vunpack.c.h.b16 %v3846
      %v4141 = vunpack.c.l.b16 %v3847
      %v4142 = vunpack.c.h.b16 %v3847
      %v4143 = vunpack.c.l.b16 %v3848
      %v4144 = vunpack.c.h.b16 %v3848
      %v4145 = vunpack.c.l.b16 %v3849
      %v4146 = vunpack.c.h.b16 %v3849
      %v4147 = vunpack.c.l.b16 %v3850
      %v4148 = vunpack.c.h.b16 %v3850
      %v4149 = vunpack.c.l.b16 %v3851
      %v4150 = vunpack.c.h.b16 %v3851
      %v4151 = vunpack.c.l.b16 %v3852
      %v4152 = vunpack.c.h.b16 %v3852
      %v4153 = vunpack.c.l.b16 %v3853
      %v4154 = vunpack.c.h.b16 %v3853
      %v4155 = vunpack.c.l.b16 %v3854
      %v4156 = vunpack.c.h.b16 %v3854
      %v4157 = vunpack.c.l.b16 %v3855
      %v4158 = vunpack.c.h.b16 %v3855
      %v4159 = vunpack.c.l.b16 %v3856
      %v4160 = vunpack.c.h.b16 %v3856
      %v4161 = vunpack.c.l.b16 %v3857
      %v4162 = vunpack.c.h.b16 %v3857
      %v4163 = vunpack.c.l.b16 %v3858
      %v4164 = vunpack.c.h.b16 %v3858
      %v4165 = vunpack.c.l.b16 %v3859
      %v4166 = vunpack.c.h.b16 %v3859
      %v4167 = vunpack.c.l.b16 %v3860
      %v4168 = vunpack.c.h.b16 %v3860
      %v4169 = vunpack.c.l.b16 %v3861
      %v4170 = vunpack.c.h.b16 %v3861
      %v4171 = vunpack.c.l.b16 %v3862
      %v4172 = vunpack.c.h.b16 %v3862
      %v4173 = vunpack.c.l.b16 %v3863
      %v4174 = vunpack.c.h.b16 %v3863
      %v4175 = vunpack.c.l.b16 %v3864
      %v4176 = vunpack.c.h.b16 %v3864
      %v4177 = vunpack.c.l.b16 %v3865
      %v4178 = vunpack.c.h.b16 %v3865
      %v4179 = vunpack.c.l.b16 %v3866
      %v4180 = vunpack.c.h.b16 %v3866
      %v4181 = vunpack.c.l.b16 %v3867
      %v4182 = vunpack.c.h.b16 %v3867
      %v4183 = vunpack.c.l.b16 %v3868
      %v4184 = vunpack.c.h.b16 %v3868
      %v4185 = vunpack.c.l.b16 %v3869
      %v4186 = vunpack.c.h.b16 %v3869
      %v4187 = vunpack.c.l.b16 %v3870
      %v4188 = vunpack.c.h.b16 %v3870
      %v4189 = vunpack.c.l.b16 %v3871
      %v4190 = vunpack.c.h.b16 %v3871
      %v4191 = vunpack.c.l.b16 %v3872
      %v4192 = vunpack.c.h.b16 %v3872
      %v4193 = vunpack.c.l.b16 %v3873
      %v4194 = vunpack.c.h.b16 %v3873
      %v4195 = vunpack.c.l.b16 %v3874
      %v4196 = vunpack.c.h.b16 %v3874
      %v4197 = vunpack.c.l.b16 %v3875
      %v4198 = vunpack.c.h.b16 %v3875
      %v4199 = vunpack.c.l.b16 %v3876
      %v4200 = vunpack.c.h.b16 %v3876
      %v4201 = vunpack.c.l.b16 %v3877
      %v4202 = vunpack.c.h.b16 %v3877
      %v4203 = vunpack.c.l.b16 %v3878
      %v4204 = vunpack.c.h.b16 %v3878
      %v4205 = vunpack.c.l.b16 %v3879
      %v4206 = vunpack.c.h.b16 %v3879
      %v4207 = vunpack.c.l.b16 %v3880
      %v4208 = vunpack.c.h.b16 %v3880
      %v4209 = vunpack.c.l.b16 %v3881
      %v4210 = vunpack.c.h.b16 %v3881
      %v4211 = vunpack.c.l.b16 %v3882
      %v4212 = vunpack.c.h.b16 %v3882
      %v4213 = vpack.c.b16 %v4023, %v4021
      %v4214 = vpack.c.b16 %v4024, %v4022
      %v4215 = vpack.c.b16 %v4027, %v4025
      %v4216 = vpack.c.b16 %v4028, %v4026
      %v4217 = vpack.c.b16 %v4031, %v4029
      %v4218 = vpack.c.b16 %v4032, %v4030
      %v4219 = vpack.c.b16 %v4035, %v4033
      %v4220 = vpack.c.b16 %v4036, %v4034
      %v4221 = vpack.c.b16 %v4039, %v4037
      %v4222 = vpack.c.b16 %v4040, %v4038
      %v4223 = vpack.c.b16 %v4043, %v4041
      %v4224 = vpack.c.b16 %v4044, %v4042
      %v4225 = vpack.c.b16 %v4047, %v4045
      %v4226 = vpack.c.b16 %v4048, %v4046
      %v4227 = vpack.c.b16 %v4051, %v4049
      %v4228 = vpack.c.b16 %v4052, %v4050
      %v4229 = vpack.c.b16 %v4055, %v4053
      %v4230 = vpack.c.b16 %v4056, %v4054
      %v4231 = vpack.c.b16 %v4059, %v4057
      %v4232 = vpack.c.b16 %v4060, %v4058
      %v4233 = vpack.c.b16 %v4063, %v4061
      %v4234 = vpack.c.b16 %v4064, %v4062
      %v4235 = vpack.c.b16 %v4067, %v4065
      %v4236 = vpack.c.b16 %v4068, %v4066
      %v4237 = vpack.c.b16 %v4071, %v4069
      %v4238 = vpack.c.b16 %v4072, %v4070
      %v4239 = vpack.c.b16 %v4075, %v4073
      %v4240 = vpack.c.b16 %v4076, %v4074
      %v4241 = vpack.c.b16 %v4079, %v4077
      %v4242 = vpack.c.b16 %v4080, %v4078
      %v4243 = vpack.c.b16 %v4083, %v4081
      %v4244 = vpack.c.b16 %v4084, %v4082
      %v4245 = vpack.c.b16 %v4087, %v4085
      %v4246 = vpack.c.b16 %v4088, %v4086
      %v4247 = vpack.c.b16 %v4091, %v4089
      %v4248 = vpack.c.b16 %v4092, %v4090
      %v4249 = vpack.c.b16 %v4095, %v4093
      %v4250 = vpack.c.b16 %v4096, %v4094
      %v4251 = vpack.c.b16 %v4099, %v4097
      %v4252 = vpack.c.b16 %v4100, %v4098
      %v4253 = vpack.c.b16 %v4103, %v4101
      %v4254 = vpack.c.b16 %v4104, %v4102
      %v4255 = vpack.c.b16 %v4107, %v4105
      %v4256 = vpack.c.b16 %v4108, %v4106
      %v4257 = vpack.c.b16 %v4111, %v4109
      %v4258 = vpack.c.b16 %v4112, %v4110
      %v4259 = vpack.c.b16 %v4115, %v4113
      %v4260 = vpack.c.b16 %v4116, %v4114
      %v4261 = vpack.c.b16 %v4119, %v4117
      %v4262 = vpack.c.b16 %v4120, %v4118
      %v4263 = vpack.c.b16 %v4123, %v4121
      %v4264 = vpack.c.b16 %v4124, %v4122
      %v4265 = vpack.c.b16 %v4127, %v4125
      %v4266 = vpack.c.b16 %v4128, %v4126
      %v4267 = vpack.c.b16 %v4131, %v4129
      %v4268 = vpack.c.b16 %v4132, %v4130
      %v4269 = vpack.c.b16 %v4135, %v4133
      %v4270 = vpack.c.b16 %v4136, %v4134
      %v4271 = vpack.c.b16 %v4139, %v4137
      %v4272 = vpack.c.b16 %v4140, %v4138
      %v4273 = vpack.c.b16 %v4143, %v4141
      %v4274 = vpack.c.b16 %v4144, %v4142
      %v4275 = vpack.c.b16 %v4147, %v4145
      %v4276 = vpack.c.b16 %v4148, %v4146
      %v4277 = vpack.c.b16 %v4151, %v4149
      %v4278 = vpack.c.b16 %v4152, %v4150
      %v4279 = vpack.c.b16 %v4155, %v4153
      %v4280 = vpack.c.b16 %v4156, %v4154
      %v4281 = vpack.c.b16 %v4159, %v4157
      %v4282 = vpack.c.b16 %v4160, %v4158
      %v4283 = vpack.c.b16 %v4163, %v4161
      %v4284 = vpack.c.b16 %v4164, %v4162
      %v4285 = vpack.c.b16 %v4167, %v4165
      %v4286 = vpack.c.b16 %v4168, %v4166
      %v4287 = vpack.c.b16 %v4171, %v4169
      %v4288 = vpack.c.b16 %v4172, %v4170
      %v4289 = vpack.c.b16 %v4175, %v4173
      %v4290 = vpack.c.b16 %v4176, %v4174
      %v4291 = vpack.c.b16 %v4179, %v4177
      %v4292 = vpack.c.b16 %v4180, %v4178
      %v4293 = vpack.c.b16 %v4183, %v4181
      %v4294 = vpack.c.b16 %v4184, %v4182
      %v4295 = vpack.c.b16 %v4187, %v4185
      %v4296 = vpack.c.b16 %v4188, %v4186
      %v4297 = vpack.c.b16 %v4191, %v4189
      %v4298 = vpack.c.b16 %v4192, %v4190
      %v4299 = vpack.c.b16 %v4195, %v4193
      %v4300 = vpack.c.b16 %v4196, %v4194
      %v4301 = vpack.c.b16 %v4199, %v4197
      %v4302 = vpack.c.b16 %v4200, %v4198
      %v4303 = vpack.c.b16 %v4203, %v4201
      %v4304 = vpack.c.b16 %v4204, %v4202
      %v4305 = vpack.c.b16 %v4207, %v4205
      %v4306 = vpack.c.b16 %v4208, %v4206
      %v4307 = vpack.c.b16 %v4211, %v4209
      %v4308 = vpack.c.b16 %v4212, %v4210
      %4405 = vmatprep.subr.bf16.mxu0 %v4214
      %4406 = vmatpush1.bf16.msra.mxu0 %v4213
      %4407 = vmatprep.subr.bf16.mxu0 %v4216
      %4408 = vmatpush1.bf16.msra.mxu0 %v4215
      %4409 = vmatprep.subr.bf16.mxu0 %v4218
      %4410 = vmatpush1.bf16.msra.mxu0 %v4217
      %4411 = vmatprep.subr.bf16.mxu0 %v4220
      %4412 = vmatpush1.bf16.msra.mxu0 %v4219
      %4413 = vmatprep.subr.bf16.mxu0 %v4222
      %4414 = vmatpush1.bf16.msra.mxu0 %v4221
      %4415 = vmatprep.subr.bf16.mxu0 %v4224
      %4416 = vmatpush1.bf16.msra.mxu0 %v4223
      %4417 = vmatprep.subr.bf16.mxu0 %v4226
      %4418 = vmatpush1.bf16.msra.mxu0 %v4225
      %4419 = vmatprep.subr.bf16.mxu0 %v4228
      %4420 = vmatpush1.bf16.msra.mxu0 %v4227
      %4421 = vmatprep.subr.bf16.mxu0 %v4230
      %4422 = vmatpush1.bf16.msra.mxu0 %v4229
      %4423 = vmatprep.subr.bf16.mxu0 %v4232
      %4424 = vmatpush1.bf16.msra.mxu0 %v4231
      %4425 = vmatprep.subr.bf16.mxu0 %v4234
      %4426 = vmatpush1.bf16.msra.mxu0 %v4233
      %4427 = vmatprep.subr.bf16.mxu0 %v4236
      %4428 = vmatpush1.bf16.msra.mxu0 %v4235
      %4429 = vmatprep.subr.bf16.mxu0 %v4238
      %4430 = vmatpush1.bf16.msra.mxu0 %v4237
      %4431 = vmatprep.subr.bf16.mxu0 %v4240
      %4432 = vmatpush1.bf16.msra.mxu0 %v4239
      %4433 = vmatprep.subr.bf16.mxu0 %v4242
      %4434 = vmatpush1.bf16.msra.mxu0 %v4241
      %4435 = vmatprep.subr.bf16.mxu0 %v4244
      %4436 = vmatpush1.bf16.msra.mxu0 %v4243
      %4437 = vmatprep.mubr.bf16.mxu0 %v3914
      %4438 = vmatmul.mubr.bf16.gmra.mrb[0].mxu0 %v3913
      %v4439 = vpop.f32.mrb[0].mxu0
      %v4440 = vadd.f32 %v3888, %v4439
      %v4441 = vpop.f32.mrb[0].mxu0
      %v4442 = vadd.f32 %v3892, %v4441
      %v4443 = vpop.f32.mrb[0].mxu0
      %v4444 = vadd.f32 %v3888, %v4443
      %v4445 = vpop.f32.mrb[0].mxu0
      %v4446 = vadd.f32 %v3892, %v4445
      %4447 = vdwg.mxu0
      %4448 = vmatprep.subr.bf16.mxu0 %v4246
      %4449 = vmatpush1.bf16.msra.mxu0 %v4245
      %4450 = vmatprep.subr.bf16.mxu0 %v4248
      %4451 = vmatpush1.bf16.msra.mxu0 %v4247
      %4452 = vmatprep.subr.bf16.mxu0 %v4250
      %4453 = vmatpush1.bf16.msra.mxu0 %v4249
      %4454 = vmatprep.subr.bf16.mxu0 %v4252
      %4455 = vmatpush1.bf16.msra.mxu0 %v4251
      %4456 = vmatprep.subr.bf16.mxu0 %v4254
      %4457 = vmatpush1.bf16.msra.mxu0 %v4253
      %4458 = vmatprep.subr.bf16.mxu0 %v4256
      %4459 = vmatpush1.bf16.msra.mxu0 %v4255
      %4460 = vmatprep.subr.bf16.mxu0 %v4258
      %4461 = vmatpush1.bf16.msra.mxu0 %v4257
      %4462 = vmatprep.subr.bf16.mxu0 %v4260
      %4463 = vmatpush1.bf16.msra.mxu0 %v4259
      %4464 = vmatprep.subr.bf16.mxu0 %v4262
      %4465 = vmatpush1.bf16.msra.mxu0 %v4261
      %4466 = vmatprep.subr.bf16.mxu0 %v4264
      %4467 = vmatpush1.bf16.msra.mxu0 %v4263
      %4468 = vmatprep.subr.bf16.mxu0 %v4266
      %4469 = vmatpush1.bf16.msra.mxu0 %v4265
      %4470 = vmatprep.subr.bf16.mxu0 %v4268
      %4471 = vmatpush1.bf16.msra.mxu0 %v4267
      %4472 = vmatprep.subr.bf16.mxu0 %v4270
      %4473 = vmatpush1.bf16.msra.mxu0 %v4269
      %4474 = vmatprep.subr.bf16.mxu0 %v4272
      %4475 = vmatpush1.bf16.msra.mxu0 %v4271
      %4476 = vmatprep.subr.bf16.mxu0 %v4274
      %4477 = vmatpush1.bf16.msra.mxu0 %v4273
      %4478 = vmatprep.subr.bf16.mxu0 %v4276
      %4479 = vmatpush1.bf16.msra.mxu0 %v4275
      %4480 = vmatprep.mubr.bf16.mxu0 %v3916
      %4481 = vmatmul.mubr.bf16.gmra.mrb[0].mxu0 %v3915
      %v4482 = vpop.f32.mrb[0].mxu0
      %v4483 = vadd.f32 %v4440, %v4482
      %v4484 = vpop.f32.mrb[0].mxu0
      %v4485 = vadd.f32 %v4442, %v4484
      %v4486 = vpop.f32.mrb[0].mxu0
      %v4487 = vadd.f32 %v4444, %v4486
      %v4488 = vpop.f32.mrb[0].mxu0
      %v4489 = vadd.f32 %v4446, %v4488
      %4490 = vdwg.mxu0
      %4491 = vmatprep.subr.bf16.mxu0 %v4278
      %4492 = vmatpush1.bf16.msra.mxu0 %v4277
      %4493 = vmatprep.subr.bf16.mxu0 %v4280
      %4494 = vmatpush1.bf16.msra.mxu0 %v4279
      %4495 = vmatprep.subr.bf16.mxu0 %v4282
      %4496 = vmatpush1.bf16.msra.mxu0 %v4281
      %4497 = vmatprep.subr.bf16.mxu0 %v4284
      %4498 = vmatpush1.bf16.msra.mxu0 %v4283
      %4499 = vmatprep.subr.bf16.mxu0 %v4286
      %4500 = vmatpush1.bf16.msra.mxu0 %v4285
      %4501 = vmatprep.subr.bf16.mxu0 %v4288
      %4502 = vmatpush1.bf16.msra.mxu0 %v4287
      %4503 = vmatprep.subr.bf16.mxu0 %v4290
      %4504 = vmatpush1.bf16.msra.mxu0 %v4289
      %4505 = vmatprep.subr.bf16.mxu0 %v4292
      %4506 = vmatpush1.bf16.msra.mxu0 %v4291
      %4507 = vmatprep.subr.bf16.mxu0 %v4294
      %4508 = vmatpush1.bf16.msra.mxu0 %v4293
      %4509 = vmatprep.subr.bf16.mxu0 %v4296
      %4510 = vmatpush1.bf16.msra.mxu0 %v4295
      %4511 = vmatprep.subr.bf16.mxu0 %v4298
      %4512 = vmatpush1.bf16.msra.mxu0 %v4297
      %4513 = vmatprep.subr.bf16.mxu0 %v4300
      %4514 = vmatpush1.bf16.msra.mxu0 %v4299
      %4515 = vmatprep.subr.bf16.mxu0 %v4302
      %4516 = vmatpush1.bf16.msra.mxu0 %v4301
      %4517 = vmatprep.subr.bf16.mxu0 %v4304
      %4518 = vmatpush1.bf16.msra.mxu0 %v4303
      %4519 = vmatprep.subr.bf16.mxu0 %v4306
      %4520 = vmatpush1.bf16.msra.mxu0 %v4305
      %4521 = vmatprep.subr.bf16.mxu0 %v4308
      %4522 = vmatpush1.bf16.msra.mxu0 %v4307
      %4523 = vmatprep.mubr.bf16.mxu0 %v3918
      %4524 = vmatmul.mubr.bf16.gmra.mrb[0].mxu0 %v3917
      %v4525 = vpop.f32.mrb[0].mxu0
      %v4526 = vadd.f32 %v4483, %v4525
      %v4527 = vpop.f32.mrb[0].mxu0
      %v4528 = vadd.f32 %v4485, %v4527
      %v4529 = vpop.f32.mrb[0].mxu0
      %v4530 = vadd.f32 %v4487, %v4529
      %v4531 = vpop.f32.mrb[0].mxu0
      %v4532 = vadd.f32 %v4489, %v4531
      %4533 = vdwg.mxu0
      %vm4534 = vcmp.ge.f32.partialorder %v4526, 0.0
      %vm4535 = vcmp.ge.f32.partialorder %v4528, 0.0
      %vm4536 = vcmp.ge.f32.partialorder %v4530, 0.0
      %vm4537 = vcmp.ge.f32.partialorder %v4532, 0.0
      %v4538 = vmul.f32 %v4526, 0.01
      %v4539 = vmul.f32 %v4528, 0.01
      %v4540 = vmul.f32 %v4530, 0.01
      %v4541 = vmul.f32 %v4532, 0.01
      %v4542 = vsel %vm4534, %v4526, %v4538
      %v4543 = vsel %vm4535, %v4528, %v4539
      %v4544 = vsel %vm4536, %v4530, %v4540
      %v4545 = vsel %vm4537, %v4532, %v4541
      %v4546 = vpack.c.bf16 %v4544, %v4542
      %v4547 = vpack.c.bf16 %v4545, %v4543
      %v4548 = vld [vmem:[%s7] sm:$0xff]
      %v4549 = vld [vmem:[%s7 + $0x8] sm:$0xff]
      %v4550 = vld [vmem:[%s7 + $0x10] sm:$0xff]
      %v4551 = vld [vmem:[%s7 + $0x18] sm:$0xff]
      %v4552 = vld [vmem:[%s7 + $0x20] sm:$0xff]
      %v4553 = vld [vmem:[%s7 + $0x28] sm:$0xff]
      %v4554 = vld [vmem:[%s7 + $0x30] sm:$0xff]
      %v4555 = vld [vmem:[%s7 + $0x38] sm:$0xff]
      %v4556 = vld [vmem:[%s7 + $0x40] sm:$0xff]
      %v4557 = vld [vmem:[%s7 + $0x48] sm:$0xff]
      %v4558 = vld [vmem:[%s7 + $0x50] sm:$0xff]
      %v4559 = vld [vmem:[%s7 + $0x58] sm:$0xff]
      %v4560 = vld [vmem:[%s7 + $0x60] sm:$0xff]
      %v4561 = vld [vmem:[%s7 + $0x68] sm:$0xff]
      %v4562 = vld [vmem:[%s7 + $0x70] sm:$0xff]
      %v4563 = vld [vmem:[%s7 + $0x78] sm:$0xff]
      %v4564 = vld [vmem:[%s7 + $0x80] sm:$0xff]
      %v4565 = vld [vmem:[%s7 + $0x88] sm:$0xff]
      %v4566 = vld [vmem:[%s7 + $0x90] sm:$0xff]
      %v4567 = vld [vmem:[%s7 + $0x98] sm:$0xff]
      %v4568 = vld [vmem:[%s7 + $0xa0] sm:$0xff]
      %v4569 = vld [vmem:[%s7 + $0xa8] sm:$0xff]
      %v4570 = vld [vmem:[%s7 + $0xb0] sm:$0xff]
      %v4571 = vld [vmem:[%s7 + $0xb8] sm:$0xff]
      %v4572 = vld [vmem:[%s7 + $0xc0] sm:$0xff]
      %v4573 = vld [vmem:[%s7 + $0xc8] sm:$0xff]
      %v4574 = vld [vmem:[%s7 + $0xd0] sm:$0xff]
      %v4575 = vld [vmem:[%s7 + $0xd8] sm:$0xff]
      %v4576 = vld [vmem:[%s7 + $0xe0] sm:$0xff]
      %v4577 = vld [vmem:[%s7 + $0xe8] sm:$0xff]
      %v4578 = vld [vmem:[%s7 + $0xf0] sm:$0xff]
      %v4579 = vld [vmem:[%s7 + $0xf8] sm:$0xff]
      %v4580 = vld [vmem:[%s7 + $0x100] sm:$0xff]
      %v4581 = vld [vmem:[%s7 + $0x108] sm:$0xff]
      %v4582 = vld [vmem:[%s7 + $0x110] sm:$0xff]
      %v4583 = vld [vmem:[%s7 + $0x118] sm:$0xff]
      %v4584 = vld [vmem:[%s7 + $0x120] sm:$0xff]
      %v4585 = vld [vmem:[%s7 + $0x128] sm:$0xff]
      %v4586 = vld [vmem:[%s7 + $0x130] sm:$0xff]
      %v4587 = vld [vmem:[%s7 + $0x138] sm:$0xff]
      %v4588 = vld [vmem:[%s7 + $0x140] sm:$0xff]
      %v4589 = vld [vmem:[%s7 + $0x148] sm:$0xff]
      %v4590 = vld [vmem:[%s7 + $0x150] sm:$0xff]
      %v4591 = vld [vmem:[%s7 + $0x158] sm:$0xff]
      %v4592 = vld [vmem:[%s7 + $0x160] sm:$0xff]
      %v4593 = vld [vmem:[%s7 + $0x168] sm:$0xff]
      %v4594 = vld [vmem:[%s7 + $0x170] sm:$0xff]
      %v4595 = vld [vmem:[%s7 + $0x178] sm:$0xff]
      %v4596 = vld [vmem:[%s7 + $0x180] sm:$0xff]
      %v4597 = vld [vmem:[%s7 + $0x188] sm:$0xff]
      %v4598 = vld [vmem:[%s7 + $0x190] sm:$0xff]
      %v4599 = vld [vmem:[%s7 + $0x198] sm:$0xff]
      %v4600 = vld [vmem:[%s7 + $0x1a0] sm:$0xff]
      %v4601 = vld [vmem:[%s7 + $0x1a8] sm:$0xff]
      %v4602 = vld [vmem:[%s7 + $0x1b0] sm:$0xff]
      %v4603 = vld [vmem:[%s7 + $0x1b8] sm:$0xff]
      %v4604 = vld [vmem:[%s7 + $0x1c0] sm:$0xff]
      %v4605 = vld [vmem:[%s7 + $0x1c8] sm:$0xff]
      %v4606 = vld [vmem:[%s7 + $0x1d0] sm:$0xff]
      %v4607 = vld [vmem:[%s7 + $0x1d8] sm:$0xff]
      %v4608 = vld [vmem:[%s7 + $0x1e0] sm:$0xff]
      %v4609 = vld [vmem:[%s7 + $0x1e8] sm:$0xff]
      %v4610 = vld [vmem:[%s7 + $0x1f0] sm:$0xff]
      %v4611 = vld [vmem:[%s7 + $0x1f8] sm:$0xff]
      %v4612 = vld [vmem:[%s7 + $0x200] sm:$0xff]
      %v4613 = vld [vmem:[%s7 + $0x208] sm:$0xff]
      %v4614 = vld [vmem:[%s7 + $0x210] sm:$0xff]
      %v4615 = vld [vmem:[%s7 + $0x218] sm:$0xff]
      %v4616 = vld [vmem:[%s7 + $0x220] sm:$0xff]
      %v4617 = vld [vmem:[%s7 + $0x228] sm:$0xff]
      %v4618 = vld [vmem:[%s7 + $0x230] sm:$0xff]
      %v4619 = vld [vmem:[%s7 + $0x238] sm:$0xff]
      %v4620 = vld [vmem:[%s7 + $0x240] sm:$0xff]
      %v4621 = vld [vmem:[%s7 + $0x248] sm:$0xff]
      %v4622 = vld [vmem:[%s7 + $0x250] sm:$0xff]
      %v4623 = vld [vmem:[%s7 + $0x258] sm:$0xff]
      %v4624 = vld [vmem:[%s7 + $0x260] sm:$0xff]
      %v4625 = vld [vmem:[%s7 + $0x268] sm:$0xff]
      %v4626 = vld [vmem:[%s7 + $0x270] sm:$0xff]
      %v4627 = vld [vmem:[%s7 + $0x278] sm:$0xff]
      %v4628 = vld [vmem:[%s7 + $0x280] sm:$0xff]
      %v4629 = vld [vmem:[%s7 + $0x288] sm:$0xff]
      %v4630 = vld [vmem:[%s7 + $0x290] sm:$0xff]
      %v4631 = vld [vmem:[%s7 + $0x298] sm:$0xff]
      %v4632 = vld [vmem:[%s7 + $0x2a0] sm:$0xff]
      %v4633 = vld [vmem:[%s7 + $0x2a8] sm:$0xff]
      %v4634 = vld [vmem:[%s7 + $0x2b0] sm:$0xff]
      %v4635 = vld [vmem:[%s7 + $0x2b8] sm:$0xff]
      %v4636 = vld [vmem:[%s7 + $0x2c0] sm:$0xff]
      %v4637 = vld [vmem:[%s7 + $0x2c8] sm:$0xff]
      %v4638 = vld [vmem:[%s7 + $0x2d0] sm:$0xff]
      %v4639 = vld [vmem:[%s7 + $0x2d8] sm:$0xff]
      %v4640 = vld [vmem:[%s7 + $0x2e0] sm:$0xff]
      %v4641 = vld [vmem:[%s7 + $0x2e8] sm:$0xff]
      %v4642 = vld [vmem:[%s7 + $0x2f0] sm:$0xff]
      %v4643 = vld [vmem:[%s7 + $0x2f8] sm:$0xff]
      %v4644 = vld [vmem:[%s7 + $0x300] sm:$0xff]
      %v4645 = vld [vmem:[%s7 + $0x308] sm:$0xff]
      %v4646 = vld [vmem:[%s7 + $0x310] sm:$0xff]
      %v4647 = vld [vmem:[%s7 + $0x318] sm:$0xff]
      %v4648 = vld [vmem:[%s7 + $0x320] sm:$0xff]
      %v4649 = vld [vmem:[%s7 + $0x328] sm:$0xff]
      %v4650 = vld [vmem:[%s7 + $0x330] sm:$0xff]
      %v4651 = vld [vmem:[%s7 + $0x338] sm:$0xff]
      %v4652 = vld [vmem:[%s7 + $0x340] sm:$0xff]
      %v4653 = vld [vmem:[%s7 + $0x348] sm:$0xff]
      %v4654 = vld [vmem:[%s7 + $0x350] sm:$0xff]
      %v4655 = vld [vmem:[%s7 + $0x358] sm:$0xff]
      %v4656 = vld [vmem:[%s7 + $0x360] sm:$0xff]
      %v4657 = vld [vmem:[%s7 + $0x368] sm:$0xff]
      %v4658 = vld [vmem:[%s7 + $0x370] sm:$0xff]
      %v4659 = vld [vmem:[%s7 + $0x378] sm:$0xff]
      %v4660 = vld [vmem:[%s7 + $0x380] sm:$0xff]
      %v4661 = vld [vmem:[%s7 + $0x388] sm:$0xff]
      %v4662 = vld [vmem:[%s7 + $0x390] sm:$0xff]
      %v4663 = vld [vmem:[%s7 + $0x398] sm:$0xff]
      %v4664 = vld [vmem:[%s7 + $0x3a0] sm:$0xff]
      %v4665 = vld [vmem:[%s7 + $0x3a8] sm:$0xff]
      %v4666 = vld [vmem:[%s7 + $0x3b0] sm:$0xff]
      %v4667 = vld [vmem:[%s7 + $0x3b8] sm:$0xff]
      %v4668 = vld [vmem:[%s7 + $0x3c0] sm:$0xff]
      %v4669 = vld [vmem:[%s7 + $0x3c8] sm:$0xff]
      %v4670 = vld [vmem:[%s7 + $0x3d0] sm:$0xff]
      %v4671 = vld [vmem:[%s7 + $0x3d8] sm:$0xff]
      %v4672 = vld [vmem:[%s7 + $0x3e0] sm:$0xff]
      %v4673 = vld [vmem:[%s7 + $0x3e8] sm:$0xff]
      %v4674 = vld [vmem:[%s7 + $0x3f0] sm:$0xff]
      %v4675 = vld [vmem:[%s7 + $0x3f8] sm:$0xff]
      %v4676 = vld [vmem:[%s8] sm:$0xff]
      %v4678 = vlaneseq
      %v4679 = vshrl.u32 %v4678, 7
      %v4680 = vsub.s32 0, %v4679
      %v4681 = vrot.slane %v4676, %v4680
      %v4682 = vlaneseq
      %v4683 = vshrl.u32 %v4682, 7
      %v4684 = vsub.s32 1, %v4683
      %v4685 = vrot.slane %v4676, %v4684
      %v4686 = vlaneseq
      %v4687 = vshrl.u32 %v4686, 7
      %v4688 = vsub.s32 2, %v4687
      %v4689 = vrot.slane %v4676, %v4688
      %v4690 = vlaneseq
      %v4691 = vshrl.u32 %v4690, 7
      %v4692 = vsub.s32 3, %v4691
      %v4693 = vrot.slane %v4676, %v4692
      %v4694 = vlaneseq
      %v4695 = vshrl.u32 %v4694, 7
      %v4696 = vsub.s32 4, %v4695
      %v4697 = vrot.slane %v4676, %v4696
      %v4698 = vlaneseq
      %v4699 = vshrl.u32 %v4698, 7
      %v4700 = vsub.s32 5, %v4699
      %v4701 = vrot.slane %v4676, %v4700
      %v4702 = vlaneseq
      %v4703 = vshrl.u32 %v4702, 7
      %v4704 = vsub.s32 6, %v4703
      %v4705 = vrot.slane %v4676, %v4704
      %v4706 = vlaneseq
      %v4707 = vshrl.u32 %v4706, 7
      %v4708 = vsub.s32 7, %v4707
      %v4709 = vrot.slane %v4676, %v4708
      %v4846 = vunpack.c.l.b16 %v4548
      %v4847 = vunpack.c.h.b16 %v4548
      %v4848 = vunpack.c.l.b16 %v4549
      %v4849 = vunpack.c.h.b16 %v4549
      %v4850 = vunpack.c.l.b16 %v4550
      %v4851 = vunpack.c.h.b16 %v4550
      %v4852 = vunpack.c.l.b16 %v4551
      %v4853 = vunpack.c.h.b16 %v4551
      %v4854 = vunpack.c.l.b16 %v4552
      %v4855 = vunpack.c.h.b16 %v4552
      %v4856 = vunpack.c.l.b16 %v4553
      %v4857 = vunpack.c.h.b16 %v4553
      %v4858 = vunpack.c.l.b16 %v4554
      %v4859 = vunpack.c.h.b16 %v4554
      %v4860 = vunpack.c.l.b16 %v4555
      %v4861 = vunpack.c.h.b16 %v4555
      %v4862 = vunpack.c.l.b16 %v4556
      %v4863 = vunpack.c.h.b16 %v4556
      %v4864 = vunpack.c.l.b16 %v4557
      %v4865 = vunpack.c.h.b16 %v4557
      %v4866 = vunpack.c.l.b16 %v4558
      %v4867 = vunpack.c.h.b16 %v4558
      %v4868 = vunpack.c.l.b16 %v4559
      %v4869 = vunpack.c.h.b16 %v4559
      %v4870 = vunpack.c.l.b16 %v4560
      %v4871 = vunpack.c.h.b16 %v4560
      %v4872 = vunpack.c.l.b16 %v4561
      %v4873 = vunpack.c.h.b16 %v4561
      %v4874 = vunpack.c.l.b16 %v4562
      %v4875 = vunpack.c.h.b16 %v4562
      %v4876 = vunpack.c.l.b16 %v4563
      %v4877 = vunpack.c.h.b16 %v4563
      %v4878 = vunpack.c.l.b16 %v4564
      %v4879 = vunpack.c.h.b16 %v4564
      %v4880 = vunpack.c.l.b16 %v4565
      %v4881 = vunpack.c.h.b16 %v4565
      %v4882 = vunpack.c.l.b16 %v4566
      %v4883 = vunpack.c.h.b16 %v4566
      %v4884 = vunpack.c.l.b16 %v4567
      %v4885 = vunpack.c.h.b16 %v4567
      %v4886 = vunpack.c.l.b16 %v4568
      %v4887 = vunpack.c.h.b16 %v4568
      %v4888 = vunpack.c.l.b16 %v4569
      %v4889 = vunpack.c.h.b16 %v4569
      %v4890 = vunpack.c.l.b16 %v4570
      %v4891 = vunpack.c.h.b16 %v4570
      %v4892 = vunpack.c.l.b16 %v4571
      %v4893 = vunpack.c.h.b16 %v4571
      %v4894 = vunpack.c.l.b16 %v4572
      %v4895 = vunpack.c.h.b16 %v4572
      %v4896 = vunpack.c.l.b16 %v4573
      %v4897 = vunpack.c.h.b16 %v4573
      %v4898 = vunpack.c.l.b16 %v4574
      %v4899 = vunpack.c.h.b16 %v4574
      %v4900 = vunpack.c.l.b16 %v4575
      %v4901 = vunpack.c.h.b16 %v4575
      %v4902 = vunpack.c.l.b16 %v4576
      %v4903 = vunpack.c.h.b16 %v4576
      %v4904 = vunpack.c.l.b16 %v4577
      %v4905 = vunpack.c.h.b16 %v4577
      %v4906 = vunpack.c.l.b16 %v4578
      %v4907 = vunpack.c.h.b16 %v4578
      %v4908 = vunpack.c.l.b16 %v4579
      %v4909 = vunpack.c.h.b16 %v4579
      %v4910 = vunpack.c.l.b16 %v4580
      %v4911 = vunpack.c.h.b16 %v4580
      %v4912 = vunpack.c.l.b16 %v4581
      %v4913 = vunpack.c.h.b16 %v4581
      %v4914 = vunpack.c.l.b16 %v4582
      %v4915 = vunpack.c.h.b16 %v4582
      %v4916 = vunpack.c.l.b16 %v4583
      %v4917 = vunpack.c.h.b16 %v4583
      %v4918 = vunpack.c.l.b16 %v4584
      %v4919 = vunpack.c.h.b16 %v4584
      %v4920 = vunpack.c.l.b16 %v4585
      %v4921 = vunpack.c.h.b16 %v4585
      %v4922 = vunpack.c.l.b16 %v4586
      %v4923 = vunpack.c.h.b16 %v4586
      %v4924 = vunpack.c.l.b16 %v4587
      %v4925 = vunpack.c.h.b16 %v4587
      %v4926 = vunpack.c.l.b16 %v4588
      %v4927 = vunpack.c.h.b16 %v4588
      %v4928 = vunpack.c.l.b16 %v4589
      %v4929 = vunpack.c.h.b16 %v4589
      %v4930 = vunpack.c.l.b16 %v4590
      %v4931 = vunpack.c.h.b16 %v4590
      %v4932 = vunpack.c.l.b16 %v4591
      %v4933 = vunpack.c.h.b16 %v4591
      %v4934 = vunpack.c.l.b16 %v4592
      %v4935 = vunpack.c.h.b16 %v4592
      %v4936 = vunpack.c.l.b16 %v4593
      %v4937 = vunpack.c.h.b16 %v4593
      %v4938 = vunpack.c.l.b16 %v4594
      %v4939 = vunpack.c.h.b16 %v4594
      %v4940 = vunpack.c.l.b16 %v4595
      %v4941 = vunpack.c.h.b16 %v4595
      %v4942 = vunpack.c.l.b16 %v4596
      %v4943 = vunpack.c.h.b16 %v4596
      %v4944 = vunpack.c.l.b16 %v4597
      %v4945 = vunpack.c.h.b16 %v4597
      %v4946 = vunpack.c.l.b16 %v4598
      %v4947 = vunpack.c.h.b16 %v4598
      %v4948 = vunpack.c.l.b16 %v4599
      %v4949 = vunpack.c.h.b16 %v4599
      %v4950 = vunpack.c.l.b16 %v4600
      %v4951 = vunpack.c.h.b16 %v4600
      %v4952 = vunpack.c.l.b16 %v4601
      %v4953 = vunpack.c.h.b16 %v4601
      %v4954 = vunpack.c.l.b16 %v4602
      %v4955 = vunpack.c.h.b16 %v4602
      %v4956 = vunpack.c.l.b16 %v4603
      %v4957 = vunpack.c.h.b16 %v4603
      %v4958 = vunpack.c.l.b16 %v4604
      %v4959 = vunpack.c.h.b16 %v4604
      %v4960 = vunpack.c.l.b16 %v4605
      %v4961 = vunpack.c.h.b16 %v4605
      %v4962 = vunpack.c.l.b16 %v4606
      %v4963 = vunpack.c.h.b16 %v4606
      %v4964 = vunpack.c.l.b16 %v4607
      %v4965 = vunpack.c.h.b16 %v4607
      %v4966 = vunpack.c.l.b16 %v4608
      %v4967 = vunpack.c.h.b16 %v4608
      %v4968 = vunpack.c.l.b16 %v4609
      %v4969 = vunpack.c.h.b16 %v4609
      %v4970 = vunpack.c.l.b16 %v4610
      %v4971 = vunpack.c.h.b16 %v4610
      %v4972 = vunpack.c.l.b16 %v4611
      %v4973 = vunpack.c.h.b16 %v4611
      %v4974 = vunpack.c.l.b16 %v4612
      %v4975 = vunpack.c.h.b16 %v4612
      %v4976 = vunpack.c.l.b16 %v4613
      %v4977 = vunpack.c.h.b16 %v4613
      %v4978 = vunpack.c.l.b16 %v4614
      %v4979 = vunpack.c.h.b16 %v4614
      %v4980 = vunpack.c.l.b16 %v4615
      %v4981 = vunpack.c.h.b16 %v4615
      %v4982 = vunpack.c.l.b16 %v4616
      %v4983 = vunpack.c.h.b16 %v4616
      %v4984 = vunpack.c.l.b16 %v4617
      %v4985 = vunpack.c.h.b16 %v4617
      %v4986 = vunpack.c.l.b16 %v4618
      %v4987 = vunpack.c.h.b16 %v4618
      %v4988 = vunpack.c.l.b16 %v4619
      %v4989 = vunpack.c.h.b16 %v4619
      %v4990 = vunpack.c.l.b16 %v4620
      %v4991 = vunpack.c.h.b16 %v4620
      %v4992 = vunpack.c.l.b16 %v4621
      %v4993 = vunpack.c.h.b16 %v4621
      %v4994 = vunpack.c.l.b16 %v4622
      %v4995 = vunpack.c.h.b16 %v4622
      %v4996 = vunpack.c.l.b16 %v4623
      %v4997 = vunpack.c.h.b16 %v4623
      %v4998 = vunpack.c.l.b16 %v4624
      %v4999 = vunpack.c.h.b16 %v4624
      %v5000 = vunpack.c.l.b16 %v4625
      %v5001 = vunpack.c.h.b16 %v4625
      %v5002 = vunpack.c.l.b16 %v4626
      %v5003 = vunpack.c.h.b16 %v4626
      %v5004 = vunpack.c.l.b16 %v4627
      %v5005 = vunpack.c.h.b16 %v4627
      %v5006 = vunpack.c.l.b16 %v4628
      %v5007 = vunpack.c.h.b16 %v4628
      %v5008 = vunpack.c.l.b16 %v4629
      %v5009 = vunpack.c.h.b16 %v4629
      %v5010 = vunpack.c.l.b16 %v4630
      %v5011 = vunpack.c.h.b16 %v4630
      %v5012 = vunpack.c.l.b16 %v4631
      %v5013 = vunpack.c.h.b16 %v4631
      %v5014 = vunpack.c.l.b16 %v4632
      %v5015 = vunpack.c.h.b16 %v4632
      %v5016 = vunpack.c.l.b16 %v4633
      %v5017 = vunpack.c.h.b16 %v4633
      %v5018 = vunpack.c.l.b16 %v4634
      %v5019 = vunpack.c.h.b16 %v4634
      %v5020 = vunpack.c.l.b16 %v4635
      %v5021 = vunpack.c.h.b16 %v4635
      %v5022 = vunpack.c.l.b16 %v4636
      %v5023 = vunpack.c.h.b16 %v4636
      %v5024 = vunpack.c.l.b16 %v4637
      %v5025 = vunpack.c.h.b16 %v4637
      %v5026 = vunpack.c.l.b16 %v4638
      %v5027 = vunpack.c.h.b16 %v4638
      %v5028 = vunpack.c.l.b16 %v4639
      %v5029 = vunpack.c.h.b16 %v4639
      %v5030 = vunpack.c.l.b16 %v4640
      %v5031 = vunpack.c.h.b16 %v4640
      %v5032 = vunpack.c.l.b16 %v4641
      %v5033 = vunpack.c.h.b16 %v4641
      %v5034 = vunpack.c.l.b16 %v4642
      %v5035 = vunpack.c.h.b16 %v4642
      %v5036 = vunpack.c.l.b16 %v4643
      %v5037 = vunpack.c.h.b16 %v4643
      %v5038 = vunpack.c.l.b16 %v4644
      %v5039 = vunpack.c.h.b16 %v4644
      %v5040 = vunpack.c.l.b16 %v4645
      %v5041 = vunpack.c.h.b16 %v4645
      %v5042 = vunpack.c.l.b16 %v4646
      %v5043 = vunpack.c.h.b16 %v4646
      %v5044 = vunpack.c.l.b16 %v4647
      %v5045 = vunpack.c.h.b16 %v4647
      %v5046 = vunpack.c.l.b16 %v4648
      %v5047 = vunpack.c.h.b16 %v4648
      %v5048 = vunpack.c.l.b16 %v4649
      %v5049 = vunpack.c.h.b16 %v4649
      %v5050 = vunpack.c.l.b16 %v4650
      %v5051 = vunpack.c.h.b16 %v4650
      %v5052 = vunpack.c.l.b16 %v4651
      %v5053 = vunpack.c.h.b16 %v4651
      %v5054 = vunpack.c.l.b16 %v4652
      %v5055 = vunpack.c.h.b16 %v4652
      %v5056 = vunpack.c.l.b16 %v4653
      %v5057 = vunpack.c.h.b16 %v4653
      %v5058 = vunpack.c.l.b16 %v4654
      %v5059 = vunpack.c.h.b16 %v4654
      %v5060 = vunpack.c.l.b16 %v4655
      %v5061 = vunpack.c.h.b16 %v4655
      %v5062 = vunpack.c.l.b16 %v4656
      %v5063 = vunpack.c.h.b16 %v4656
      %v5064 = vunpack.c.l.b16 %v4657
      %v5065 = vunpack.c.h.b16 %v4657
      %v5066 = vunpack.c.l.b16 %v4658
      %v5067 = vunpack.c.h.b16 %v4658
      %v5068 = vunpack.c.l.b16 %v4659
      %v5069 = vunpack.c.h.b16 %v4659
      %v5070 = vunpack.c.l.b16 %v4660
      %v5071 = vunpack.c.h.b16 %v4660
      %v5072 = vunpack.c.l.b16 %v4661
      %v5073 = vunpack.c.h.b16 %v4661
      %v5074 = vunpack.c.l.b16 %v4662
      %v5075 = vunpack.c.h.b16 %v4662
      %v5076 = vunpack.c.l.b16 %v4663
      %v5077 = vunpack.c.h.b16 %v4663
      %v5078 = vunpack.c.l.b16 %v4664
      %v5079 = vunpack.c.h.b16 %v4664
      %v5080 = vunpack.c.l.b16 %v4665
      %v5081 = vunpack.c.h.b16 %v4665
      %v5082 = vunpack.c.l.b16 %v4666
      %v5083 = vunpack.c.h.b16 %v4666
      %v5084 = vunpack.c.l.b16 %v4667
      %v5085 = vunpack.c.h.b16 %v4667
      %v5086 = vunpack.c.l.b16 %v4668
      %v5087 = vunpack.c.h.b16 %v4668
      %v5088 = vunpack.c.l.b16 %v4669
      %v5089 = vunpack.c.h.b16 %v4669
      %v5090 = vunpack.c.l.b16 %v4670
      %v5091 = vunpack.c.h.b16 %v4670
      %v5092 = vunpack.c.l.b16 %v4671
      %v5093 = vunpack.c.h.b16 %v4671
      %v5094 = vunpack.c.l.b16 %v4672
      %v5095 = vunpack.c.h.b16 %v4672
      %v5096 = vunpack.c.l.b16 %v4673
      %v5097 = vunpack.c.h.b16 %v4673
      %v5098 = vunpack.c.l.b16 %v4674
      %v5099 = vunpack.c.h.b16 %v4674
      %v5100 = vunpack.c.l.b16 %v4675
      %v5101 = vunpack.c.h.b16 %v4675
      %v5102 = vpack.c.b16 %v4854, %v4846
      %v5103 = vpack.c.b16 %v4855, %v4847
      %v5104 = vpack.c.b16 %v4856, %v4848
      %v5105 = vpack.c.b16 %v4857, %v4849
      %v5106 = vpack.c.b16 %v4858, %v4850
      %v5107 = vpack.c.b16 %v4859, %v4851
      %v5108 = vpack.c.b16 %v4860, %v4852
      %v5109 = vpack.c.b16 %v4861, %v4853
      %v5110 = vpack.c.b16 %v4870, %v4862
      %v5111 = vpack.c.b16 %v4871, %v4863
      %v5112 = vpack.c.b16 %v4872, %v4864
      %v5113 = vpack.c.b16 %v4873, %v4865
      %v5114 = vpack.c.b16 %v4874, %v4866
      %v5115 = vpack.c.b16 %v4875, %v4867
      %v5116 = vpack.c.b16 %v4876, %v4868
      %v5117 = vpack.c.b16 %v4877, %v4869
      %v5118 = vpack.c.b16 %v4886, %v4878
      %v5119 = vpack.c.b16 %v4887, %v4879
      %v5120 = vpack.c.b16 %v4888, %v4880
      %v5121 = vpack.c.b16 %v4889, %v4881
      %v5122 = vpack.c.b16 %v4890, %v4882
      %v5123 = vpack.c.b16 %v4891, %v4883
      %v5124 = vpack.c.b16 %v4892, %v4884
      %v5125 = vpack.c.b16 %v4893, %v4885
      %v5126 = vpack.c.b16 %v4902, %v4894
      %v5127 = vpack.c.b16 %v4903, %v4895
      %v5128 = vpack.c.b16 %v4904, %v4896
      %v5129 = vpack.c.b16 %v4905, %v4897
      %v5130 = vpack.c.b16 %v4906, %v4898
      %v5131 = vpack.c.b16 %v4907, %v4899
      %v5132 = vpack.c.b16 %v4908, %v4900
      %v5133 = vpack.c.b16 %v4909, %v4901
      %v5134 = vpack.c.b16 %v4918, %v4910
      %v5135 = vpack.c.b16 %v4919, %v4911
      %v5136 = vpack.c.b16 %v4920, %v4912
      %v5137 = vpack.c.b16 %v4921, %v4913
      %v5138 = vpack.c.b16 %v4922, %v4914
      %v5139 = vpack.c.b16 %v4923, %v4915
      %v5140 = vpack.c.b16 %v4924, %v4916
      %v5141 = vpack.c.b16 %v4925, %v4917
      %v5142 = vpack.c.b16 %v4934, %v4926
      %v5143 = vpack.c.b16 %v4935, %v4927
      %v5144 = vpack.c.b16 %v4936, %v4928
      %v5145 = vpack.c.b16 %v4937, %v4929
      %v5146 = vpack.c.b16 %v4938, %v4930
      %v5147 = vpack.c.b16 %v4939, %v4931
      %v5148 = vpack.c.b16 %v4940, %v4932
      %v5149 = vpack.c.b16 %v4941, %v4933
      %v5150 = vpack.c.b16 %v4950, %v4942
      %v5151 = vpack.c.b16 %v4951, %v4943
      %v5152 = vpack.c.b16 %v4952, %v4944
      %v5153 = vpack.c.b16 %v4953, %v4945
      %v5154 = vpack.c.b16 %v4954, %v4946
      %v5155 = vpack.c.b16 %v4955, %v4947
      %v5156 = vpack.c.b16 %v4956, %v4948
      %v5157 = vpack.c.b16 %v4957, %v4949
      %v5158 = vpack.c.b16 %v4966, %v4958
      %v5159 = vpack.c.b16 %v4967, %v4959
      %v5160 = vpack.c.b16 %v4968, %v4960
      %v5161 = vpack.c.b16 %v4969, %v4961
      %v5162 = vpack.c.b16 %v4970, %v4962
      %v5163 = vpack.c.b16 %v4971, %v4963
      %v5164 = vpack.c.b16 %v4972, %v4964
      %v5165 = vpack.c.b16 %v4973, %v4965
      %v5166 = vpack.c.b16 %v4982, %v4974
      %v5167 = vpack.c.b16 %v4983, %v4975
      %v5168 = vpack.c.b16 %v4984, %v4976
      %v5169 = vpack.c.b16 %v4985, %v4977
      %v5170 = vpack.c.b16 %v4986, %v4978
      %v5171 = vpack.c.b16 %v4987, %v4979
      %v5172 = vpack.c.b16 %v4988, %v4980
      %v5173 = vpack.c.b16 %v4989, %v4981
      %v5174 = vpack.c.b16 %v4998, %v4990
      %v5175 = vpack.c.b16 %v4999, %v4991
      %v5176 = vpack.c.b16 %v5000, %v4992
      %v5177 = vpack.c.b16 %v5001, %v4993
      %v5178 = vpack.c.b16 %v5002, %v4994
      %v5179 = vpack.c.b16 %v5003, %v4995
      %v5180 = vpack.c.b16 %v5004, %v4996
      %v5181 = vpack.c.b16 %v5005, %v4997
      %v5182 = vpack.c.b16 %v5014, %v5006
      %v5183 = vpack.c.b16 %v5015, %v5007
      %v5184 = vpack.c.b16 %v5016, %v5008
      %v5185 = vpack.c.b16 %v5017, %v5009
      %v5186 = vpack.c.b16 %v5018, %v5010
      %v5187 = vpack.c.b16 %v5019, %v5011
      %v5188 = vpack.c.b16 %v5020, %v5012
      %v5189 = vpack.c.b16 %v5021, %v5013
      %v5190 = vpack.c.b16 %v5030, %v5022
      %v5191 = vpack.c.b16 %v5031, %v5023
      %v5192 = vpack.c.b16 %v5032, %v5024
      %v5193 = vpack.c.b16 %v5033, %v5025
      %v5194 = vpack.c.b16 %v5034, %v5026
      %v5195 = vpack.c.b16 %v5035, %v5027
      %v5196 = vpack.c.b16 %v5036, %v5028
      %v5197 = vpack.c.b16 %v5037, %v5029
      %v5198 = vpack.c.b16 %v5046, %v5038
      %v5199 = vpack.c.b16 %v5047, %v5039
      %v5200 = vpack.c.b16 %v5048, %v5040
      %v5201 = vpack.c.b16 %v5049, %v5041
      %v5202 = vpack.c.b16 %v5050, %v5042
      %v5203 = vpack.c.b16 %v5051, %v5043
      %v5204 = vpack.c.b16 %v5052, %v5044
      %v5205 = vpack.c.b16 %v5053, %v5045
      %v5206 = vpack.c.b16 %v5062, %v5054
      %v5207 = vpack.c.b16 %v5063, %v5055
      %v5208 = vpack.c.b16 %v5064, %v5056
      %v5209 = vpack.c.b16 %v5065, %v5057
      %v5210 = vpack.c.b16 %v5066, %v5058
      %v5211 = vpack.c.b16 %v5067, %v5059
      %v5212 = vpack.c.b16 %v5068, %v5060
      %v5213 = vpack.c.b16 %v5069, %v5061
      %v5214 = vpack.c.b16 %v5078, %v5070
      %v5215 = vpack.c.b16 %v5079, %v5071
      %v5216 = vpack.c.b16 %v5080, %v5072
      %v5217 = vpack.c.b16 %v5081, %v5073
      %v5218 = vpack.c.b16 %v5082, %v5074
      %v5219 = vpack.c.b16 %v5083, %v5075
      %v5220 = vpack.c.b16 %v5084, %v5076
      %v5221 = vpack.c.b16 %v5085, %v5077
      %v5222 = vpack.c.b16 %v5094, %v5086
      %v5223 = vpack.c.b16 %v5095, %v5087
      %v5224 = vpack.c.b16 %v5096, %v5088
      %v5225 = vpack.c.b16 %v5097, %v5089
      %v5226 = vpack.c.b16 %v5098, %v5090
      %v5227 = vpack.c.b16 %v5099, %v5091
      %v5228 = vpack.c.b16 %v5100, %v5092
      %v5229 = vpack.c.b16 %v5101, %v5093
      %5358 = vmatprep.subr.bf16.mxu0 %v5103
      %5359 = vmatpush1.bf16.msra.mxu0 %v5102
      %5360 = vmatprep.subr.bf16.mxu0 %v5111
      %5361 = vmatpush1.bf16.msra.mxu0 %v5110
      %5362 = vmatprep.subr.bf16.mxu0 %v5119
      %5363 = vmatpush1.bf16.msra.mxu0 %v5118
      %5364 = vmatprep.subr.bf16.mxu0 %v5127
      %5365 = vmatpush1.bf16.msra.mxu0 %v5126
      %5366 = vmatprep.subr.bf16.mxu0 %v5135
      %5367 = vmatpush1.bf16.msra.mxu0 %v5134
      %5368 = vmatprep.subr.bf16.mxu0 %v5143
      %5369 = vmatpush1.bf16.msra.mxu0 %v5142
      %5370 = vmatprep.subr.bf16.mxu0 %v5151
      %5371 = vmatpush1.bf16.msra.mxu0 %v5150
      %5372 = vmatprep.subr.bf16.mxu0 %v5159
      %5373 = vmatpush1.bf16.msra.mxu0 %v5158
      %5374 = vmatprep.subr.bf16.mxu0 %v5167
      %5375 = vmatpush1.bf16.msra.mxu0 %v5166
      %5376 = vmatprep.subr.bf16.mxu0 %v5175
      %5377 = vmatpush1.bf16.msra.mxu0 %v5174
      %5378 = vmatprep.subr.bf16.mxu0 %v5183
      %5379 = vmatpush1.bf16.msra.mxu0 %v5182
      %5380 = vmatprep.subr.bf16.mxu0 %v5191
      %5381 = vmatpush1.bf16.msra.mxu0 %v5190
      %5382 = vmatprep.subr.bf16.mxu0 %v5199
      %5383 = vmatpush1.bf16.msra.mxu0 %v5198
      %5384 = vmatprep.subr.bf16.mxu0 %v5207
      %5385 = vmatpush1.bf16.msra.mxu0 %v5206
      %5386 = vmatprep.subr.bf16.mxu0 %v5215
      %5387 = vmatpush1.bf16.msra.mxu0 %v5214
      %5388 = vmatprep.subr.bf16.mxu0 %v5223
      %5389 = vmatpush1.bf16.msra.mxu0 %v5222
      %5390 = vmatprep.mubr.bf16.mxu0 %v4547
      %5391 = vmatmul.mubr.bf16.gmra.mrb[0].mxu0 %v4546
      %v5392 = vpop.f32.mrb[0].mxu0
      %v5393 = vadd.f32 %v4681, %v5392
      %v5394 = vpop.f32.mrb[0].mxu0
      %v5395 = vadd.f32 %v4685, %v5394
      %v5396 = vpop.f32.mrb[0].mxu0
      %v5397 = vadd.f32 %v4681, %v5396
      %v5398 = vpop.f32.mrb[0].mxu0
      %v5399 = vadd.f32 %v4685, %v5398
      %5400 = vdwg.mxu0
      %5401 = vmatprep.subr.bf16.mxu0 %v5105
      %5402 = vmatpush1.bf16.msra.mxu0 %v5104
      %5403 = vmatprep.subr.bf16.mxu0 %v5113
      %5404 = vmatpush1.bf16.msra.mxu0 %v5112
      %5405 = vmatprep.subr.bf16.mxu0 %v5121
      %5406 = vmatpush1.bf16.msra.mxu0 %v5120
      %5407 = vmatprep.subr.bf16.mxu0 %v5129
      %5408 = vmatpush1.bf16.msra.mxu0 %v5128
      %5409 = vmatprep.subr.bf16.mxu0 %v5137
      %5410 = vmatpush1.bf16.msra.mxu0 %v5136
      %5411 = vmatprep.subr.bf16.mxu0 %v5145
      %5412 = vmatpush1.bf16.msra.mxu0 %v5144
      %5413 = vmatprep.subr.bf16.mxu0 %v5153
      %5414 = vmatpush1.bf16.msra.mxu0 %v5152
      %5415 = vmatprep.subr.bf16.mxu0 %v5161
      %5416 = vmatpush1.bf16.msra.mxu0 %v5160
      %5417 = vmatprep.subr.bf16.mxu0 %v5169
      %5418 = vmatpush1.bf16.msra.mxu0 %v5168
      %5419 = vmatprep.subr.bf16.mxu0 %v5177
      %5420 = vmatpush1.bf16.msra.mxu0 %v5176
      %5421 = vmatprep.subr.bf16.mxu0 %v5185
      %5422 = vmatpush1.bf16.msra.mxu0 %v5184
      %5423 = vmatprep.subr.bf16.mxu0 %v5193
      %5424 = vmatpush1.bf16.msra.mxu0 %v5192
      %5425 = vmatprep.subr.bf16.mxu0 %v5201
      %5426 = vmatpush1.bf16.msra.mxu0 %v5200
      %5427 = vmatprep.subr.bf16.mxu0 %v5209
      %5428 = vmatpush1.bf16.msra.mxu0 %v5208
      %5429 = vmatprep.subr.bf16.mxu0 %v5217
      %5430 = vmatpush1.bf16.msra.mxu0 %v5216
      %5431 = vmatprep.subr.bf16.mxu0 %v5225
      %5432 = vmatpush1.bf16.msra.mxu0 %v5224
      %5433 = vmatprep.mubr.bf16.mxu0 %v4547
      %5434 = vmatmul.mubr.bf16.gmra.mrb[0].mxu0 %v4546
      %v5435 = vpop.f32.mrb[0].mxu0
      %v5436 = vadd.f32 %v4689, %v5435
      %v5437 = vpop.f32.mrb[0].mxu0
      %v5438 = vadd.f32 %v4693, %v5437
      %v5439 = vpop.f32.mrb[0].mxu0
      %v5440 = vadd.f32 %v4689, %v5439
      %v5441 = vpop.f32.mrb[0].mxu0
      %v5442 = vadd.f32 %v4693, %v5441
      %5443 = vdwg.mxu0
      %5444 = vmatprep.subr.bf16.mxu0 %v5107
      %5445 = vmatpush1.bf16.msra.mxu0 %v5106
      %5446 = vmatprep.subr.bf16.mxu0 %v5115
      %5447 = vmatpush1.bf16.msra.mxu0 %v5114
      %5448 = vmatprep.subr.bf16.mxu0 %v5123
      %5449 = vmatpush1.bf16.msra.mxu0 %v5122
      %5450 = vmatprep.subr.bf16.mxu0 %v5131
      %5451 = vmatpush1.bf16.msra.mxu0 %v5130
      %5452 = vmatprep.subr.bf16.mxu0 %v5139
      %5453 = vmatpush1.bf16.msra.mxu0 %v5138
      %5454 = vmatprep.subr.bf16.mxu0 %v5147
      %5455 = vmatpush1.bf16.msra.mxu0 %v5146
      %5456 = vmatprep.subr.bf16.mxu0 %v5155
      %5457 = vmatpush1.bf16.msra.mxu0 %v5154
      %5458 = vmatprep.subr.bf16.mxu0 %v5163
      %5459 = vmatpush1.bf16.msra.mxu0 %v5162
      %5460 = vmatprep.subr.bf16.mxu0 %v5171
      %5461 = vmatpush1.bf16.msra.mxu0 %v5170
      %5462 = vmatprep.subr.bf16.mxu0 %v5179
      %5463 = vmatpush1.bf16.msra.mxu0 %v5178
      %5464 = vmatprep.subr.bf16.mxu0 %v5187
      %5465 = vmatpush1.bf16.msra.mxu0 %v5186
      %5466 = vmatprep.subr.bf16.mxu0 %v5195
      %5467 = vmatpush1.bf16.msra.mxu0 %v5194
      %5468 = vmatprep.subr.bf16.mxu0 %v5203
      %5469 = vmatpush1.bf16.msra.mxu0 %v5202
      %5470 = vmatprep.subr.bf16.mxu0 %v5211
      %5471 = vmatpush1.bf16.msra.mxu0 %v5210
      %5472 = vmatprep.subr.bf16.mxu0 %v5219
      %5473 = vmatpush1.bf16.msra.mxu0 %v5218
      %5474 = vmatprep.subr.bf16.mxu0 %v5227
      %5475 = vmatpush1.bf16.msra.mxu0 %v5226
      %5476 = vmatprep.mubr.bf16.mxu0 %v4547
      %5477 = vmatmul.mubr.bf16.gmra.mrb[0].mxu0 %v4546
      %v5478 = vpop.f32.mrb[0].mxu0
      %v5479 = vadd.f32 %v4697, %v5478
      %v5480 = vpop.f32.mrb[0].mxu0
      %v5481 = vadd.f32 %v4701, %v5480
      %v5482 = vpop.f32.mrb[0].mxu0
      %v5483 = vadd.f32 %v4697, %v5482
      %v5484 = vpop.f32.mrb[0].mxu0
      %v5485 = vadd.f32 %v4701, %v5484
      %5486 = vdwg.mxu0
      %5487 = vmatprep.subr.bf16.mxu0 %v5109
      %5488 = vmatpush1.bf16.msra.mxu0 %v5108
      %5489 = vmatprep.subr.bf16.mxu0 %v5117
      %5490 = vmatpush1.bf16.msra.mxu0 %v5116
      %5491 = vmatprep.subr.bf16.mxu0 %v5125
      %5492 = vmatpush1.bf16.msra.mxu0 %v5124
      %5493 = vmatprep.subr.bf16.mxu0 %v5133
      %5494 = vmatpush1.bf16.msra.mxu0 %v5132
      %5495 = vmatprep.subr.bf16.mxu0 %v5141
      %5496 = vmatpush1.bf16.msra.mxu0 %v5140
      %5497 = vmatprep.subr.bf16.mxu0 %v5149
      %5498 = vmatpush1.bf16.msra.mxu0 %v5148
      %5499 = vmatprep.subr.bf16.mxu0 %v5157
      %5500 = vmatpush1.bf16.msra.mxu0 %v5156
      %5501 = vmatprep.subr.bf16.mxu0 %v5165
      %5502 = vmatpush1.bf16.msra.mxu0 %v5164
      %5503 = vmatprep.subr.bf16.mxu0 %v5173
      %5504 = vmatpush1.bf16.msra.mxu0 %v5172
      %5505 = vmatprep.subr.bf16.mxu0 %v5181
      %5506 = vmatpush1.bf16.msra.mxu0 %v5180
      %5507 = vmatprep.subr.bf16.mxu0 %v5189
      %5508 = vmatpush1.bf16.msra.mxu0 %v5188
      %5509 = vmatprep.subr.bf16.mxu0 %v5197
      %5510 = vmatpush1.bf16.msra.mxu0 %v5196
      %5511 = vmatprep.subr.bf16.mxu0 %v5205
      %5512 = vmatpush1.bf16.msra.mxu0 %v5204
      %5513 = vmatprep.subr.bf16.mxu0 %v5213
      %5514 = vmatpush1.bf16.msra.mxu0 %v5212
      %5515 = vmatprep.subr.bf16.mxu0 %v5221
      %5516 = vmatpush1.bf16.msra.mxu0 %v5220
      %5517 = vmatprep.subr.bf16.mxu0 %v5229
      %5518 = vmatpush1.bf16.msra.mxu0 %v5228
      %5519 = vmatprep.mubr.bf16.mxu0 %v4547
      %5520 = vmatmul.mubr.bf16.gmra.mrb[0].mxu0 %v4546
      %v5521 = vpop.f32.mrb[0].mxu0
      %v5522 = vadd.f32 %v4705, %v5521
      %v5523 = vpop.f32.mrb[0].mxu0
      %v5524 = vadd.f32 %v4709, %v5523
      %v5525 = vpop.f32.mrb[0].mxu0
      %v5526 = vadd.f32 %v4705, %v5525
      %v5527 = vpop.f32.mrb[0].mxu0
      %v5528 = vadd.f32 %v4709, %v5527
      %5529 = vdwg.mxu0
      %vm5530 = vcmp.ge.f32.partialorder %v5393, 0.0
      %vm5531 = vcmp.ge.f32.partialorder %v5395, 0.0
      %vm5532 = vcmp.ge.f32.partialorder %v5436, 0.0
      %vm5533 = vcmp.ge.f32.partialorder %v5438, 0.0
      %vm5534 = vcmp.ge.f32.partialorder %v5479, 0.0
      %vm5535 = vcmp.ge.f32.partialorder %v5481, 0.0
      %vm5536 = vcmp.ge.f32.partialorder %v5522, 0.0
      %vm5537 = vcmp.ge.f32.partialorder %v5524, 0.0
      %vm5538 = vcmp.ge.f32.partialorder %v5397, 0.0
      %vm5539 = vcmp.ge.f32.partialorder %v5399, 0.0
      %vm5540 = vcmp.ge.f32.partialorder %v5440, 0.0
      %vm5541 = vcmp.ge.f32.partialorder %v5442, 0.0
      %vm5542 = vcmp.ge.f32.partialorder %v5483, 0.0
      %vm5543 = vcmp.ge.f32.partialorder %v5485, 0.0
      %vm5544 = vcmp.ge.f32.partialorder %v5526, 0.0
      %vm5545 = vcmp.ge.f32.partialorder %v5528, 0.0
      %v5546 = vmul.f32 %v5393, 0.01
      %v5547 = vmul.f32 %v5395, 0.01
      %v5548 = vmul.f32 %v5436, 0.01
      %v5549 = vmul.f32 %v5438, 0.01
      %v5550 = vmul.f32 %v5479, 0.01
      %v5551 = vmul.f32 %v5481, 0.01
      %v5552 = vmul.f32 %v5522, 0.01
      %v5553 = vmul.f32 %v5524, 0.01
      %v5554 = vmul.f32 %v5397, 0.01
      %v5555 = vmul.f32 %v5399, 0.01
      %v5556 = vmul.f32 %v5440, 0.01
      %v5557 = vmul.f32 %v5442, 0.01
      %v5558 = vmul.f32 %v5483, 0.01
      %v5559 = vmul.f32 %v5485, 0.01
      %v5560 = vmul.f32 %v5526, 0.01
      %v5561 = vmul.f32 %v5528, 0.01
      %v5562 = vsel %vm5530, %v5393, %v5546
      %v5563 = vsel %vm5531, %v5395, %v5547
      %v5564 = vsel %vm5532, %v5436, %v5548
      %v5565 = vsel %vm5533, %v5438, %v5549
      %v5566 = vsel %vm5534, %v5479, %v5550
      %v5567 = vsel %vm5535, %v5481, %v5551
      %v5568 = vsel %vm5536, %v5522, %v5552
      %v5569 = vsel %vm5537, %v5524, %v5553
      %v5570 = vsel %vm5538, %v5397, %v5554
      %v5571 = vsel %vm5539, %v5399, %v5555
      %v5572 = vsel %vm5540, %v5440, %v5556
      %v5573 = vsel %vm5541, %v5442, %v5557
      %v5574 = vsel %vm5542, %v5483, %v5558
      %v5575 = vsel %vm5543, %v5485, %v5559
      %v5576 = vsel %vm5544, %v5526, %v5560
      %v5577 = vsel %vm5545, %v5528, %v5561
      %v5578 = vpack.c.bf16 %v5570, %v5562
      %v5579 = vpack.c.bf16 %v5571, %v5563
      %v5580 = vpack.c.bf16 %v5572, %v5564
      %v5581 = vpack.c.bf16 %v5573, %v5565
      %v5582 = vpack.c.bf16 %v5574, %v5566
      %v5583 = vpack.c.bf16 %v5575, %v5567
      %v5584 = vpack.c.bf16 %v5576, %v5568
      %v5585 = vpack.c.bf16 %v5577, %v5569
      %v5586 = vld [vmem:[%s9] sm:$0xff]
      %v5587 = vld [vmem:[%s9 + $0x8] sm:$0xff]
      %v5588 = vld [vmem:[%s9 + $0x10] sm:$0xff]
      %v5589 = vld [vmem:[%s9 + $0x18] sm:$0xff]
      %v5590 = vld [vmem:[%s9 + $0x20] sm:$0xff]
      %v5591 = vld [vmem:[%s9 + $0x28] sm:$0xff]
      %v5592 = vld [vmem:[%s9 + $0x30] sm:$0xff]
      %v5593 = vld [vmem:[%s9 + $0x38] sm:$0xff]
      %v5594 = vld [vmem:[%s9 + $0x40] sm:$0xff]
      %v5595 = vld [vmem:[%s9 + $0x48] sm:$0xff]
      %v5596 = vld [vmem:[%s9 + $0x50] sm:$0xff]
      %v5597 = vld [vmem:[%s9 + $0x58] sm:$0xff]
      %v5598 = vld [vmem:[%s9 + $0x60] sm:$0xff]
      %v5599 = vld [vmem:[%s9 + $0x68] sm:$0xff]
      %v5600 = vld [vmem:[%s9 + $0x70] sm:$0xff]
      %v5601 = vld [vmem:[%s9 + $0x78] sm:$0xff]
      %v5602 = vld [vmem:[%s9 + $0x80] sm:$0xff]
      %v5603 = vld [vmem:[%s9 + $0x88] sm:$0xff]
      %v5604 = vld [vmem:[%s9 + $0x90] sm:$0xff]
      %v5605 = vld [vmem:[%s9 + $0x98] sm:$0xff]
      %v5606 = vld [vmem:[%s9 + $0xa0] sm:$0xff]
      %v5607 = vld [vmem:[%s9 + $0xa8] sm:$0xff]
      %v5608 = vld [vmem:[%s9 + $0xb0] sm:$0xff]
      %v5609 = vld [vmem:[%s9 + $0xb8] sm:$0xff]
      %v5610 = vld [vmem:[%s9 + $0xc0] sm:$0xff]
      %v5611 = vld [vmem:[%s9 + $0xc8] sm:$0xff]
      %v5612 = vld [vmem:[%s9 + $0xd0] sm:$0xff]
      %v5613 = vld [vmem:[%s9 + $0xd8] sm:$0xff]
      %v5614 = vld [vmem:[%s9 + $0xe0] sm:$0xff]
      %v5615 = vld [vmem:[%s9 + $0xe8] sm:$0xff]
      %v5616 = vld [vmem:[%s9 + $0xf0] sm:$0xff]
      %v5617 = vld [vmem:[%s9 + $0xf8] sm:$0xff]
      %v5618 = vld [vmem:[%s9 + $0x100] sm:$0xff]
      %v5619 = vld [vmem:[%s9 + $0x108] sm:$0xff]
      %v5620 = vld [vmem:[%s9 + $0x110] sm:$0xff]
      %v5621 = vld [vmem:[%s9 + $0x118] sm:$0xff]
      %v5622 = vld [vmem:[%s9 + $0x120] sm:$0xff]
      %v5623 = vld [vmem:[%s9 + $0x128] sm:$0xff]
      %v5624 = vld [vmem:[%s9 + $0x130] sm:$0xff]
      %v5625 = vld [vmem:[%s9 + $0x138] sm:$0xff]
      %v5626 = vld [vmem:[%s9 + $0x140] sm:$0xff]
      %v5627 = vld [vmem:[%s9 + $0x148] sm:$0xff]
      %v5628 = vld [vmem:[%s9 + $0x150] sm:$0xff]
      %v5629 = vld [vmem:[%s9 + $0x158] sm:$0xff]
      %v5630 = vld [vmem:[%s9 + $0x160] sm:$0xff]
      %v5631 = vld [vmem:[%s9 + $0x168] sm:$0xff]
      %v5632 = vld [vmem:[%s9 + $0x170] sm:$0xff]
      %v5633 = vld [vmem:[%s9 + $0x178] sm:$0xff]
      %v5634 = vld [vmem:[%s9 + $0x180] sm:$0xff]
      %v5635 = vld [vmem:[%s9 + $0x188] sm:$0xff]
      %v5636 = vld [vmem:[%s9 + $0x190] sm:$0xff]
      %v5637 = vld [vmem:[%s9 + $0x198] sm:$0xff]
      %v5638 = vld [vmem:[%s9 + $0x1a0] sm:$0xff]
      %v5639 = vld [vmem:[%s9 + $0x1a8] sm:$0xff]
      %v5640 = vld [vmem:[%s9 + $0x1b0] sm:$0xff]
      %v5641 = vld [vmem:[%s9 + $0x1b8] sm:$0xff]
      %v5642 = vld [vmem:[%s9 + $0x1c0] sm:$0xff]
      %v5643 = vld [vmem:[%s9 + $0x1c8] sm:$0xff]
      %v5644 = vld [vmem:[%s9 + $0x1d0] sm:$0xff]
      %v5645 = vld [vmem:[%s9 + $0x1d8] sm:$0xff]
      %v5646 = vld [vmem:[%s9 + $0x1e0] sm:$0xff]
      %v5647 = vld [vmem:[%s9 + $0x1e8] sm:$0xff]
      %v5648 = vld [vmem:[%s9 + $0x1f0] sm:$0xff]
      %v5649 = vld [vmem:[%s9 + $0x1f8] sm:$0xff]
      %v5650 = vld [vmem:[%s9 + $0x200] sm:$0xff]
      %v5651 = vld [vmem:[%s9 + $0x208] sm:$0xff]
      %v5652 = vld [vmem:[%s9 + $0x210] sm:$0xff]
      %v5653 = vld [vmem:[%s9 + $0x218] sm:$0xff]
      %v5654 = vld [vmem:[%s9 + $0x220] sm:$0xff]
      %v5655 = vld [vmem:[%s9 + $0x228] sm:$0xff]
      %v5656 = vld [vmem:[%s9 + $0x230] sm:$0xff]
      %v5657 = vld [vmem:[%s9 + $0x238] sm:$0xff]
      %v5658 = vld [vmem:[%s9 + $0x240] sm:$0xff]
      %v5659 = vld [vmem:[%s9 + $0x248] sm:$0xff]
      %v5660 = vld [vmem:[%s9 + $0x250] sm:$0xff]
      %v5661 = vld [vmem:[%s9 + $0x258] sm:$0xff]
      %v5662 = vld [vmem:[%s9 + $0x260] sm:$0xff]
      %v5663 = vld [vmem:[%s9 + $0x268] sm:$0xff]
      %v5664 = vld [vmem:[%s9 + $0x270] sm:$0xff]
      %v5665 = vld [vmem:[%s9 + $0x278] sm:$0xff]
      %v5666 = vld [vmem:[%s9 + $0x280] sm:$0xff]
      %v5667 = vld [vmem:[%s9 + $0x288] sm:$0xff]
      %v5668 = vld [vmem:[%s9 + $0x290] sm:$0xff]
      %v5669 = vld [vmem:[%s9 + $0x298] sm:$0xff]
      %v5670 = vld [vmem:[%s9 + $0x2a0] sm:$0xff]
      %v5671 = vld [vmem:[%s9 + $0x2a8] sm:$0xff]
      %v5672 = vld [vmem:[%s9 + $0x2b0] sm:$0xff]
      %v5673 = vld [vmem:[%s9 + $0x2b8] sm:$0xff]
      %v5674 = vld [vmem:[%s9 + $0x2c0] sm:$0xff]
      %v5675 = vld [vmem:[%s9 + $0x2c8] sm:$0xff]
      %v5676 = vld [vmem:[%s9 + $0x2d0] sm:$0xff]
      %v5677 = vld [vmem:[%s9 + $0x2d8] sm:$0xff]
      %v5678 = vld [vmem:[%s9 + $0x2e0] sm:$0xff]
      %v5679 = vld [vmem:[%s9 + $0x2e8] sm:$0xff]
      %v5680 = vld [vmem:[%s9 + $0x2f0] sm:$0xff]
      %v5681 = vld [vmem:[%s9 + $0x2f8] sm:$0xff]
      %v5682 = vld [vmem:[%s9 + $0x300] sm:$0xff]
      %v5683 = vld [vmem:[%s9 + $0x308] sm:$0xff]
      %v5684 = vld [vmem:[%s9 + $0x310] sm:$0xff]
      %v5685 = vld [vmem:[%s9 + $0x318] sm:$0xff]
      %v5686 = vld [vmem:[%s9 + $0x320] sm:$0xff]
      %v5687 = vld [vmem:[%s9 + $0x328] sm:$0xff]
      %v5688 = vld [vmem:[%s9 + $0x330] sm:$0xff]
      %v5689 = vld [vmem:[%s9 + $0x338] sm:$0xff]
      %v5690 = vld [vmem:[%s9 + $0x340] sm:$0xff]
      %v5691 = vld [vmem:[%s9 + $0x348] sm:$0xff]
      %v5692 = vld [vmem:[%s9 + $0x350] sm:$0xff]
      %v5693 = vld [vmem:[%s9 + $0x358] sm:$0xff]
      %v5694 = vld [vmem:[%s9 + $0x360] sm:$0xff]
      %v5695 = vld [vmem:[%s9 + $0x368] sm:$0xff]
      %v5696 = vld [vmem:[%s9 + $0x370] sm:$0xff]
      %v5697 = vld [vmem:[%s9 + $0x378] sm:$0xff]
      %v5698 = vld [vmem:[%s9 + $0x380] sm:$0xff]
      %v5699 = vld [vmem:[%s9 + $0x388] sm:$0xff]
      %v5700 = vld [vmem:[%s9 + $0x390] sm:$0xff]
      %v5701 = vld [vmem:[%s9 + $0x398] sm:$0xff]
      %v5702 = vld [vmem:[%s9 + $0x3a0] sm:$0xff]
      %v5703 = vld [vmem:[%s9 + $0x3a8] sm:$0xff]
      %v5704 = vld [vmem:[%s9 + $0x3b0] sm:$0xff]
      %v5705 = vld [vmem:[%s9 + $0x3b8] sm:$0xff]
      %v5706 = vld [vmem:[%s9 + $0x3c0] sm:$0xff]
      %v5707 = vld [vmem:[%s9 + $0x3c8] sm:$0xff]
      %v5708 = vld [vmem:[%s9 + $0x3d0] sm:$0xff]
      %v5709 = vld [vmem:[%s9 + $0x3d8] sm:$0xff]
      %v5710 = vld [vmem:[%s9 + $0x3e0] sm:$0xff]
      %v5711 = vld [vmem:[%s9 + $0x3e8] sm:$0xff]
      %v5712 = vld [vmem:[%s9 + $0x3f0] sm:$0xff]
      %v5713 = vld [vmem:[%s9 + $0x3f8] sm:$0xff]
      %v5714 = vld [vmem:[%s10] sm:$0x3]
      %v5716 = vlaneseq
      %v5717 = vshrl.u32 %v5716, 7
      %v5718 = vsub.s32 0, %v5717
      %v5719 = vrot.slane %v5714, %v5718
      %v5720 = vlaneseq
      %v5721 = vshrl.u32 %v5720, 7
      %v5722 = vsub.s32 1, %v5721
      %v5723 = vrot.slane %v5714, %v5722
      %v5854 = vunpack.c.l.b16 %v5586
      %v5855 = vunpack.c.h.b16 %v5586
      %v5856 = vunpack.c.l.b16 %v5587
      %v5857 = vunpack.c.h.b16 %v5587
      %v5858 = vunpack.c.l.b16 %v5588
      %v5859 = vunpack.c.h.b16 %v5588
      %v5860 = vunpack.c.l.b16 %v5589
      %v5861 = vunpack.c.h.b16 %v5589
      %v5862 = vunpack.c.l.b16 %v5590
      %v5863 = vunpack.c.h.b16 %v5590
      %v5864 = vunpack.c.l.b16 %v5591
      %v5865 = vunpack.c.h.b16 %v5591
      %v5866 = vunpack.c.l.b16 %v5592
      %v5867 = vunpack.c.h.b16 %v5592
      %v5868 = vunpack.c.l.b16 %v5593
      %v5869 = vunpack.c.h.b16 %v5593
      %v5870 = vunpack.c.l.b16 %v5594
      %v5871 = vunpack.c.h.b16 %v5594
      %v5872 = vunpack.c.l.b16 %v5595
      %v5873 = vunpack.c.h.b16 %v5595
      %v5874 = vunpack.c.l.b16 %v5596
      %v5875 = vunpack.c.h.b16 %v5596
      %v5876 = vunpack.c.l.b16 %v5597
      %v5877 = vunpack.c.h.b16 %v5597
      %v5878 = vunpack.c.l.b16 %v5598
      %v5879 = vunpack.c.h.b16 %v5598
      %v5880 = vunpack.c.l.b16 %v5599
      %v5881 = vunpack.c.h.b16 %v5599
      %v5882 = vunpack.c.l.b16 %v5600
      %v5883 = vunpack.c.h.b16 %v5600
      %v5884 = vunpack.c.l.b16 %v5601
      %v5885 = vunpack.c.h.b16 %v5601
      %v5886 = vunpack.c.l.b16 %v5602
      %v5887 = vunpack.c.h.b16 %v5602
      %v5888 = vunpack.c.l.b16 %v5603
      %v5889 = vunpack.c.h.b16 %v5603
      %v5890 = vunpack.c.l.b16 %v5604
      %v5891 = vunpack.c.h.b16 %v5604
      %v5892 = vunpack.c.l.b16 %v5605
      %v5893 = vunpack.c.h.b16 %v5605
      %v5894 = vunpack.c.l.b16 %v5606
      %v5895 = vunpack.c.h.b16 %v5606
      %v5896 = vunpack.c.l.b16 %v5607
      %v5897 = vunpack.c.h.b16 %v5607
      %v5898 = vunpack.c.l.b16 %v5608
      %v5899 = vunpack.c.h.b16 %v5608
      %v5900 = vunpack.c.l.b16 %v5609
      %v5901 = vunpack.c.h.b16 %v5609
      %v5902 = vunpack.c.l.b16 %v5610
      %v5903 = vunpack.c.h.b16 %v5610
      %v5904 = vunpack.c.l.b16 %v5611
      %v5905 = vunpack.c.h.b16 %v5611
      %v5906 = vunpack.c.l.b16 %v5612
      %v5907 = vunpack.c.h.b16 %v5612
      %v5908 = vunpack.c.l.b16 %v5613
      %v5909 = vunpack.c.h.b16 %v5613
      %v5910 = vunpack.c.l.b16 %v5614
      %v5911 = vunpack.c.h.b16 %v5614
      %v5912 = vunpack.c.l.b16 %v5615
      %v5913 = vunpack.c.h.b16 %v5615
      %v5914 = vunpack.c.l.b16 %v5616
      %v5915 = vunpack.c.h.b16 %v5616
      %v5916 = vunpack.c.l.b16 %v5617
      %v5917 = vunpack.c.h.b16 %v5617
      %v5918 = vunpack.c.l.b16 %v5618
      %v5919 = vunpack.c.h.b16 %v5618
      %v5920 = vunpack.c.l.b16 %v5619
      %v5921 = vunpack.c.h.b16 %v5619
      %v5922 = vunpack.c.l.b16 %v5620
      %v5923 = vunpack.c.h.b16 %v5620
      %v5924 = vunpack.c.l.b16 %v5621
      %v5925 = vunpack.c.h.b16 %v5621
      %v5926 = vunpack.c.l.b16 %v5622
      %v5927 = vunpack.c.h.b16 %v5622
      %v5928 = vunpack.c.l.b16 %v5623
      %v5929 = vunpack.c.h.b16 %v5623
      %v5930 = vunpack.c.l.b16 %v5624
      %v5931 = vunpack.c.h.b16 %v5624
      %v5932 = vunpack.c.l.b16 %v5625
      %v5933 = vunpack.c.h.b16 %v5625
      %v5934 = vunpack.c.l.b16 %v5626
      %v5935 = vunpack.c.h.b16 %v5626
      %v5936 = vunpack.c.l.b16 %v5627
      %v5937 = vunpack.c.h.b16 %v5627
      %v5938 = vunpack.c.l.b16 %v5628
      %v5939 = vunpack.c.h.b16 %v5628
      %v5940 = vunpack.c.l.b16 %v5629
      %v5941 = vunpack.c.h.b16 %v5629
      %v5942 = vunpack.c.l.b16 %v5630
      %v5943 = vunpack.c.h.b16 %v5630
      %v5944 = vunpack.c.l.b16 %v5631
      %v5945 = vunpack.c.h.b16 %v5631
      %v5946 = vunpack.c.l.b16 %v5632
      %v5947 = vunpack.c.h.b16 %v5632
      %v5948 = vunpack.c.l.b16 %v5633
      %v5949 = vunpack.c.h.b16 %v5633
      %v5950 = vunpack.c.l.b16 %v5634
      %v5951 = vunpack.c.h.b16 %v5634
      %v5952 = vunpack.c.l.b16 %v5635
      %v5953 = vunpack.c.h.b16 %v5635
      %v5954 = vunpack.c.l.b16 %v5636
      %v5955 = vunpack.c.h.b16 %v5636
      %v5956 = vunpack.c.l.b16 %v5637
      %v5957 = vunpack.c.h.b16 %v5637
      %v5958 = vunpack.c.l.b16 %v5638
      %v5959 = vunpack.c.h.b16 %v5638
      %v5960 = vunpack.c.l.b16 %v5639
      %v5961 = vunpack.c.h.b16 %v5639
      %v5962 = vunpack.c.l.b16 %v5640
      %v5963 = vunpack.c.h.b16 %v5640
      %v5964 = vunpack.c.l.b16 %v5641
      %v5965 = vunpack.c.h.b16 %v5641
      %v5966 = vunpack.c.l.b16 %v5642
      %v5967 = vunpack.c.h.b16 %v5642
      %v5968 = vunpack.c.l.b16 %v5643
      %v5969 = vunpack.c.h.b16 %v5643
      %v5970 = vunpack.c.l.b16 %v5644
      %v5971 = vunpack.c.h.b16 %v5644
      %v5972 = vunpack.c.l.b16 %v5645
      %v5973 = vunpack.c.h.b16 %v5645
      %v5974 = vunpack.c.l.b16 %v5646
      %v5975 = vunpack.c.h.b16 %v5646
      %v5976 = vunpack.c.l.b16 %v5647
      %v5977 = vunpack.c.h.b16 %v5647
      %v5978 = vunpack.c.l.b16 %v5648
      %v5979 = vunpack.c.h.b16 %v5648
      %v5980 = vunpack.c.l.b16 %v5649
      %v5981 = vunpack.c.h.b16 %v5649
      %v5982 = vunpack.c.l.b16 %v5650
      %v5983 = vunpack.c.h.b16 %v5650
      %v5984 = vunpack.c.l.b16 %v5651
      %v5985 = vunpack.c.h.b16 %v5651
      %v5986 = vunpack.c.l.b16 %v5652
      %v5987 = vunpack.c.h.b16 %v5652
      %v5988 = vunpack.c.l.b16 %v5653
      %v5989 = vunpack.c.h.b16 %v5653
      %v5990 = vunpack.c.l.b16 %v5654
      %v5991 = vunpack.c.h.b16 %v5654
      %v5992 = vunpack.c.l.b16 %v5655
      %v5993 = vunpack.c.h.b16 %v5655
      %v5994 = vunpack.c.l.b16 %v5656
      %v5995 = vunpack.c.h.b16 %v5656
      %v5996 = vunpack.c.l.b16 %v5657
      %v5997 = vunpack.c.h.b16 %v5657
      %v5998 = vunpack.c.l.b16 %v5658
      %v5999 = vunpack.c.h.b16 %v5658
      %v6000 = vunpack.c.l.b16 %v5659
      %v6001 = vunpack.c.h.b16 %v5659
      %v6002 = vunpack.c.l.b16 %v5660
      %v6003 = vunpack.c.h.b16 %v5660
      %v6004 = vunpack.c.l.b16 %v5661
      %v6005 = vunpack.c.h.b16 %v5661
      %v6006 = vunpack.c.l.b16 %v5662
      %v6007 = vunpack.c.h.b16 %v5662
      %v6008 = vunpack.c.l.b16 %v5663
      %v6009 = vunpack.c.h.b16 %v5663
      %v6010 = vunpack.c.l.b16 %v5664
      %v6011 = vunpack.c.h.b16 %v5664
      %v6012 = vunpack.c.l.b16 %v5665
      %v6013 = vunpack.c.h.b16 %v5665
      %v6014 = vunpack.c.l.b16 %v5666
      %v6015 = vunpack.c.h.b16 %v5666
      %v6016 = vunpack.c.l.b16 %v5667
      %v6017 = vunpack.c.h.b16 %v5667
      %v6018 = vunpack.c.l.b16 %v5668
      %v6019 = vunpack.c.h.b16 %v5668
      %v6020 = vunpack.c.l.b16 %v5669
      %v6021 = vunpack.c.h.b16 %v5669
      %v6022 = vunpack.c.l.b16 %v5670
      %v6023 = vunpack.c.h.b16 %v5670
      %v6024 = vunpack.c.l.b16 %v5671
      %v6025 = vunpack.c.h.b16 %v5671
      %v6026 = vunpack.c.l.b16 %v5672
      %v6027 = vunpack.c.h.b16 %v5672
      %v6028 = vunpack.c.l.b16 %v5673
      %v6029 = vunpack.c.h.b16 %v5673
      %v6030 = vunpack.c.l.b16 %v5674
      %v6031 = vunpack.c.h.b16 %v5674
      %v6032 = vunpack.c.l.b16 %v5675
      %v6033 = vunpack.c.h.b16 %v5675
      %v6034 = vunpack.c.l.b16 %v5676
      %v6035 = vunpack.c.h.b16 %v5676
      %v6036 = vunpack.c.l.b16 %v5677
      %v6037 = vunpack.c.h.b16 %v5677
      %v6038 = vunpack.c.l.b16 %v5678
      %v6039 = vunpack.c.h.b16 %v5678
      %v6040 = vunpack.c.l.b16 %v5679
      %v6041 = vunpack.c.h.b16 %v5679
      %v6042 = vunpack.c.l.b16 %v5680
      %v6043 = vunpack.c.h.b16 %v5680
      %v6044 = vunpack.c.l.b16 %v5681
      %v6045 = vunpack.c.h.b16 %v5681
      %v6046 = vunpack.c.l.b16 %v5682
      %v6047 = vunpack.c.h.b16 %v5682
      %v6048 = vunpack.c.l.b16 %v5683
      %v6049 = vunpack.c.h.b16 %v5683
      %v6050 = vunpack.c.l.b16 %v5684
      %v6051 = vunpack.c.h.b16 %v5684
      %v6052 = vunpack.c.l.b16 %v5685
      %v6053 = vunpack.c.h.b16 %v5685
      %v6054 = vunpack.c.l.b16 %v5686
      %v6055 = vunpack.c.h.b16 %v5686
      %v6056 = vunpack.c.l.b16 %v5687
      %v6057 = vunpack.c.h.b16 %v5687
      %v6058 = vunpack.c.l.b16 %v5688
      %v6059 = vunpack.c.h.b16 %v5688
      %v6060 = vunpack.c.l.b16 %v5689
      %v6061 = vunpack.c.h.b16 %v5689
      %v6062 = vunpack.c.l.b16 %v5690
      %v6063 = vunpack.c.h.b16 %v5690
      %v6064 = vunpack.c.l.b16 %v5691
      %v6065 = vunpack.c.h.b16 %v5691
      %v6066 = vunpack.c.l.b16 %v5692
      %v6067 = vunpack.c.h.b16 %v5692
      %v6068 = vunpack.c.l.b16 %v5693
      %v6069 = vunpack.c.h.b16 %v5693
      %v6070 = vunpack.c.l.b16 %v5694
      %v6071 = vunpack.c.h.b16 %v5694
      %v6072 = vunpack.c.l.b16 %v5695
      %v6073 = vunpack.c.h.b16 %v5695
      %v6074 = vunpack.c.l.b16 %v5696
      %v6075 = vunpack.c.h.b16 %v5696
      %v6076 = vunpack.c.l.b16 %v5697
      %v6077 = vunpack.c.h.b16 %v5697
      %v6078 = vunpack.c.l.b16 %v5698
      %v6079 = vunpack.c.h.b16 %v5698
      %v6080 = vunpack.c.l.b16 %v5699
      %v6081 = vunpack.c.h.b16 %v5699
      %v6082 = vunpack.c.l.b16 %v5700
      %v6083 = vunpack.c.h.b16 %v5700
      %v6084 = vunpack.c.l.b16 %v5701
      %v6085 = vunpack.c.h.b16 %v5701
      %v6086 = vunpack.c.l.b16 %v5702
      %v6087 = vunpack.c.h.b16 %v5702
      %v6088 = vunpack.c.l.b16 %v5703
      %v6089 = vunpack.c.h.b16 %v5703
      %v6090 = vunpack.c.l.b16 %v5704
      %v6091 = vunpack.c.h.b16 %v5704
      %v6092 = vunpack.c.l.b16 %v5705
      %v6093 = vunpack.c.h.b16 %v5705
      %v6094 = vunpack.c.l.b16 %v5706
      %v6095 = vunpack.c.h.b16 %v5706
      %v6096 = vunpack.c.l.b16 %v5707
      %v6097 = vunpack.c.h.b16 %v5707
      %v6098 = vunpack.c.l.b16 %v5708
      %v6099 = vunpack.c.h.b16 %v5708
      %v6100 = vunpack.c.l.b16 %v5709
      %v6101 = vunpack.c.h.b16 %v5709
      %v6102 = vunpack.c.l.b16 %v5710
      %v6103 = vunpack.c.h.b16 %v5710
      %v6104 = vunpack.c.l.b16 %v5711
      %v6105 = vunpack.c.h.b16 %v5711
      %v6106 = vunpack.c.l.b16 %v5712
      %v6107 = vunpack.c.h.b16 %v5712
      %v6108 = vunpack.c.l.b16 %v5713
      %v6109 = vunpack.c.h.b16 %v5713
      %v6110 = vpack.c.b16 %v5856, %v5854
      %v6111 = vpack.c.b16 %v5857, %v5855
      %v6112 = vpack.c.b16 %v5860, %v5858
      %v6113 = vpack.c.b16 %v5861, %v5859
      %v6114 = vpack.c.b16 %v5864, %v5862
      %v6115 = vpack.c.b16 %v5865, %v5863
      %v6116 = vpack.c.b16 %v5868, %v5866
      %v6117 = vpack.c.b16 %v5869, %v5867
      %v6118 = vpack.c.b16 %v5872, %v5870
      %v6119 = vpack.c.b16 %v5873, %v5871
      %v6120 = vpack.c.b16 %v5876, %v5874
      %v6121 = vpack.c.b16 %v5877, %v5875
      %v6122 = vpack.c.b16 %v5880, %v5878
      %v6123 = vpack.c.b16 %v5881, %v5879
      %v6124 = vpack.c.b16 %v5884, %v5882
      %v6125 = vpack.c.b16 %v5885, %v5883
      %v6126 = vpack.c.b16 %v5888, %v5886
      %v6127 = vpack.c.b16 %v5889, %v5887
      %v6128 = vpack.c.b16 %v5892, %v5890
      %v6129 = vpack.c.b16 %v5893, %v5891
      %v6130 = vpack.c.b16 %v5896, %v5894
      %v6131 = vpack.c.b16 %v5897, %v5895
      %v6132 = vpack.c.b16 %v5900, %v5898
      %v6133 = vpack.c.b16 %v5901, %v5899
      %v6134 = vpack.c.b16 %v5904, %v5902
      %v6135 = vpack.c.b16 %v5905, %v5903
      %v6136 = vpack.c.b16 %v5908, %v5906
      %v6137 = vpack.c.b16 %v5909, %v5907
      %v6138 = vpack.c.b16 %v5912, %v5910
      %v6139 = vpack.c.b16 %v5913, %v5911
      %v6140 = vpack.c.b16 %v5916, %v5914
      %v6141 = vpack.c.b16 %v5917, %v5915
      %v6142 = vpack.c.b16 %v5920, %v5918
      %v6143 = vpack.c.b16 %v5921, %v5919
      %v6144 = vpack.c.b16 %v5924, %v5922
      %v6145 = vpack.c.b16 %v5925, %v5923
      %v6146 = vpack.c.b16 %v5928, %v5926
      %v6147 = vpack.c.b16 %v5929, %v5927
      %v6148 = vpack.c.b16 %v5932, %v5930
      %v6149 = vpack.c.b16 %v5933, %v5931
      %v6150 = vpack.c.b16 %v5936, %v5934
      %v6151 = vpack.c.b16 %v5937, %v5935
      %v6152 = vpack.c.b16 %v5940, %v5938
      %v6153 = vpack.c.b16 %v5941, %v5939
      %v6154 = vpack.c.b16 %v5944, %v5942
      %v6155 = vpack.c.b16 %v5945, %v5943
      %v6156 = vpack.c.b16 %v5948, %v5946
      %v6157 = vpack.c.b16 %v5949, %v5947
      %v6158 = vpack.c.b16 %v5952, %v5950
      %v6159 = vpack.c.b16 %v5953, %v5951
      %v6160 = vpack.c.b16 %v5956, %v5954
      %v6161 = vpack.c.b16 %v5957, %v5955
      %v6162 = vpack.c.b16 %v5960, %v5958
      %v6163 = vpack.c.b16 %v5961, %v5959
      %v6164 = vpack.c.b16 %v5964, %v5962
      %v6165 = vpack.c.b16 %v5965, %v5963
      %v6166 = vpack.c.b16 %v5968, %v5966
      %v6167 = vpack.c.b16 %v5969, %v5967
      %v6168 = vpack.c.b16 %v5972, %v5970
      %v6169 = vpack.c.b16 %v5973, %v5971
      %v6170 = vpack.c.b16 %v5976, %v5974
      %v6171 = vpack.c.b16 %v5977, %v5975
      %v6172 = vpack.c.b16 %v5980, %v5978
      %v6173 = vpack.c.b16 %v5981, %v5979
      %v6174 = vpack.c.b16 %v5984, %v5982
      %v6175 = vpack.c.b16 %v5985, %v5983
      %v6176 = vpack.c.b16 %v5988, %v5986
      %v6177 = vpack.c.b16 %v5989, %v5987
      %v6178 = vpack.c.b16 %v5992, %v5990
      %v6179 = vpack.c.b16 %v5993, %v5991
      %v6180 = vpack.c.b16 %v5996, %v5994
      %v6181 = vpack.c.b16 %v5997, %v5995
      %v6182 = vpack.c.b16 %v6000, %v5998
      %v6183 = vpack.c.b16 %v6001, %v5999
      %v6184 = vpack.c.b16 %v6004, %v6002
      %v6185 = vpack.c.b16 %v6005, %v6003
      %v6186 = vpack.c.b16 %v6008, %v6006
      %v6187 = vpack.c.b16 %v6009, %v6007
      %v6188 = vpack.c.b16 %v6012, %v6010
      %v6189 = vpack.c.b16 %v6013, %v6011
      %v6190 = vpack.c.b16 %v6016, %v6014
      %v6191 = vpack.c.b16 %v6017, %v6015
      %v6192 = vpack.c.b16 %v6020, %v6018
      %v6193 = vpack.c.b16 %v6021, %v6019
      %v6194 = vpack.c.b16 %v6024, %v6022
      %v6195 = vpack.c.b16 %v6025, %v6023
      %v6196 = vpack.c.b16 %v6028, %v6026
      %v6197 = vpack.c.b16 %v6029, %v6027
      %v6198 = vpack.c.b16 %v6032, %v6030
      %v6199 = vpack.c.b16 %v6033, %v6031
      %v6200 = vpack.c.b16 %v6036, %v6034
      %v6201 = vpack.c.b16 %v6037, %v6035
      %v6202 = vpack.c.b16 %v6040, %v6038
      %v6203 = vpack.c.b16 %v6041, %v6039
      %v6204 = vpack.c.b16 %v6044, %v6042
      %v6205 = vpack.c.b16 %v6045, %v6043
      %v6206 = vpack.c.b16 %v6048, %v6046
      %v6207 = vpack.c.b16 %v6049, %v6047
      %v6208 = vpack.c.b16 %v6052, %v6050
      %v6209 = vpack.c.b16 %v6053, %v6051
      %v6210 = vpack.c.b16 %v6056, %v6054
      %v6211 = vpack.c.b16 %v6057, %v6055
      %v6212 = vpack.c.b16 %v6060, %v6058
      %v6213 = vpack.c.b16 %v6061, %v6059
      %v6214 = vpack.c.b16 %v6064, %v6062
      %v6215 = vpack.c.b16 %v6065, %v6063
      %v6216 = vpack.c.b16 %v6068, %v6066
      %v6217 = vpack.c.b16 %v6069, %v6067
      %v6218 = vpack.c.b16 %v6072, %v6070
      %v6219 = vpack.c.b16 %v6073, %v6071
      %v6220 = vpack.c.b16 %v6076, %v6074
      %v6221 = vpack.c.b16 %v6077, %v6075
      %v6222 = vpack.c.b16 %v6080, %v6078
      %v6223 = vpack.c.b16 %v6081, %v6079
      %v6224 = vpack.c.b16 %v6084, %v6082
      %v6225 = vpack.c.b16 %v6085, %v6083
      %v6226 = vpack.c.b16 %v6088, %v6086
      %v6227 = vpack.c.b16 %v6089, %v6087
      %v6228 = vpack.c.b16 %v6092, %v6090
      %v6229 = vpack.c.b16 %v6093, %v6091
      %v6230 = vpack.c.b16 %v6096, %v6094
      %v6231 = vpack.c.b16 %v6097, %v6095
      %v6232 = vpack.c.b16 %v6100, %v6098
      %v6233 = vpack.c.b16 %v6101, %v6099
      %v6234 = vpack.c.b16 %v6104, %v6102
      %v6235 = vpack.c.b16 %v6105, %v6103
      %v6236 = vpack.c.b16 %v6108, %v6106
      %v6237 = vpack.c.b16 %v6109, %v6107
      %6366 = vmatprep.subr.bf16.mxu0 %v6111
      %6367 = vmatpush1.bf16.msra.mxu0 %v6110
      %6368 = vmatprep.subr.bf16.mxu0 %v6113
      %6369 = vmatpush1.bf16.msra.mxu0 %v6112
      %6370 = vmatprep.subr.bf16.mxu0 %v6115
      %6371 = vmatpush1.bf16.msra.mxu0 %v6114
      %6372 = vmatprep.subr.bf16.mxu0 %v6117
      %6373 = vmatpush1.bf16.msra.mxu0 %v6116
      %6374 = vmatprep.subr.bf16.mxu0 %v6119
      %6375 = vmatpush1.bf16.msra.mxu0 %v6118
      %6376 = vmatprep.subr.bf16.mxu0 %v6121
      %6377 = vmatpush1.bf16.msra.mxu0 %v6120
      %6378 = vmatprep.subr.bf16.mxu0 %v6123
      %6379 = vmatpush1.bf16.msra.mxu0 %v6122
      %6380 = vmatprep.subr.bf16.mxu0 %v6125
      %6381 = vmatpush1.bf16.msra.mxu0 %v6124
      %6382 = vmatprep.subr.bf16.mxu0 %v6127
      %6383 = vmatpush1.bf16.msra.mxu0 %v6126
      %6384 = vmatprep.subr.bf16.mxu0 %v6129
      %6385 = vmatpush1.bf16.msra.mxu0 %v6128
      %6386 = vmatprep.subr.bf16.mxu0 %v6131
      %6387 = vmatpush1.bf16.msra.mxu0 %v6130
      %6388 = vmatprep.subr.bf16.mxu0 %v6133
      %6389 = vmatpush1.bf16.msra.mxu0 %v6132
      %6390 = vmatprep.subr.bf16.mxu0 %v6135
      %6391 = vmatpush1.bf16.msra.mxu0 %v6134
      %6392 = vmatprep.subr.bf16.mxu0 %v6137
      %6393 = vmatpush1.bf16.msra.mxu0 %v6136
      %6394 = vmatprep.subr.bf16.mxu0 %v6139
      %6395 = vmatpush1.bf16.msra.mxu0 %v6138
      %6396 = vmatprep.subr.bf16.mxu0 %v6141
      %6397 = vmatpush1.bf16.msra.mxu0 %v6140
      %6398 = vmatprep.mubr.bf16.mxu0 %v5579
      %6399 = vmatmul.mubr.bf16.gmra.mrb[0].mxu0 %v5578
      %v6400 = vpop.f32.mrb[0].mxu0
      %v6401 = vadd.f32 %v5719, %v6400
      %v6402 = vpop.f32.mrb[0].mxu0
      %v6403 = vadd.f32 %v5723, %v6402
      %v6404 = vpop.f32.mrb[0].mxu0
      %v6405 = vadd.f32 %v5719, %v6404
      %v6406 = vpop.f32.mrb[0].mxu0
      %v6407 = vadd.f32 %v5723, %v6406
      %6408 = vdwg.mxu0
      %6409 = vmatprep.subr.bf16.mxu0 %v6143
      %6410 = vmatpush1.bf16.msra.mxu0 %v6142
      %6411 = vmatprep.subr.bf16.mxu0 %v6145
      %6412 = vmatpush1.bf16.msra.mxu0 %v6144
      %6413 = vmatprep.subr.bf16.mxu0 %v6147
      %6414 = vmatpush1.bf16.msra.mxu0 %v6146
      %6415 = vmatprep.subr.bf16.mxu0 %v6149
      %6416 = vmatpush1.bf16.msra.mxu0 %v6148
      %6417 = vmatprep.subr.bf16.mxu0 %v6151
      %6418 = vmatpush1.bf16.msra.mxu0 %v6150
      %6419 = vmatprep.subr.bf16.mxu0 %v6153
      %6420 = vmatpush1.bf16.msra.mxu0 %v6152
      %6421 = vmatprep.subr.bf16.mxu0 %v6155
      %6422 = vmatpush1.bf16.msra.mxu0 %v6154
      %6423 = vmatprep.subr.bf16.mxu0 %v6157
      %6424 = vmatpush1.bf16.msra.mxu0 %v6156
      %6425 = vmatprep.subr.bf16.mxu0 %v6159
      %6426 = vmatpush1.bf16.msra.mxu0 %v6158
      %6427 = vmatprep.subr.bf16.mxu0 %v6161
      %6428 = vmatpush1.bf16.msra.mxu0 %v6160
      %6429 = vmatprep.subr.bf16.mxu0 %v6163
      %6430 = vmatpush1.bf16.msra.mxu0 %v6162
      %6431 = vmatprep.subr.bf16.mxu0 %v6165
      %6432 = vmatpush1.bf16.msra.mxu0 %v6164
      %6433 = vmatprep.subr.bf16.mxu0 %v6167
      %6434 = vmatpush1.bf16.msra.mxu0 %v6166
      %6435 = vmatprep.subr.bf16.mxu0 %v6169
      %6436 = vmatpush1.bf16.msra.mxu0 %v6168
      %6437 = vmatprep.subr.bf16.mxu0 %v6171
      %6438 = vmatpush1.bf16.msra.mxu0 %v6170
      %6439 = vmatprep.subr.bf16.mxu0 %v6173
      %6440 = vmatpush1.bf16.msra.mxu0 %v6172
      %6441 = vmatprep.mubr.bf16.mxu0 %v5581
      %6442 = vmatmul.mubr.bf16.gmra.mrb[0].mxu0 %v5580
      %v6443 = vpop.f32.mrb[0].mxu0
      %v6444 = vadd.f32 %v6401, %v6443
      %v6445 = vpop.f32.mrb[0].mxu0
      %v6446 = vadd.f32 %v6403, %v6445
      %v6447 = vpop.f32.mrb[0].mxu0
      %v6448 = vadd.f32 %v6405, %v6447
      %v6449 = vpop.f32.mrb[0].mxu0
      %v6450 = vadd.f32 %v6407, %v6449
      %6451 = vdwg.mxu0
      %6452 = vmatprep.subr.bf16.mxu0 %v6175
      %6453 = vmatpush1.bf16.msra.mxu0 %v6174
      %6454 = vmatprep.subr.bf16.mxu0 %v6177
      %6455 = vmatpush1.bf16.msra.mxu0 %v6176
      %6456 = vmatprep.subr.bf16.mxu0 %v6179
      %6457 = vmatpush1.bf16.msra.mxu0 %v6178
      %6458 = vmatprep.subr.bf16.mxu0 %v6181
      %6459 = vmatpush1.bf16.msra.mxu0 %v6180
      %6460 = vmatprep.subr.bf16.mxu0 %v6183
      %6461 = vmatpush1.bf16.msra.mxu0 %v6182
      %6462 = vmatprep.subr.bf16.mxu0 %v6185
      %6463 = vmatpush1.bf16.msra.mxu0 %v6184
      %6464 = vmatprep.subr.bf16.mxu0 %v6187
      %6465 = vmatpush1.bf16.msra.mxu0 %v6186
      %6466 = vmatprep.subr.bf16.mxu0 %v6189
      %6467 = vmatpush1.bf16.msra.mxu0 %v6188
      %6468 = vmatprep.subr.bf16.mxu0 %v6191
      %6469 = vmatpush1.bf16.msra.mxu0 %v6190
      %6470 = vmatprep.subr.bf16.mxu0 %v6193
      %6471 = vmatpush1.bf16.msra.mxu0 %v6192
      %6472 = vmatprep.subr.bf16.mxu0 %v6195
      %6473 = vmatpush1.bf16.msra.mxu0 %v6194
      %6474 = vmatprep.subr.bf16.mxu0 %v6197
      %6475 = vmatpush1.bf16.msra.mxu0 %v6196
      %6476 = vmatprep.subr.bf16.mxu0 %v6199
      %6477 = vmatpush1.bf16.msra.mxu0 %v6198
      %6478 = vmatprep.subr.bf16.mxu0 %v6201
      %6479 = vmatpush1.bf16.msra.mxu0 %v6200
      %6480 = vmatprep.subr.bf16.mxu0 %v6203
      %6481 = vmatpush1.bf16.msra.mxu0 %v6202
      %6482 = vmatprep.subr.bf16.mxu0 %v6205
      %6483 = vmatpush1.bf16.msra.mxu0 %v6204
      %6484 = vmatprep.mubr.bf16.mxu0 %v5583
      %6485 = vmatmul.mubr.bf16.gmra.mrb[0].mxu0 %v5582
      %v6486 = vpop.f32.mrb[0].mxu0
      %v6487 = vadd.f32 %v6444, %v6486
      %v6488 = vpop.f32.mrb[0].mxu0
      %v6489 = vadd.f32 %v6446, %v6488
      %v6490 = vpop.f32.mrb[0].mxu0
      %v6491 = vadd.f32 %v6448, %v6490
      %v6492 = vpop.f32.mrb[0].mxu0
      %v6493 = vadd.f32 %v6450, %v6492
      %6494 = vdwg.mxu0
      %6495 = vmatprep.subr.bf16.mxu0 %v6207
      %6496 = vmatpush1.bf16.msra.mxu0 %v6206
      %6497 = vmatprep.subr.bf16.mxu0 %v6209
      %6498 = vmatpush1.bf16.msra.mxu0 %v6208
      %6499 = vmatprep.subr.bf16.mxu0 %v6211
      %6500 = vmatpush1.bf16.msra.mxu0 %v6210
      %6501 = vmatprep.subr.bf16.mxu0 %v6213
      %6502 = vmatpush1.bf16.msra.mxu0 %v6212
      %6503 = vmatprep.subr.bf16.mxu0 %v6215
      %6504 = vmatpush1.bf16.msra.mxu0 %v6214
      %6505 = vmatprep.subr.bf16.mxu0 %v6217
      %6506 = vmatpush1.bf16.msra.mxu0 %v6216
      %6507 = vmatprep.subr.bf16.mxu0 %v6219
      %6508 = vmatpush1.bf16.msra.mxu0 %v6218
      %6509 = vmatprep.subr.bf16.mxu0 %v6221
      %6510 = vmatpush1.bf16.msra.mxu0 %v6220
      %6511 = vmatprep.subr.bf16.mxu0 %v6223
      %6512 = vmatpush1.bf16.msra.mxu0 %v6222
      %6513 = vmatprep.subr.bf16.mxu0 %v6225
      %6514 = vmatpush1.bf16.msra.mxu0 %v6224
      %6515 = vmatprep.subr.bf16.mxu0 %v6227
      %6516 = vmatpush1.bf16.msra.mxu0 %v6226
      %6517 = vmatprep.subr.bf16.mxu0 %v6229
      %6518 = vmatpush1.bf16.msra.mxu0 %v6228
      %6519 = vmatprep.subr.bf16.mxu0 %v6231
      %6520 = vmatpush1.bf16.msra.mxu0 %v6230
      %6521 = vmatprep.subr.bf16.mxu0 %v6233
      %6522 = vmatpush1.bf16.msra.mxu0 %v6232
      %6523 = vmatprep.subr.bf16.mxu0 %v6235
      %6524 = vmatpush1.bf16.msra.mxu0 %v6234
      %6525 = vmatprep.subr.bf16.mxu0 %v6237
      %6526 = vmatpush1.bf16.msra.mxu0 %v6236
      %6527 = vmatprep.mubr.bf16.mxu0 %v5585
      %6528 = vmatmul.mubr.bf16.gmra.mrb[0].mxu0 %v5584
      %v6529 = vpop.f32.mrb[0].mxu0
      %v6530 = vadd.f32 %v6487, %v6529
      %v6531 = vpop.f32.mrb[0].mxu0
      %v6532 = vadd.f32 %v6489, %v6531
      %v6533 = vpop.f32.mrb[0].mxu0
      %v6534 = vadd.f32 %v6491, %v6533
      %v6535 = vpop.f32.mrb[0].mxu0
      %v6536 = vadd.f32 %v6493, %v6535
      %6537 = vdwg.mxu0
      %v6538 = vadd.f32 %v6530, %v3700
      %v6539 = vadd.f32 %v6532, %v3702
      %vm6540 = vcmp.ge.f32.partialorder %v6538, 0.0
      %vm6541 = vcmp.ge.f32.partialorder %v6539, 0.0
      %v6542 = vmul.f32 %v6538, 0.01
      %v6543 = vmul.f32 %v6539, 0.01
      %v6544 = vsel %vm6540, %v6538, %v6542
      %v6545 = vsel %vm6541, %v6539, %v6543
      %6546 = vst [vmem:[%s433] sm:$0xf] %v6544
      %6547 = vst [vmem:[%s433 + $0x8] sm:$0xf] %v6545
      %v6548 = vmul.f32 %v3700, 0.6666667
      %v6549 = vmul.f32 %v3702, 0.6666667
      %v6550 = vmul.f32 %v3777, 0.33333334
      %v6551 = vmul.f32 %v3779, 0.33333334
      %v6552 = vadd.f32 %v6548, %v6550
      %v6553 = vadd.f32 %v6549, %v6551
      %v6556 = vrot.slane %v6552, 4
      %v6557 = vrot.slane %v6553, 4
      %v6560 = vadd.f32 %v6530, %v6556
      %v6561 = vadd.f32 %v6532, %v6557
      %vm6562 = vcmp.ge.f32.partialorder %v6560, 0.0
      %vm6563 = vcmp.ge.f32.partialorder %v6561, 0.0
      %v6564 = vmul.f32 %v6560, 0.01
      %v6565 = vmul.f32 %v6561, 0.01
      %v6566 = vsel %vm6562, %v6560, %v6564
      %v6567 = vsel %vm6563, %v6561, %v6565
      %6568 = vst [vmem:[%s433] sm:$0xf0] %v6566
      %6569 = vst [vmem:[%s433 + $0x8] sm:$0xf0] %v6567
      %v6570 = vmul.f32 %v3700, 0.33333334
      %v6571 = vmul.f32 %v3702, 0.33333334
      %v6572 = vmul.f32 %v3777, 0.6666667
      %v6573 = vmul.f32 %v3779, 0.6666667
      %v6574 = vadd.f32 %v6570, %v6572
      %v6575 = vadd.f32 %v6571, %v6573
      %v6576 = vadd.f32 %v6534, %v6574
      %v6577 = vadd.f32 %v6536, %v6575
      %vm6578 = vcmp.ge.f32.partialorder %v6576, 0.0
      %vm6579 = vcmp.ge.f32.partialorder %v6577, 0.0
      %v6580 = vmul.f32 %v6576, 0.01
      %v6581 = vmul.f32 %v6577, 0.01
      %v6582 = vsel %vm6578, %v6576, %v6580
      %v6583 = vsel %vm6579, %v6577, %v6581
      %6584 = vst [vmem:[%s433 + $0x10] sm:$0xf] %v6582
      %6585 = vst [vmem:[%s433 + $0x18] sm:$0xf] %v6583
      %v6588 = vrot.slane %v3777, 4
      %v6589 = vrot.slane %v3779, 4
      %v6592 = vadd.f32 %v6534, %v6588
      %v6593 = vadd.f32 %v6536, %v6589
      %vm6594 = vcmp.ge.f32.partialorder %v6592, 0.0
      %vm6595 = vcmp.ge.f32.partialorder %v6593, 0.0
      %v6596 = vmul.f32 %v6592, 0.01
      %v6597 = vmul.f32 %v6593, 0.01
      %v6598 = vsel %vm6594, %v6592, %v6596
      %v6599 = vsel %vm6595, %v6593, %v6597
      %6600 = vst [vmem:[%s433 + $0x10] sm:$0xf0] %v6598
      %6601 = vst [vmem:[%s433 + $0x18] sm:$0xf0] %v6599
      %p6602 = scmp.lt.s32.totalorder %s23, 1
      %s6603 = scalar_select %p6602, %s23, 1
      %s6604 = smul.addr %s6603, 4
      %s6605 = smul.addr %s6604, 8
      %s6606 = scalar_lea.vmem %s12, %s6605
      // Predicated region
      $region69: #{feature_extractor_forward.1} parent=67 // pred_check
        %p6607 = pneg %p303
      $region70: #{feature_extractor_forward.1} parent=67 // pred_check_branch
        %6609 = sbr.rel (%p6607) target = $region72
      $region71: #{feature_extractor_forward.1} parent=67 // pred_region
        _
      $region72: #{feature_extractor_forward.1} parent=67 // pred_fallthru
        _
    $region68: #{feature_extractor_forward.1} parent=5 // pred_fallthru
      _
    %p6610 = scmp.le.s32.totalorder 2, %s18
    // Predicated region
    $region73: #{feature_extractor_forward.1} parent=5 // pred_check
      %p6611 = pneg %p6610
    $region74: #{feature_extractor_forward.1} parent=5 // pred_check_branch
      %6613 = sbr.rel (%p6611) target = $region76
    $region75: #{feature_extractor_forward.1} parent=5 // pred_region
      %s6614 = ssub.s32 %s18, 2
      // Predicated region
      $region77: #{feature_extractor_forward.1} parent=75 // pred_check
        %p6615 = pneg %p309
      $region78: #{feature_extractor_forward.1} parent=75 // pred_check_branch
        %6617 = sbr.rel (%p6615) target = $region80
      $region79: #{feature_extractor_forward.1} parent=75 // pred_region
        %p6618 = scmp.lt.s32.totalorder %s24, 1
        %s6619 = scalar_select %p6618, %s24, 1
        %s6620 = smul.addr %s6619, 4
        %s6621 = smul.addr %s6620, 8
        %s6622 = scalar_lea.vmem %s12, %s6621
      $region80: #{feature_extractor_forward.1} parent=75 // pred_fallthru
        _
    $region76: #{feature_extractor_forward.1} parent=5 // pred_fallthru
      _
  $region6: #{feature_extractor_forward.1} parent=0 // loop_footer
    %s22 = sadd.s32 1, %s18
  $region7: #{feature_extractor_forward.1} parent=0 // loop_footer_branch
    %17 = sbr.rel target = $region3
  $region8: #{feature_extractor_forward.1} parent=0 // loop_exit
    _

</llo_original>
